<compile_context>
chip_gen: v6e
topology: v6e:2x2x1
jax: 0.10.0
libtpu: 0.0.40
codegen_flags: <defaults>
</compile_context>

<pallas_src>
import functools

import jax
import jax.numpy as jnp
import numpy as np
from jax import lax
from jax.experimental import pallas as pl
from jax.experimental.pallas import tpu as pltpu

# torchvision vgg16(pretrained=False).features layer types (cfg "D", no BN).
_VGG16_LAYERS = (
    "conv", "relu", "conv", "relu", "pool",
    "conv", "relu", "conv", "relu", "pool",
    "conv", "relu", "conv", "relu", "conv", "relu", "pool",
    "conv", "relu", "conv", "relu", "conv", "relu", "pool",
    "conv", "relu", "conv", "relu", "conv", "relu", "pool",
)
_SELECT = (0, 5, 10, 19, 28)


# ----------------------- host-side matrix construction -----------------------
def _segments():
    """Per feature tap: the active pooling ops ('b3'/'p2') since the previous tap."""
    segs, cur = [], []
    for idx, kind in enumerate(_VGG16_LAYERS):
        if kind == "conv":
            cur.append("b3")
        elif kind == "pool":
            cur.append("p2")
        if idx in _SELECT:
            segs.append(tuple(cur))
            cur = []
    return segs


def _band3(n):
    """3-wide band of ones: 3-tap sum with zero padding (AvgPool 3/1/1 numerator)."""
    i = np.arange(n)
    return (np.abs(i[:, None] - i[None, :]) <= 1).astype(np.float64)


def _pool2(n):
    """(n//2, n) stride-2 pairing matrix (AvgPool 2/2/0 numerator, floors odd n)."""
    r = np.arange(n // 2)[:, None]
    c = np.arange(n)[None, :]
    return ((c == 2 * r) | (c == 2 * r + 1)).astype(np.float64)


def _compose(ops, n):
    """Compose 1-D pooling ops along one axis -> (integer U, per-axis scale, n_out)."""
    U = np.eye(n, dtype=np.float64)
    size, scale = n, 1.0
    for op in ops:
        if op == "b3":
            U = _band3(size) @ U
            scale *= 1.0 / 3.0
        else:  # "p2"
            U = _pool2(size) @ U
            size //= 2
            scale *= 1.0 / 2.0
    return U, scale, size


def _blockdiag(M, pb):
    """Block-diagonal with pb copies of M (row-pool applied to pb stacked planes)."""
    n, m = M.shape
    B = np.zeros((pb * n, pb * m), dtype=np.float32)
    for p in range(pb):
        B[p * n:(p + 1) * n, p * m:(p + 1) * m] = M
    return B


def _tensorcores_per_device():
    """TensorCores per device: 2 on v7x, 1 on v5e/v6e (trace-time gate)."""
    try:
        kind = jax.devices()[0].device_kind.lower()
    except Exception:
        return 1
    return 2 if ("v7" in kind or "7x" in kind) else 1


def _pick_plane_batch(P, n_tc):
    """Plane batch Pb.  Single-TC: largest divisor <= 8 (G minimal, often 1).
    Multi-TC (v7x): largest divisor <= 8 that still leaves >= n_tc grid steps."""
    if n_tc <= 1:
        for pb in (8, 4, 2, 1):
            if P % pb == 0:
                return pb
        return 1
    for pb in (8, 4, 2, 1):
        if P % pb == 0 and (P // pb) >= n_tc:
            return pb
    return 1


# ------------------------------- Pallas kernel --------------------------------
def _vgg_mask_kernel(x_ref, *refs, num_stages):
    # x_ref : (1, Pb*H, W)   -- Pb planes stacked on the sublane axis
    # refs  : [A_0, B_0, ..., A_{S-1}, B_{S-1}, out_0, ..., out_{S-1}]
    #   A_s : (Pb*Ho_s, Pb*H_s)  block-diag row-pool matrix, full 2-D scale folded in
    #   B_s : (W_s, Wo_s)        shared column-pool matrix (integer-valued)
    mats = refs[:2 * num_stages]
    outs = refs[2 * num_stages:]
    z = x_ref[0]                                                 # (Pb*H, W), f32
    for s in range(num_stages):
        a = mats[2 * s][...]
        b = mats[2 * s + 1][...]
        z = jnp.dot(a, z, preferred_element_type=jnp.float32)    # rows pooled (per plane)
        z = jnp.dot(z, b, preferred_element_type=jnp.float32)    # cols pooled (shared)
        outs[s][0] = z                                           # tap feature s
    # z never leaves VMEM between stages; only the 5 taps are written to HBM.


# ------------------------------ module forward --------------------------------
def vgg19_mask_forward(x_nchw, *, resident_consts=True):
    """Equivalent of Vgg19_mask.forward. Input NCHW float32, returns 5 NCHW features."""
    n, c, h, w = x_nchw.shape
    P = n * c
    n_tc = _tensorcores_per_device()
    Pb = _pick_plane_batch(P, n_tc)
    G = P // Pb

    # Composed pooling matrices (exact integer products in numpy, built on host).
    a_list, b_list, out_hw = [], [], []
    hh, ww = h, w
    for ops in _segments():
        Uh, sh, ho = _compose(ops, hh)
        Uw, sw, wo = _compose(ops, ww)
        a_list.append(jnp.asarray(_blockdiag((sh * sw) * Uh, Pb)))   # f32, scale folded
        b_list.append(jnp.asarray(Uw.T.astype(np.float32)))          # shared (W, Wo)
        out_hw.append((ho, wo))
        hh, ww = ho, wo
    num_stages = len(a_list)

    # Planes-on-sublanes layout: NCHW -> (G, Pb*H, W) is a PURE reshape
    # (planes stay contiguous) -- no wrapper transpose, no extra HBM traffic.
    x = x_nchw.astype(jnp.float32).reshape(G, Pb * h, w)

    if resident_consts:
        # Single-buffered grid constants: whole array lives once in VMEM for the
        # entire kernel (no double-buffering, no per-step DMA bookkeeping).
        def const_spec(arr):
            return pl.BlockSpec(memory_space=pltpu.MemorySpace.VMEM)
    else:
        # Fallback: blocked grid-constant spec (index never changes across grid).
        def const_spec(arr):
            return pl.BlockSpec(arr.shape, lambda i: (0, 0))

    in_specs = [pl.BlockSpec((1, Pb * h, w), lambda i: (i, 0, 0))]
    mat_args = []
    for A, B in zip(a_list, b_list):
        in_specs.append(const_spec(A))
        in_specs.append(const_spec(B))
        mat_args.extend((A, B))

    out_specs = tuple(
        pl.BlockSpec((1, Pb * ho, wo), lambda i: (i, 0, 0)) for ho, wo in out_hw)
    out_shape = tuple(
        jax.ShapeDtypeStruct((G, Pb * ho, wo), jnp.float32) for ho, wo in out_hw)

    outs = pl.pallas_call(
        functools.partial(_vgg_mask_kernel, num_stages=num_stages),
        out_shape=out_shape,
        grid=(G,),                                    # G=1 on v5e/v6e, >=2 on v7x
        in_specs=in_specs,
        out_specs=out_specs,
        compiler_params=pltpu.CompilerParams(
            dimension_semantics=("parallel",),        # shards plane batches across v7x TCs
            vmem_limit_bytes=16 * 1024 * 1024),       # explicit; actual use << 1 MiB
    )(x, *mat_args)

    # Back to NCHW: pure reshape (no transpose) -- the plane-major row order of
    # (G, Pb*Ho, Wo) is exactly the NCHW flattening.
    return [y.reshape(n, c, ho, wo) for (ho, wo), y in zip(out_hw, outs)]


# ------------------------------- pure-JAX ref ----------------------------------
def _ref_forward(x_nchw):
    x = x_nchw.astype(jnp.float32)
    feats = []
    for idx, kind in enumerate(_VGG16_LAYERS):
        if kind == "conv":
            x = lax.reduce_window(
                x, 0.0, lax.add, (1, 1, 3, 3), (1, 1, 1, 1),
                ((0, 0), (0, 0), (1, 1), (1, 1))) / 9.0
        elif kind == "pool":
            x = lax.reduce_window(
                x, 0.0, lax.add, (1, 1, 2, 2), (1, 1, 2, 2), "VALID") / 4.0
        if idx in _SELECT:
            feats.append(x)
    return feats


if __name__ == "__main__":
    # NOTE: the nn.Module's __init__ builds vgg16 conv weights, but forward()
    # never uses them, so no weight tensors are needed here.
    # 32x32 spatial keeps every pooling stage well-defined (32->16->8->4->2->1).
    key = jax.random.PRNGKey(0)
    x = jax.random.normal(key, (2, 4, 32, 32), dtype=jnp.float32)  # N, C, H, W

    try:
        fwd = jax.jit(vgg19_mask_forward)                      # VMEM-resident constants
        feats = jax.block_until_ready(fwd(x))
    except Exception:
        # Robust fallback: blocked (pipelined) constant specs — previously validated path.
        fwd = jax.jit(functools.partial(vgg19_mask_forward, resident_consts=False))
        feats = jax.block_until_ready(fwd(x))

    refs = _ref_forward(x)
    assert len(feats) == 5
    for f, r in zip(feats, refs):
        assert f.shape == r.shape, (f.shape, r.shape)
        np.testing.assert_allclose(np.asarray(f), np.asarray(r),
                                   rtol=2e-4, atol=3e-5)
    print("KERNEL_OK")
</pallas_src>

<mosaic_0001>
module attributes {stable_mosaic.version = 11 : i64} {
  func.func @_vgg_mask_kernel(%arg0: i32, %arg1: memref<1x256x32xf32, #tpu.memory_space<vmem>>, %arg2: memref<256x256xf32, #tpu.memory_space<vmem>>, %arg3: memref<32x32xf32, #tpu.memory_space<vmem>>, %arg4: memref<128x256xf32, #tpu.memory_space<vmem>>, %arg5: memref<32x16xf32, #tpu.memory_space<vmem>>, %arg6: memref<64x128xf32, #tpu.memory_space<vmem>>, %arg7: memref<16x8xf32, #tpu.memory_space<vmem>>, %arg8: memref<32x64xf32, #tpu.memory_space<vmem>>, %arg9: memref<8x4xf32, #tpu.memory_space<vmem>>, %arg10: memref<16x32xf32, #tpu.memory_space<vmem>>, %arg11: memref<4x2xf32, #tpu.memory_space<vmem>>, %arg12: memref<1x256x32xf32, #tpu.memory_space<vmem>>, %arg13: memref<1x128x16xf32, #tpu.memory_space<vmem>>, %arg14: memref<1x64x8xf32, #tpu.memory_space<vmem>>, %arg15: memref<1x32x4xf32, #tpu.memory_space<vmem>>, %arg16: memref<1x16x2xf32, #tpu.memory_space<vmem>>) attributes {dimension_semantics = [#tpu.dimension_semantics<parallel>], iteration_bounds = array<i64: 1>, scalar_prefetch = 0 : i64, scratch_operands = 0 : i64, tpu.core_type = #tpu.core_type<tc>, window_params = [{transform_indices = @transform_0, window_bounds = array<i64: 1, 256, 32>}, {pipeline_mode = #tpu.pipeline_mode<synchronous>, transform_indices = @transform_1, window_bounds = array<i64: 256, 256>}, {pipeline_mode = #tpu.pipeline_mode<synchronous>, transform_indices = @transform_2, window_bounds = array<i64: 32, 32>}, {pipeline_mode = #tpu.pipeline_mode<synchronous>, transform_indices = @transform_3, window_bounds = array<i64: 128, 256>}, {pipeline_mode = #tpu.pipeline_mode<synchronous>, transform_indices = @transform_4, window_bounds = array<i64: 32, 16>}, {pipeline_mode = #tpu.pipeline_mode<synchronous>, transform_indices = @transform_5, window_bounds = array<i64: 64, 128>}, {pipeline_mode = #tpu.pipeline_mode<synchronous>, transform_indices = @transform_6, window_bounds = array<i64: 16, 8>}, {pipeline_mode = #tpu.pipeline_mode<synchronous>, transform_indices = @transform_7, window_bounds = array<i64: 32, 64>}, {pipeline_mode = #tpu.pipeline_mode<synchronous>, transform_indices = @transform_8, window_bounds = array<i64: 8, 4>}, {pipeline_mode = #tpu.pipeline_mode<synchronous>, transform_indices = @transform_9, window_bounds = array<i64: 16, 32>}, {pipeline_mode = #tpu.pipeline_mode<synchronous>, transform_indices = @transform_10, window_bounds = array<i64: 4, 2>}, {transform_indices = @transform_11, window_bounds = array<i64: 1, 256, 32>}, {transform_indices = @transform_12, window_bounds = array<i64: 1, 128, 16>}, {transform_indices = @transform_13, window_bounds = array<i64: 1, 64, 8>}, {transform_indices = @transform_14, window_bounds = array<i64: 1, 32, 4>}, {transform_indices = @transform_15, window_bounds = array<i64: 1, 16, 2>}]} {
    %c0 = arith.constant 0 : index
    %c0_0 = arith.constant 0 : index
    %c0_1 = arith.constant 0 : index
    %0 = vector.load %arg1[%c0, %c0_0, %c0_1] : memref<1x256x32xf32, #tpu.memory_space<vmem>>, vector<1x256x32xf32>
    %1 = vector.shape_cast %0 : vector<1x256x32xf32> to vector<256x32xf32>
    %c0_2 = arith.constant 0 : index
    %c0_3 = arith.constant 0 : index
    %2 = vector.load %arg2[%c0_2, %c0_3] : memref<256x256xf32, #tpu.memory_space<vmem>>, vector<256x256xf32>
    %c0_4 = arith.constant 0 : index
    %c0_5 = arith.constant 0 : index
    %3 = vector.load %arg3[%c0_4, %c0_5] : memref<32x32xf32, #tpu.memory_space<vmem>>, vector<32x32xf32>
    %cst = arith.constant dense<0.000000e+00> : vector<256x32xf32>
    %4 = tpu.matmul %2, %1, %cst {dimension_numbers = #tpu.dot_dimension_numbers<[1], [0], [0], [1], [0, 0, 1, 1], [], []>} : vector<256x256xf32>, vector<256x32xf32>, vector<256x32xf32> -> vector<256x32xf32>
    %cst_6 = arith.constant dense<0.000000e+00> : vector<256x32xf32>
    %5 = tpu.matmul %4, %3, %cst_6 {dimension_numbers = #tpu.dot_dimension_numbers<[1], [0], [0], [1], [0, 0, 1, 1], [], []>} : vector<256x32xf32>, vector<32x32xf32>, vector<256x32xf32> -> vector<256x32xf32>
    %c0_7 = arith.constant 0 : index
    %c0_8 = arith.constant 0 : index
    %c0_9 = arith.constant 0 : index
    %6 = vector.load %arg12[%c0_7, %c0_8, %c0_9] : memref<1x256x32xf32, #tpu.memory_space<vmem>>, vector<1x256x32xf32>
    %7 = vector.shape_cast %6 : vector<1x256x32xf32> to vector<256x32xf32>
    %8 = vector.shape_cast %5 : vector<256x32xf32> to vector<1x256x32xf32>
    tpu.vector_store %arg12[%c0_7, %c0_8, %c0_9], %8 {strides = array<i32>} : memref<1x256x32xf32, #tpu.memory_space<vmem>>, vector<1x256x32xf32>,
    %c0_10 = arith.constant 0 : index
    %c0_11 = arith.constant 0 : index
    %9 = vector.load %arg4[%c0_10, %c0_11] : memref<128x256xf32, #tpu.memory_space<vmem>>, vector<128x256xf32>
    %c0_12 = arith.constant 0 : index
    %c0_13 = arith.constant 0 : index
    %10 = vector.load %arg5[%c0_12, %c0_13] : memref<32x16xf32, #tpu.memory_space<vmem>>, vector<32x16xf32>
    %cst_14 = arith.constant dense<0.000000e+00> : vector<128x32xf32>
    %11 = tpu.matmul %9, %5, %cst_14 {dimension_numbers = #tpu.dot_dimension_numbers<[1], [0], [0], [1], [0, 0, 1, 1], [], []>} : vector<128x256xf32>, vector<256x32xf32>, vector<128x32xf32> -> vector<128x32xf32>
    %cst_15 = arith.constant dense<0.000000e+00> : vector<128x16xf32>
    %12 = tpu.matmul %11, %10, %cst_15 {dimension_numbers = #tpu.dot_dimension_numbers<[1], [0], [0], [1], [0, 0, 1, 1], [], []>} : vector<128x32xf32>, vector<32x16xf32>, vector<128x16xf32> -> vector<128x16xf32>
    %c0_16 = arith.constant 0 : index
    %c0_17 = arith.constant 0 : index
    %c0_18 = arith.constant 0 : index
    %13 = vector.load %arg13[%c0_16, %c0_17, %c0_18] : memref<1x128x16xf32, #tpu.memory_space<vmem>>, vector<1x128x16xf32>
    %14 = vector.shape_cast %13 : vector<1x128x16xf32> to vector<128x16xf32>
    %15 = vector.shape_cast %12 : vector<128x16xf32> to vector<1x128x16xf32>
    tpu.vector_store %arg13[%c0_16, %c0_17, %c0_18], %15 {strides = array<i32>} : memref<1x128x16xf32, #tpu.memory_space<vmem>>, vector<1x128x16xf32>,
    %c0_19 = arith.constant 0 : index
    %c0_20 = arith.constant 0 : index
    %16 = vector.load %arg6[%c0_19, %c0_20] : memref<64x128xf32, #tpu.memory_space<vmem>>, vector<64x128xf32>
    %c0_21 = arith.constant 0 : index
    %c0_22 = arith.constant 0 : index
    %17 = vector.load %arg7[%c0_21, %c0_22] : memref<16x8xf32, #tpu.memory_space<vmem>>, vector<16x8xf32>
    %cst_23 = arith.constant dense<0.000000e+00> : vector<64x16xf32>
    %18 = tpu.matmul %16, %12, %cst_23 {dimension_numbers = #tpu.dot_dimension_numbers<[1], [0], [0], [1], [0, 0, 1, 1], [], []>} : vector<64x128xf32>, vector<128x16xf32>, vector<64x16xf32> -> vector<64x16xf32>
    %cst_24 = arith.constant dense<0.000000e+00> : vector<64x8xf32>
    %19 = tpu.matmul %18, %17, %cst_24 {dimension_numbers = #tpu.dot_dimension_numbers<[1], [0], [0], [1], [0, 0, 1, 1], [], []>} : vector<64x16xf32>, vector<16x8xf32>, vector<64x8xf32> -> vector<64x8xf32>
    %c0_25 = arith.constant 0 : index
    %c0_26 = arith.constant 0 : index
    %c0_27 = arith.constant 0 : index
    %20 = vector.load %arg14[%c0_25, %c0_26, %c0_27] : memref<1x64x8xf32, #tpu.memory_space<vmem>>, vector<1x64x8xf32>
    %21 = vector.shape_cast %20 : vector<1x64x8xf32> to vector<64x8xf32>
    %22 = vector.shape_cast %19 : vector<64x8xf32> to vector<1x64x8xf32>
    tpu.vector_store %arg14[%c0_25, %c0_26, %c0_27], %22 {strides = array<i32>} : memref<1x64x8xf32, #tpu.memory_space<vmem>>, vector<1x64x8xf32>,
    %c0_28 = arith.constant 0 : index
    %c0_29 = arith.constant 0 : index
    %23 = vector.load %arg8[%c0_28, %c0_29] : memref<32x64xf32, #tpu.memory_space<vmem>>, vector<32x64xf32>
    %c0_30 = arith.constant 0 : index
    %c0_31 = arith.constant 0 : index
    %24 = vector.load %arg9[%c0_30, %c0_31] : memref<8x4xf32, #tpu.memory_space<vmem>>, vector<8x4xf32>
    %cst_32 = arith.constant dense<0.000000e+00> : vector<32x8xf32>
    %25 = tpu.matmul %23, %19, %cst_32 {dimension_numbers = #tpu.dot_dimension_numbers<[1], [0], [0], [1], [0, 0, 1, 1], [], []>} : vector<32x64xf32>, vector<64x8xf32>, vector<32x8xf32> -> vector<32x8xf32>
    %cst_33 = arith.constant dense<0.000000e+00> : vector<32x4xf32>
    %26 = tpu.matmul %25, %24, %cst_33 {dimension_numbers = #tpu.dot_dimension_numbers<[1], [0], [0], [1], [0, 0, 1, 1], [], []>} : vector<32x8xf32>, vector<8x4xf32>, vector<32x4xf32> -> vector<32x4xf32>
    %c0_34 = arith.constant 0 : index
    %c0_35 = arith.constant 0 : index
    %c0_36 = arith.constant 0 : index
    %27 = vector.load %arg15[%c0_34, %c0_35, %c0_36] : memref<1x32x4xf32, #tpu.memory_space<vmem>>, vector<1x32x4xf32>
    %28 = vector.shape_cast %27 : vector<1x32x4xf32> to vector<32x4xf32>
    %29 = vector.shape_cast %26 : vector<32x4xf32> to vector<1x32x4xf32>
    tpu.vector_store %arg15[%c0_34, %c0_35, %c0_36], %29 {strides = array<i32>} : memref<1x32x4xf32, #tpu.memory_space<vmem>>, vector<1x32x4xf32>,
    %c0_37 = arith.constant 0 : index
    %c0_38 = arith.constant 0 : index
    %30 = vector.load %arg10[%c0_37, %c0_38] : memref<16x32xf32, #tpu.memory_space<vmem>>, vector<16x32xf32>
    %c0_39 = arith.constant 0 : index
    %c0_40 = arith.constant 0 : index
    %31 = vector.load %arg11[%c0_39, %c0_40] : memref<4x2xf32, #tpu.memory_space<vmem>>, vector<4x2xf32>
    %cst_41 = arith.constant dense<0.000000e+00> : vector<16x4xf32>
    %32 = tpu.matmul %30, %26, %cst_41 {dimension_numbers = #tpu.dot_dimension_numbers<[1], [0], [0], [1], [0, 0, 1, 1], [], []>} : vector<16x32xf32>, vector<32x4xf32>, vector<16x4xf32> -> vector<16x4xf32>
    %cst_42 = arith.constant dense<0.000000e+00> : vector<16x2xf32>
    %33 = tpu.matmul %32, %31, %cst_42 {dimension_numbers = #tpu.dot_dimension_numbers<[1], [0], [0], [1], [0, 0, 1, 1], [], []>} : vector<16x4xf32>, vector<4x2xf32>, vector<16x2xf32> -> vector<16x2xf32>
    %c0_43 = arith.constant 0 : index
    %c0_44 = arith.constant 0 : index
    %c0_45 = arith.constant 0 : index
    %34 = vector.load %arg16[%c0_43, %c0_44, %c0_45] : memref<1x16x2xf32, #tpu.memory_space<vmem>>, vector<1x16x2xf32>
    %35 = vector.shape_cast %34 : vector<1x16x2xf32> to vector<16x2xf32>
    %36 = vector.shape_cast %33 : vector<16x2xf32> to vector<1x16x2xf32>
    tpu.vector_store %arg16[%c0_43, %c0_44, %c0_45], %36 {strides = array<i32>} : memref<1x16x2xf32, #tpu.memory_space<vmem>>, vector<1x16x2xf32>,
    return
  }
  func.func @transform_0(%arg0: i32) -> (i32, i32, i32) {
    %c0_i32 = arith.constant 0 : i32
    %c0_i32_0 = arith.constant 0 : i32
    %c0_i32_1 = arith.constant 0 : i32
    return %arg0, %c0_i32, %c0_i32_0 : i32, i32, i32
  }
  func.func @transform_1(%arg0: i32) -> (i32, i32) {
    %c0_i32 = arith.constant 0 : i32
    %c0_i32_0 = arith.constant 0 : i32
    %c0_i32_1 = arith.constant 0 : i32
    return %c0_i32, %c0_i32_0 : i32, i32
  }
  func.func @transform_2(%arg0: i32) -> (i32, i32) {
    %c0_i32 = arith.constant 0 : i32
    %c0_i32_0 = arith.constant 0 : i32
    %c0_i32_1 = arith.constant 0 : i32
    return %c0_i32, %c0_i32_0 : i32, i32
  }
  func.func @transform_3(%arg0: i32) -> (i32, i32) {
    %c0_i32 = arith.constant 0 : i32
    %c0_i32_0 = arith.constant 0 : i32
    %c0_i32_1 = arith.constant 0 : i32
    return %c0_i32, %c0_i32_0 : i32, i32
  }
  func.func @transform_4(%arg0: i32) -> (i32, i32) {
    %c0_i32 = arith.constant 0 : i32
    %c0_i32_0 = arith.constant 0 : i32
    %c0_i32_1 = arith.constant 0 : i32
    return %c0_i32, %c0_i32_0 : i32, i32
  }
  func.func @transform_5(%arg0: i32) -> (i32, i32) {
    %c0_i32 = arith.constant 0 : i32
    %c0_i32_0 = arith.constant 0 : i32
    %c0_i32_1 = arith.constant 0 : i32
    return %c0_i32, %c0_i32_0 : i32, i32
  }
  func.func @transform_6(%arg0: i32) -> (i32, i32) {
    %c0_i32 = arith.constant 0 : i32
    %c0_i32_0 = arith.constant 0 : i32
    %c0_i32_1 = arith.constant 0 : i32
    return %c0_i32, %c0_i32_0 : i32, i32
  }
  func.func @transform_7(%arg0: i32) -> (i32, i32) {
    %c0_i32 = arith.constant 0 : i32
    %c0_i32_0 = arith.constant 0 : i32
    %c0_i32_1 = arith.constant 0 : i32
    return %c0_i32, %c0_i32_0 : i32, i32
  }
  func.func @transform_8(%arg0: i32) -> (i32, i32) {
    %c0_i32 = arith.constant 0 : i32
    %c0_i32_0 = arith.constant 0 : i32
    %c0_i32_1 = arith.constant 0 : i32
    return %c0_i32, %c0_i32_0 : i32, i32
  }
  func.func @transform_9(%arg0: i32) -> (i32, i32) {
    %c0_i32 = arith.constant 0 : i32
    %c0_i32_0 = arith.constant 0 : i32
    %c0_i32_1 = arith.constant 0 : i32
    return %c0_i32, %c0_i32_0 : i32, i32
  }
  func.func @transform_10(%arg0: i32) -> (i32, i32) {
    %c0_i32 = arith.constant 0 : i32
    %c0_i32_0 = arith.constant 0 : i32
    %c0_i32_1 = arith.constant 0 : i32
    return %c0_i32, %c0_i32_0 : i32, i32
  }
  func.func @transform_11(%arg0: i32) -> (i32, i32, i32) {
    %c0_i32 = arith.constant 0 : i32
    %c0_i32_0 = arith.constant 0 : i32
    %c0_i32_1 = arith.constant 0 : i32
    return %arg0, %c0_i32, %c0_i32_0 : i32, i32, i32
  }
  func.func @transform_12(%arg0: i32) -> (i32, i32, i32) {
    %c0_i32 = arith.constant 0 : i32
    %c0_i32_0 = arith.constant 0 : i32
    %c0_i32_1 = arith.constant 0 : i32
    return %arg0, %c0_i32, %c0_i32_0 : i32, i32, i32
  }
  func.func @transform_13(%arg0: i32) -> (i32, i32, i32) {
    %c0_i32 = arith.constant 0 : i32
    %c0_i32_0 = arith.constant 0 : i32
    %c0_i32_1 = arith.constant 0 : i32
    return %arg0, %c0_i32, %c0_i32_0 : i32, i32, i32
  }
  func.func @transform_14(%arg0: i32) -> (i32, i32, i32) {
    %c0_i32 = arith.constant 0 : i32
    %c0_i32_0 = arith.constant 0 : i32
    %c0_i32_1 = arith.constant 0 : i32
    return %arg0, %c0_i32, %c0_i32_0 : i32, i32, i32
  }
  func.func @transform_15(%arg0: i32) -> (i32, i32, i32) {
    %c0_i32 = arith.constant 0 : i32
    %c0_i32_0 = arith.constant 0 : i32
    %c0_i32_1 = arith.constant 0 : i32
    return %arg0, %c0_i32, %c0_i32_0 : i32, i32, i32
  }
}

module attributes {stable_mosaic.version = 11 : i64} {
  func.func @_vgg_mask_kernel(%arg0: i32, %arg1: memref<1x256x32xf32, #tpu.memory_space<vmem>>, %arg2: memref<256x256xf32, #tpu.memory_space<vmem>>, %arg3: memref<32x32xf32, #tpu.memory_space<vmem>>, %arg4: memref<128x256xf32, #tpu.memory_space<vmem>>, %arg5: memref<32x16xf32, #tpu.memory_space<vmem>>, %arg6: memref<64x128xf32, #tpu.memory_space<vmem>>, %arg7: memref<16x8xf32, #tpu.memory_space<vmem>>, %arg8: memref<32x64xf32, #tpu.memory_space<vmem>>, %arg9: memref<8x4xf32, #tpu.memory_space<vmem>>, %arg10: memref<16x32xf32, #tpu.memory_space<vmem>>, %arg11: memref<4x2xf32, #tpu.memory_space<vmem>>, %arg12: memref<1x256x32xf32, #tpu.memory_space<vmem>>, %arg13: memref<1x128x16xf32, #tpu.memory_space<vmem>>, %arg14: memref<1x64x8xf32, #tpu.memory_space<vmem>>, %arg15: memref<1x32x4xf32, #tpu.memory_space<vmem>>, %arg16: memref<1x16x2xf32, #tpu.memory_space<vmem>>) attributes {dimension_semantics = [#tpu.dimension_semantics<parallel>], iteration_bounds = array<i64: 1>, scalar_prefetch = 0 : i64, scratch_operands = 0 : i64, tpu.core_type = #tpu.core_type<tc>, window_params = [{transform_indices = @transform_0, window_bounds = array<i64: 1, 256, 32>}, {pipeline_mode = #tpu.pipeline_mode<synchronous>, transform_indices = @transform_1, window_bounds = array<i64: 256, 256>}, {pipeline_mode = #tpu.pipeline_mode<synchronous>, transform_indices = @transform_2, window_bounds = array<i64: 32, 32>}, {pipeline_mode = #tpu.pipeline_mode<synchronous>, transform_indices = @transform_3, window_bounds = array<i64: 128, 256>}, {pipeline_mode = #tpu.pipeline_mode<synchronous>, transform_indices = @transform_4, window_bounds = array<i64: 32, 16>}, {pipeline_mode = #tpu.pipeline_mode<synchronous>, transform_indices = @transform_5, window_bounds = array<i64: 64, 128>}, {pipeline_mode = #tpu.pipeline_mode<synchronous>, transform_indices = @transform_6, window_bounds = array<i64: 16, 8>}, {pipeline_mode = #tpu.pipeline_mode<synchronous>, transform_indices = @transform_7, window_bounds = array<i64: 32, 64>}, {pipeline_mode = #tpu.pipeline_mode<synchronous>, transform_indices = @transform_8, window_bounds = array<i64: 8, 4>}, {pipeline_mode = #tpu.pipeline_mode<synchronous>, transform_indices = @transform_9, window_bounds = array<i64: 16, 32>}, {pipeline_mode = #tpu.pipeline_mode<synchronous>, transform_indices = @transform_10, window_bounds = array<i64: 4, 2>}, {transform_indices = @transform_11, window_bounds = array<i64: 1, 256, 32>}, {transform_indices = @transform_12, window_bounds = array<i64: 1, 128, 16>}, {transform_indices = @transform_13, window_bounds = array<i64: 1, 64, 8>}, {transform_indices = @transform_14, window_bounds = array<i64: 1, 32, 4>}, {transform_indices = @transform_15, window_bounds = array<i64: 1, 16, 2>}]} {
    %c0 = arith.constant 0 : index
    %c0_0 = arith.constant 0 : index
    %c0_1 = arith.constant 0 : index
    %0 = vector.load %arg1[%c0, %c0_0, %c0_1] : memref<1x256x32xf32, #tpu.memory_space<vmem>>, vector<1x256x32xf32>
    %1 = vector.shape_cast %0 : vector<1x256x32xf32> to vector<256x32xf32>
    %c0_2 = arith.constant 0 : index
    %c0_3 = arith.constant 0 : index
    %2 = vector.load %arg2[%c0_2, %c0_3] : memref<256x256xf32, #tpu.memory_space<vmem>>, vector<256x256xf32>
    %c0_4 = arith.constant 0 : index
    %c0_5 = arith.constant 0 : index
    %3 = vector.load %arg3[%c0_4, %c0_5] : memref<32x32xf32, #tpu.memory_space<vmem>>, vector<32x32xf32>
    %cst = arith.constant dense<0.000000e+00> : vector<256x32xf32>
    %4 = tpu.matmul %2, %1, %cst {dimension_numbers = #tpu.dot_dimension_numbers<[1], [0], [0], [1], [0, 0, 1, 1], [], []>} : vector<256x256xf32>, vector<256x32xf32>, vector<256x32xf32> -> vector<256x32xf32>
    %cst_6 = arith.constant dense<0.000000e+00> : vector<256x32xf32>
    %5 = tpu.matmul %4, %3, %cst_6 {dimension_numbers = #tpu.dot_dimension_numbers<[1], [0], [0], [1], [0, 0, 1, 1], [], []>} : vector<256x32xf32>, vector<32x32xf32>, vector<256x32xf32> -> vector<256x32xf32>
    %c0_7 = arith.constant 0 : index
    %c0_8 = arith.constant 0 : index
    %c0_9 = arith.constant 0 : index
    %6 = vector.load %arg12[%c0_7, %c0_8, %c0_9] : memref<1x256x32xf32, #tpu.memory_space<vmem>>, vector<1x256x32xf32>
    %7 = vector.shape_cast %6 : vector<1x256x32xf32> to vector<256x32xf32>
    %8 = vector.shape_cast %5 : vector<256x32xf32> to vector<1x256x32xf32>
    tpu.vector_store %arg12[%c0_7, %c0_8, %c0_9], %8 {strides = array<i32>} : memref<1x256x32xf32, #tpu.memory_space<vmem>>, vector<1x256x32xf32>,
    %c0_10 = arith.constant 0 : index
    %c0_11 = arith.constant 0 : index
    %9 = vector.load %arg4[%c0_10, %c0_11] : memref<128x256xf32, #tpu.memory_space<vmem>>, vector<128x256xf32>
    %c0_12 = arith.constant 0 : index
    %c0_13 = arith.constant 0 : index
    %10 = vector.load %arg5[%c0_12, %c0_13] : memref<32x16xf32, #tpu.memory_space<vmem>>, vector<32x16xf32>
    %cst_14 = arith.constant dense<0.000000e+00> : vector<128x32xf32>
    %11 = tpu.matmul %9, %5, %cst_14 {dimension_numbers = #tpu.dot_dimension_numbers<[1], [0], [0], [1], [0, 0, 1, 1], [], []>} : vector<128x256xf32>, vector<256x32xf32>, vector<128x32xf32> -> vector<128x32xf32>
    %cst_15 = arith.constant dense<0.000000e+00> : vector<128x16xf32>
    %12 = tpu.matmul %11, %10, %cst_15 {dimension_numbers = #tpu.dot_dimension_numbers<[1], [0], [0], [1], [0, 0, 1, 1], [], []>} : vector<128x32xf32>, vector<32x16xf32>, vector<128x16xf32> -> vector<128x16xf32>
    %c0_16 = arith.constant 0 : index
    %c0_17 = arith.constant 0 : index
    %c0_18 = arith.constant 0 : index
    %13 = vector.load %arg13[%c0_16, %c0_17, %c0_18] : memref<1x128x16xf32, #tpu.memory_space<vmem>>, vector<1x128x16xf32>
    %14 = vector.shape_cast %13 : vector<1x128x16xf32> to vector<128x16xf32>
    %15 = vector.shape_cast %12 : vector<128x16xf32> to vector<1x128x16xf32>
    tpu.vector_store %arg13[%c0_16, %c0_17, %c0_18], %15 {strides = array<i32>} : memref<1x128x16xf32, #tpu.memory_space<vmem>>, vector<1x128x16xf32>,
    %c0_19 = arith.constant 0 : index
    %c0_20 = arith.constant 0 : index
    %16 = vector.load %arg6[%c0_19, %c0_20] : memref<64x128xf32, #tpu.memory_space<vmem>>, vector<64x128xf32>
    %c0_21 = arith.constant 0 : index
    %c0_22 = arith.constant 0 : index
    %17 = vector.load %arg7[%c0_21, %c0_22] : memref<16x8xf32, #tpu.memory_space<vmem>>, vector<16x8xf32>
    %cst_23 = arith.constant dense<0.000000e+00> : vector<64x16xf32>
    %18 = tpu.matmul %16, %12, %cst_23 {dimension_numbers = #tpu.dot_dimension_numbers<[1], [0], [0], [1], [0, 0, 1, 1], [], []>} : vector<64x128xf32>, vector<128x16xf32>, vector<64x16xf32> -> vector<64x16xf32>
    %cst_24 = arith.constant dense<0.000000e+00> : vector<64x8xf32>
    %19 = tpu.matmul %18, %17, %cst_24 {dimension_numbers = #tpu.dot_dimension_numbers<[1], [0], [0], [1], [0, 0, 1, 1], [], []>} : vector<64x16xf32>, vector<16x8xf32>, vector<64x8xf32> -> vector<64x8xf32>
    %c0_25 = arith.constant 0 : index
    %c0_26 = arith.constant 0 : index
    %c0_27 = arith.constant 0 : index
    %20 = vector.load %arg14[%c0_25, %c0_26, %c0_27] : memref<1x64x8xf32, #tpu.memory_space<vmem>>, vector<1x64x8xf32>
    %21 = vector.shape_cast %20 : vector<1x64x8xf32> to vector<64x8xf32>
    %22 = vector.shape_cast %19 : vector<64x8xf32> to vector<1x64x8xf32>
    tpu.vector_store %arg14[%c0_25, %c0_26, %c0_27], %22 {strides = array<i32>} : memref<1x64x8xf32, #tpu.memory_space<vmem>>, vector<1x64x8xf32>,
    %c0_28 = arith.constant 0 : index
    %c0_29 = arith.constant 0 : index
    %23 = vector.load %arg8[%c0_28, %c0_29] : memref<32x64xf32, #tpu.memory_space<vmem>>, vector<32x64xf32>
    %c0_30 = arith.constant 0 : index
    %c0_31 = arith.constant 0 : index
    %24 = vector.load %arg9[%c0_30, %c0_31] : memref<8x4xf32, #tpu.memory_space<vmem>>, vector<8x4xf32>
    %cst_32 = arith.constant dense<0.000000e+00> : vector<32x8xf32>
    %25 = tpu.matmul %23, %19, %cst_32 {dimension_numbers = #tpu.dot_dimension_numbers<[1], [0], [0], [1], [0, 0, 1, 1], [], []>} : vector<32x64xf32>, vector<64x8xf32>, vector<32x8xf32> -> vector<32x8xf32>
    %cst_33 = arith.constant dense<0.000000e+00> : vector<32x4xf32>
    %26 = tpu.matmul %25, %24, %cst_33 {dimension_numbers = #tpu.dot_dimension_numbers<[1], [0], [0], [1], [0, 0, 1, 1], [], []>} : vector<32x8xf32>, vector<8x4xf32>, vector<32x4xf32> -> vector<32x4xf32>
    %c0_34 = arith.constant 0 : index
    %c0_35 = arith.constant 0 : index
    %c0_36 = arith.constant 0 : index
    %27 = vector.load %arg15[%c0_34, %c0_35, %c0_36] : memref<1x32x4xf32, #tpu.memory_space<vmem>>, vector<1x32x4xf32>
    %28 = vector.shape_cast %27 : vector<1x32x4xf32> to vector<32x4xf32>
    %29 = vector.shape_cast %26 : vector<32x4xf32> to vector<1x32x4xf32>
    tpu.vector_store %arg15[%c0_34, %c0_35, %c0_36], %29 {strides = array<i32>} : memref<1x32x4xf32, #tpu.memory_space<vmem>>, vector<1x32x4xf32>,
    %c0_37 = arith.constant 0 : index
    %c0_38 = arith.constant 0 : index
    %30 = vector.load %arg10[%c0_37, %c0_38] : memref<16x32xf32, #tpu.memory_space<vmem>>, vector<16x32xf32>
    %c0_39 = arith.constant 0 : index
    %c0_40 = arith.constant 0 : index
    %31 = vector.load %arg11[%c0_39, %c0_40] : memref<4x2xf32, #tpu.memory_space<vmem>>, vector<4x2xf32>
    %cst_41 = arith.constant dense<0.000000e+00> : vector<16x4xf32>
    %32 = tpu.matmul %30, %26, %cst_41 {dimension_numbers = #tpu.dot_dimension_numbers<[1], [0], [0], [1], [0, 0, 1, 1], [], []>} : vector<16x32xf32>, vector<32x4xf32>, vector<16x4xf32> -> vector<16x4xf32>
    %cst_42 = arith.constant dense<0.000000e+00> : vector<16x2xf32>
    %33 = tpu.matmul %32, %31, %cst_42 {dimension_numbers = #tpu.dot_dimension_numbers<[1], [0], [0], [1], [0, 0, 1, 1], [], []>} : vector<16x4xf32>, vector<4x2xf32>, vector<16x2xf32> -> vector<16x2xf32>
    %c0_43 = arith.constant 0 : index
    %c0_44 = arith.constant 0 : index
    %c0_45 = arith.constant 0 : index
    %34 = vector.load %arg16[%c0_43, %c0_44, %c0_45] : memref<1x16x2xf32, #tpu.memory_space<vmem>>, vector<1x16x2xf32>
    %35 = vector.shape_cast %34 : vector<1x16x2xf32> to vector<16x2xf32>
    %36 = vector.shape_cast %33 : vector<16x2xf32> to vector<1x16x2xf32>
    tpu.vector_store %arg16[%c0_43, %c0_44, %c0_45], %36 {strides = array<i32>} : memref<1x16x2xf32, #tpu.memory_space<vmem>>, vector<1x16x2xf32>,
    return
  }
  func.func @transform_0(%arg0: i32) -> (i32, i32, i32) {
    %c0_i32 = arith.constant 0 : i32
    %c0_i32_0 = arith.constant 0 : i32
    %c0_i32_1 = arith.constant 0 : i32
    return %arg0, %c0_i32, %c0_i32_0 : i32, i32, i32
  }
  func.func @transform_1(%arg0: i32) -> (i32, i32) {
    %c0_i32 = arith.constant 0 : i32
    %c0_i32_0 = arith.constant 0 : i32
    %c0_i32_1 = arith.constant 0 : i32
    return %c0_i32, %c0_i32_0 : i32, i32
  }
  func.func @transform_2(%arg0: i32) -> (i32, i32) {
    %c0_i32 = arith.constant 0 : i32
    %c0_i32_0 = arith.constant 0 : i32
    %c0_i32_1 = arith.constant 0 : i32
    return %c0_i32, %c0_i32_0 : i32, i32
  }
  func.func @transform_3(%arg0: i32) -> (i32, i32) {
    %c0_i32 = arith.constant 0 : i32
    %c0_i32_0 = arith.constant 0 : i32
    %c0_i32_1 = arith.constant 0 : i32
    return %c0_i32, %c0_i32_0 : i32, i32
  }
  func.func @transform_4(%arg0: i32) -> (i32, i32) {
    %c0_i32 = arith.constant 0 : i32
    %c0_i32_0 = arith.constant 0 : i32
    %c0_i32_1 = arith.constant 0 : i32
    return %c0_i32, %c0_i32_0 : i32, i32
  }
  func.func @transform_5(%arg0: i32) -> (i32, i32) {
    %c0_i32 = arith.constant 0 : i32
    %c0_i32_0 = arith.constant 0 : i32
    %c0_i32_1 = arith.constant 0 : i32
    return %c0_i32, %c0_i32_0 : i32, i32
  }
  func.func @transform_6(%arg0: i32) -> (i32, i32) {
    %c0_i32 = arith.constant 0 : i32
    %c0_i32_0 = arith.constant 0 : i32
    %c0_i32_1 = arith.constant 0 : i32
    return %c0_i32, %c0_i32_0 : i32, i32
  }
  func.func @transform_7(%arg0: i32) -> (i32, i32) {
    %c0_i32 = arith.constant 0 : i32
    %c0_i32_0 = arith.constant 0 : i32
    %c0_i32_1 = arith.constant 0 : i32
    return %c0_i32, %c0_i32_0 : i32, i32
  }
  func.func @transform_8(%arg0: i32) -> (i32, i32) {
    %c0_i32 = arith.constant 0 : i32
    %c0_i32_0 = arith.constant 0 : i32
    %c0_i32_1 = arith.constant 0 : i32
    return %c0_i32, %c0_i32_0 : i32, i32
  }
  func.func @transform_9(%arg0: i32) -> (i32, i32) {
    %c0_i32 = arith.constant 0 : i32
    %c0_i32_0 = arith.constant 0 : i32
    %c0_i32_1 = arith.constant 0 : i32
    return %c0_i32, %c0_i32_0 : i32, i32
  }
  func.func @transform_10(%arg0: i32) -> (i32, i32) {
    %c0_i32 = arith.constant 0 : i32
    %c0_i32_0 = arith.constant 0 : i32
    %c0_i32_1 = arith.constant 0 : i32
    return %c0_i32, %c0_i32_0 : i32, i32
  }
  func.func @transform_11(%arg0: i32) -> (i32, i32, i32) {
    %c0_i32 = arith.constant 0 : i32
    %c0_i32_0 = arith.constant 0 : i32
    %c0_i32_1 = arith.constant 0 : i32
    return %arg0, %c0_i32, %c0_i32_0 : i32, i32, i32
  }
  func.func @transform_12(%arg0: i32) -> (i32, i32, i32) {
    %c0_i32 = arith.constant 0 : i32
    %c0_i32_0 = arith.constant 0 : i32
    %c0_i32_1 = arith.constant 0 : i32
    return %arg0, %c0_i32, %c0_i32_0 : i32, i32, i32
  }
  func.func @transform_13(%arg0: i32) -> (i32, i32, i32) {
    %c0_i32 = arith.constant 0 : i32
    %c0_i32_0 = arith.constant 0 : i32
    %c0_i32_1 = arith.constant 0 : i32
    return %arg0, %c0_i32, %c0_i32_0 : i32, i32, i32
  }
  func.func @transform_14(%arg0: i32) -> (i32, i32, i32) {
    %c0_i32 = arith.constant 0 : i32
    %c0_i32_0 = arith.constant 0 : i32
    %c0_i32_1 = arith.constant 0 : i32
    return %arg0, %c0_i32, %c0_i32_0 : i32, i32, i32
  }
  func.func @transform_15(%arg0: i32) -> (i32, i32, i32) {
    %c0_i32 = arith.constant 0 : i32
    %c0_i32_0 = arith.constant 0 : i32
    %c0_i32_1 = arith.constant 0 : i32
    return %arg0, %c0_i32, %c0_i32_0 : i32, i32, i32
  }
}

</mosaic_0001>

<llo_original>
// kernel: vgg19_mask_forward.1
$region0: #{vgg19_mask_forward.1}
  #allocation0 [shape = 'u32[]', space=smem, size = 0x4, offset = 0x4, fixed_abs, tag = 'smem constant byte address 0x4 - core index']
  #allocation1 [shape = 'u32[144,128]{1,0:T(1,128)}', space=vmem, size = 0x12000, scoped, tag = 'internal scratch']
  %s0 = inlined_call_operand.hbm [shape: f32[1,256,32], index: 0, kind: input, shape index: {}]
  %s1 = inlined_call_operand.hbm [shape: f32[256,256], index: 1, kind: input, shape index: {}]
  %s2 = inlined_call_operand.hbm [shape: f32[32,32], index: 2, kind: input, shape index: {}]
  %s3 = inlined_call_operand.hbm [shape: f32[128,256], index: 3, kind: input, shape index: {}]
  %s4 = inlined_call_operand.hbm [shape: f32[32,16], index: 4, kind: input, shape index: {}]
  %s5 = inlined_call_operand.hbm [shape: f32[64,128], index: 5, kind: input, shape index: {}]
  %s6 = inlined_call_operand.hbm [shape: f32[16,8], index: 6, kind: input, shape index: {}]
  %s7 = inlined_call_operand.hbm [shape: f32[32,64], index: 7, kind: input, shape index: {}]
  %s8 = inlined_call_operand.hbm [shape: f32[8,4], index: 8, kind: input, shape index: {}]
  %s9 = inlined_call_operand.vmem [shape: f32[16,32], index: 9, kind: input, shape index: {}]
  %s10 = inlined_call_operand.vmem [shape: f32[4,2], index: 10, kind: input, shape index: {}]
  %s11 = inlined_call_operand.hbm [shape: f32[1,256,32], index: 11, kind: output, shape index: {0}]
  %s12 = inlined_call_operand.hbm [shape: f32[1,128,16], index: 12, kind: output, shape index: {1}]
  %s13 = inlined_call_operand.hbm [shape: f32[1,64,8], index: 13, kind: output, shape index: {2}]
  %s14 = inlined_call_operand.hbm [shape: f32[1,32,4], index: 14, kind: output, shape index: {3}]
  %s15 = inlined_call_operand.vmem [shape: f32[1,16,2], index: 15, kind: output, shape index: {4}]
  %16 = xla_tuple %s11, %s12, %s13, %s14, %s15
  %s17 = sld [smem:[#allocation0]]
  $region122: #{vgg19_mask_forward.1} parent=0
    _
  %s19 = ssub.s32 1, %s17
  %s20 = scalar_select 0, %s19, %s17
  $region1: #{vgg19_mask_forward.1} parent=0
    #allocation2 [shape = 'u8[131072]{0}', space=vmem, size = 0x20000, scoped, tag = 'input window, operand 0, single buffered']
    #allocation3 [shape = 's32[1]{0}', space=sflag, size = 0x4, scoped, tag = 'scoped memory for vgg19_mask_forward.1']
    #allocation4 [shape = 's32[1]{0}', space=sflag, size = 0x4, scoped, tag = 'scoped memory for vgg19_mask_forward.1']
    #allocation5 [shape = 'u8[262144]{0}', space=vmem, size = 0x40000, scoped, tag = 'input window, operand 1, single buffered']
    #allocation6 [shape = 's32[1]{0}', space=sflag, size = 0x4, scoped, tag = 'scoped memory for vgg19_mask_forward.1']
    #allocation7 [shape = 'u8[16384]{0}', space=vmem, size = 0x4000, scoped, tag = 'input window, operand 2, single buffered']
    #allocation8 [shape = 'u8[131072]{0}', space=vmem, size = 0x20000, scoped, tag = 'input window, operand 3, single buffered']
    #allocation9 [shape = 's32[1]{0}', space=sflag, size = 0x4, scoped, tag = 'scoped memory for vgg19_mask_forward.1']
    #allocation10 [shape = 'u8[16384]{0}', space=vmem, size = 0x4000, scoped, tag = 'input window, operand 4, single buffered']
    #allocation11 [shape = 'u8[32768]{0}', space=vmem, size = 0x8000, scoped, tag = 'input window, operand 5, single buffered']
    #allocation12 [shape = 's32[1]{0}', space=sflag, size = 0x4, scoped, tag = 'scoped memory for vgg19_mask_forward.1']
    #allocation13 [shape = 'u8[8192]{0}', space=vmem, size = 0x2000, scoped, tag = 'input window, operand 6, single buffered']
    #allocation14 [shape = 'u8[16384]{0}', space=vmem, size = 0x4000, scoped, tag = 'input window, operand 7, single buffered']
    #allocation15 [shape = 's32[1]{0}', space=sflag, size = 0x4, scoped, tag = 'scoped memory for vgg19_mask_forward.1']
    #allocation16 [shape = 'u8[4096]{0}', space=vmem, size = 0x1000, scoped, tag = 'input window, operand 8, single buffered']
    #allocation17 [shape = 'u8[131072]{0}', space=vmem, size = 0x20000, scoped, tag = 'output window, operand 0, single buffered']
    #allocation18 [shape = 'u8[65536]{0}', space=vmem, size = 0x10000, scoped, tag = 'output window, operand 1, single buffered']
    #allocation19 [shape = 's32[1]{0}', space=sflag, size = 0x4, scoped, tag = 'scoped memory for vgg19_mask_forward.1']
    #allocation20 [shape = 'u8[32768]{0}', space=vmem, size = 0x8000, scoped, tag = 'output window, operand 2, single buffered']
    #allocation21 [shape = 'u8[16384]{0}', space=vmem, size = 0x4000, scoped, tag = 'output window, operand 3, single buffered']
    #allocation22 [shape = 's32[1]{0}', space=sflag, size = 0x4, scoped, tag = 'scoped memory for vgg19_mask_forward.1']
    %21 = vsyncpa [#allocation3], 0
    %22 = vsyncpa [#allocation6], 0
    %23 = vsyncpa [#allocation9], 0
    %24 = vsyncpa [#allocation12], 0
    %25 = vsyncpa [#allocation15], 0
    %26 = vsyncpa [#allocation4], 0
    %27 = vsyncpa [#allocation19], 0
    %28 = vsyncpa [#allocation22], 0
    // Predicated region
    $region2: #{vgg19_mask_forward.1} parent=1 // pred_check
      _
    $region3: #{vgg19_mask_forward.1} parent=1 // pred_check_branch
      %30 = sbr.rel (0) target = $region5
    $region4: #{vgg19_mask_forward.1} parent=1 // pred_region
      %s32 = ssub.s32 4096, 4096
      %33 = vsyncadd [#allocation3], %s32
      %s34 = sshll.u32 [#allocation2], 4
      %s35 = int_to_ptr.vmem [resolvable:$true] %s34
      %40 = dma.hbm_to_vmem [thread:$0]  %s0, 4096, %s35, [#allocation3], 128, 128, 8
    $region5: #{vgg19_mask_forward.1} parent=1 // pred_fallthru
      _
    // Predicated region
    $region6: #{vgg19_mask_forward.1} parent=1 // pred_check
      _
    $region7: #{vgg19_mask_forward.1} parent=1 // pred_check_branch
      %42 = sbr.rel (0) target = $region9
    $region8: #{vgg19_mask_forward.1} parent=1 // pred_region
      %s44 = ssub.s32 8192, 8192
      %45 = vsyncadd [#allocation6], %s44
      %s46 = sshll.u32 [#allocation5], 4
      %s47 = int_to_ptr.vmem [resolvable:$true] %s46
      %52 = dma.hbm_to_vmem [thread:$0]  %s1, 8192, %s47, [#allocation6], 256, 256, 16
    $region9: #{vgg19_mask_forward.1} parent=1 // pred_fallthru
      _
    // Predicated region
    $region10: #{vgg19_mask_forward.1} parent=1 // pred_check
      _
    $region11: #{vgg19_mask_forward.1} parent=1 // pred_check_branch
      %54 = sbr.rel (0) target = $region13
    $region12: #{vgg19_mask_forward.1} parent=1 // pred_region
      %s56 = ssub.s32 512, 512
      %57 = vsyncadd [#allocation6], %s56
      %s58 = sshll.u32 [#allocation7], 4
      %s59 = int_to_ptr.vmem [resolvable:$true] %s58
      %64 = dma.hbm_to_vmem [thread:$0]  %s2, 512, %s59, [#allocation6], 128, 128, 8
    $region13: #{vgg19_mask_forward.1} parent=1 // pred_fallthru
      _
    // Predicated region
    $region14: #{vgg19_mask_forward.1} parent=1 // pred_check
      _
    $region15: #{vgg19_mask_forward.1} parent=1 // pred_check_branch
      %66 = sbr.rel (0) target = $region17
    $region16: #{vgg19_mask_forward.1} parent=1 // pred_region
      %s68 = ssub.s32 4096, 4096
      %69 = vsyncadd [#allocation9], %s68
      %s70 = sshll.u32 [#allocation8], 4
      %s71 = int_to_ptr.vmem [resolvable:$true] %s70
      %76 = dma.hbm_to_vmem [thread:$0]  %s3, 4096, %s71, [#allocation9], 256, 256, 16
    $region17: #{vgg19_mask_forward.1} parent=1 // pred_fallthru
      _
    // Predicated region
    $region18: #{vgg19_mask_forward.1} parent=1 // pred_check
      _
    $region19: #{vgg19_mask_forward.1} parent=1 // pred_check_branch
      %78 = sbr.rel (0) target = $region21
    $region20: #{vgg19_mask_forward.1} parent=1 // pred_region
      %s80 = ssub.s32 512, 512
      %81 = vsyncadd [#allocation9], %s80
      %s82 = sshll.u32 [#allocation10], 4
      %s83 = int_to_ptr.vmem [resolvable:$true] %s82
      %88 = dma.hbm_to_vmem [thread:$0]  %s4, 512, %s83, [#allocation9], 128, 128, 8
    $region21: #{vgg19_mask_forward.1} parent=1 // pred_fallthru
      _
    // Predicated region
    $region22: #{vgg19_mask_forward.1} parent=1 // pred_check
      _
    $region23: #{vgg19_mask_forward.1} parent=1 // pred_check_branch
      %90 = sbr.rel (0) target = $region25
    $region24: #{vgg19_mask_forward.1} parent=1 // pred_region
      %s92 = ssub.s32 1024, 1024
      %93 = vsyncadd [#allocation12], %s92
      %s94 = sshll.u32 [#allocation11], 4
      %s95 = int_to_ptr.vmem [resolvable:$true] %s94
      %100 = dma.hbm_to_vmem [thread:$0]  %s5, 1024, %s95, [#allocation12], 128, 128, 8
    $region25: #{vgg19_mask_forward.1} parent=1 // pred_fallthru
      _
    // Predicated region
    $region26: #{vgg19_mask_forward.1} parent=1 // pred_check
      _
    $region27: #{vgg19_mask_forward.1} parent=1 // pred_check_branch
      %102 = sbr.rel (0) target = $region29
    $region28: #{vgg19_mask_forward.1} parent=1 // pred_region
      %s104 = ssub.s32 256, 256
      %105 = vsyncadd [#allocation12], %s104
      %s106 = sshll.u32 [#allocation13], 4
      %s107 = int_to_ptr.vmem [resolvable:$true] %s106
      %112 = dma.hbm_to_vmem [thread:$0]  %s6, 256, %s107, [#allocation12], 128, 128, 8
    $region29: #{vgg19_mask_forward.1} parent=1 // pred_fallthru
      _
    // Predicated region
    $region30: #{vgg19_mask_forward.1} parent=1 // pred_check
      _
    $region31: #{vgg19_mask_forward.1} parent=1 // pred_check_branch
      %114 = sbr.rel (0) target = $region33
    $region32: #{vgg19_mask_forward.1} parent=1 // pred_region
      %s116 = ssub.s32 512, 512
      %117 = vsyncadd [#allocation15], %s116
      %s118 = sshll.u32 [#allocation14], 4
      %s119 = int_to_ptr.vmem [resolvable:$true] %s118
      %124 = dma.hbm_to_vmem [thread:$0]  %s7, 512, %s119, [#allocation15], 128, 128, 8
    $region33: #{vgg19_mask_forward.1} parent=1 // pred_fallthru
      _
    // Predicated region
    $region34: #{vgg19_mask_forward.1} parent=1 // pred_check
      _
    $region35: #{vgg19_mask_forward.1} parent=1 // pred_check_branch
      %126 = sbr.rel (0) target = $region37
    $region36: #{vgg19_mask_forward.1} parent=1 // pred_region
      %s128 = ssub.s32 128, 128
      %129 = vsyncadd [#allocation15], %s128
      %s131 = sshll.u32 [#allocation16], 4
      %s132 = int_to_ptr.vmem [resolvable:$true] %s131
      %134 = dma.hbm_to_vmem [thread:$0]  %s8, 128, %s132, [#allocation15]
    $region37: #{vgg19_mask_forward.1} parent=1 // pred_fallthru
      _
    // Predicated region
    $region38: #{vgg19_mask_forward.1} parent=1 // pred_check
      _
    $region39: #{vgg19_mask_forward.1} parent=1 // pred_check_branch
      %136 = sbr.rel (0) target = $region41
    $region40: #{vgg19_mask_forward.1} parent=1 // pred_region
      _
    $region41: #{vgg19_mask_forward.1} parent=1 // pred_fallthru
      _
    // Predicated region
    $region42: #{vgg19_mask_forward.1} parent=1 // pred_check
      _
    $region43: #{vgg19_mask_forward.1} parent=1 // pred_check_branch
      %138 = sbr.rel (0) target = $region45
    $region44: #{vgg19_mask_forward.1} parent=1 // pred_region
      _
    $region45: #{vgg19_mask_forward.1} parent=1 // pred_fallthru
      _
    // Predicated region
    $region46: #{vgg19_mask_forward.1} parent=1 // pred_check
      _
    $region47: #{vgg19_mask_forward.1} parent=1 // pred_check_branch
      %140 = sbr.rel (0) target = $region49
    $region48: #{vgg19_mask_forward.1} parent=1 // pred_region
      %141 = dma.done [#allocation3], 4096
    $region49: #{vgg19_mask_forward.1} parent=1 // pred_fallthru
      _
    // Predicated region
    $region50: #{vgg19_mask_forward.1} parent=1 // pred_check
      _
    $region51: #{vgg19_mask_forward.1} parent=1 // pred_check_branch
      %143 = sbr.rel (0) target = $region53
    $region52: #{vgg19_mask_forward.1} parent=1 // pred_region
      %144 = dma.done [#allocation6], 8192
    $region53: #{vgg19_mask_forward.1} parent=1 // pred_fallthru
      _
    // Predicated region
    $region54: #{vgg19_mask_forward.1} parent=1 // pred_check
      _
    $region55: #{vgg19_mask_forward.1} parent=1 // pred_check_branch
      %146 = sbr.rel (0) target = $region57
    $region56: #{vgg19_mask_forward.1} parent=1 // pred_region
      %147 = dma.done [#allocation6], 512
    $region57: #{vgg19_mask_forward.1} parent=1 // pred_fallthru
      _
    // Predicated region
    $region58: #{vgg19_mask_forward.1} parent=1 // pred_check
      _
    $region59: #{vgg19_mask_forward.1} parent=1 // pred_check_branch
      %149 = sbr.rel (0) target = $region61
    $region60: #{vgg19_mask_forward.1} parent=1 // pred_region
      %150 = dma.done [#allocation9], 4096
    $region61: #{vgg19_mask_forward.1} parent=1 // pred_fallthru
      _
    // Predicated region
    $region62: #{vgg19_mask_forward.1} parent=1 // pred_check
      _
    $region63: #{vgg19_mask_forward.1} parent=1 // pred_check_branch
      %152 = sbr.rel (0) target = $region65
    $region64: #{vgg19_mask_forward.1} parent=1 // pred_region
      %153 = dma.done [#allocation9], 512
    $region65: #{vgg19_mask_forward.1} parent=1 // pred_fallthru
      _
    // Predicated region
    $region66: #{vgg19_mask_forward.1} parent=1 // pred_check
      _
    $region67: #{vgg19_mask_forward.1} parent=1 // pred_check_branch
      %155 = sbr.rel (0) target = $region69
    $region68: #{vgg19_mask_forward.1} parent=1 // pred_region
      %156 = dma.done [#allocation12], 1024
    $region69: #{vgg19_mask_forward.1} parent=1 // pred_fallthru
      _
    // Predicated region
    $region70: #{vgg19_mask_forward.1} parent=1 // pred_check
      _
    $region71: #{vgg19_mask_forward.1} parent=1 // pred_check_branch
      %158 = sbr.rel (0) target = $region73
    $region72: #{vgg19_mask_forward.1} parent=1 // pred_region
      %159 = dma.done [#allocation12], 256
    $region73: #{vgg19_mask_forward.1} parent=1 // pred_fallthru
      _
    // Predicated region
    $region74: #{vgg19_mask_forward.1} parent=1 // pred_check
      _
    $region75: #{vgg19_mask_forward.1} parent=1 // pred_check_branch
      %161 = sbr.rel (0) target = $region77
    $region76: #{vgg19_mask_forward.1} parent=1 // pred_region
      %162 = dma.done [#allocation15], 512
    $region77: #{vgg19_mask_forward.1} parent=1 // pred_fallthru
      _
    // Predicated region
    $region78: #{vgg19_mask_forward.1} parent=1 // pred_check
      _
    $region79: #{vgg19_mask_forward.1} parent=1 // pred_check_branch
      %164 = sbr.rel (0) target = $region81
    $region80: #{vgg19_mask_forward.1} parent=1 // pred_region
      %165 = dma.done [#allocation15], 128
    $region81: #{vgg19_mask_forward.1} parent=1 // pred_fallthru
      _
    %v166 = vld [vmem:[#allocation2] sm:$0xff]
    %v167 = vld [vmem:[#allocation2 + $0x8] sm:$0xff]
    %v168 = vld [vmem:[#allocation2 + $0x10] sm:$0xff]
    %v169 = vld [vmem:[#allocation2 + $0x18] sm:$0xff]
    %v170 = vld [vmem:[#allocation2 + $0x20] sm:$0xff]
    %v171 = vld [vmem:[#allocation2 + $0x28] sm:$0xff]
    %v172 = vld [vmem:[#allocation2 + $0x30] sm:$0xff]
    %v173 = vld [vmem:[#allocation2 + $0x38] sm:$0xff]
    %v174 = vld [vmem:[#allocation2 + $0x40] sm:$0xff]
    %v175 = vld [vmem:[#allocation2 + $0x48] sm:$0xff]
    %v176 = vld [vmem:[#allocation2 + $0x50] sm:$0xff]
    %v177 = vld [vmem:[#allocation2 + $0x58] sm:$0xff]
    %v178 = vld [vmem:[#allocation2 + $0x60] sm:$0xff]
    %v179 = vld [vmem:[#allocation2 + $0x68] sm:$0xff]
    %v180 = vld [vmem:[#allocation2 + $0x70] sm:$0xff]
    %v181 = vld [vmem:[#allocation2 + $0x78] sm:$0xff]
    %v182 = vld [vmem:[#allocation2 + $0x80] sm:$0xff]
    %v183 = vld [vmem:[#allocation2 + $0x88] sm:$0xff]
    %v184 = vld [vmem:[#allocation2 + $0x90] sm:$0xff]
    %v185 = vld [vmem:[#allocation2 + $0x98] sm:$0xff]
    %v186 = vld [vmem:[#allocation2 + $0xa0] sm:$0xff]
    %v187 = vld [vmem:[#allocation2 + $0xa8] sm:$0xff]
    %v188 = vld [vmem:[#allocation2 + $0xb0] sm:$0xff]
    %v189 = vld [vmem:[#allocation2 + $0xb8] sm:$0xff]
    %v190 = vld [vmem:[#allocation2 + $0xc0] sm:$0xff]
    %v191 = vld [vmem:[#allocation2 + $0xc8] sm:$0xff]
    %v192 = vld [vmem:[#allocation2 + $0xd0] sm:$0xff]
    %v193 = vld [vmem:[#allocation2 + $0xd8] sm:$0xff]
    %v194 = vld [vmem:[#allocation2 + $0xe0] sm:$0xff]
    %v195 = vld [vmem:[#allocation2 + $0xe8] sm:$0xff]
    %v196 = vld [vmem:[#allocation2 + $0xf0] sm:$0xff]
    %v197 = vld [vmem:[#allocation2 + $0xf8] sm:$0xff]
    %v198 = vld [vmem:[#allocation5] sm:$0xff]
    %v199 = vld [vmem:[#allocation5 + $0x8] sm:$0xff]
    %v200 = vld [vmem:[#allocation5 + $0x10] sm:$0xff]
    %v201 = vld [vmem:[#allocation5 + $0x18] sm:$0xff]
    %v202 = vld [vmem:[#allocation5 + $0x20] sm:$0xff]
    %v203 = vld [vmem:[#allocation5 + $0x28] sm:$0xff]
    %v204 = vld [vmem:[#allocation5 + $0x30] sm:$0xff]
    %v205 = vld [vmem:[#allocation5 + $0x38] sm:$0xff]
    %v206 = vld [vmem:[#allocation5 + $0x40] sm:$0xff]
    %v207 = vld [vmem:[#allocation5 + $0x48] sm:$0xff]
    %v208 = vld [vmem:[#allocation5 + $0x50] sm:$0xff]
    %v209 = vld [vmem:[#allocation5 + $0x58] sm:$0xff]
    %v210 = vld [vmem:[#allocation5 + $0x60] sm:$0xff]
    %v211 = vld [vmem:[#allocation5 + $0x68] sm:$0xff]
    %v212 = vld [vmem:[#allocation5 + $0x70] sm:$0xff]
    %v213 = vld [vmem:[#allocation5 + $0x78] sm:$0xff]
    %v214 = vld [vmem:[#allocation5 + $0x80] sm:$0xff]
    %v215 = vld [vmem:[#allocation5 + $0x88] sm:$0xff]
    %v216 = vld [vmem:[#allocation5 + $0x90] sm:$0xff]
    %v217 = vld [vmem:[#allocation5 + $0x98] sm:$0xff]
    %v218 = vld [vmem:[#allocation5 + $0xa0] sm:$0xff]
    %v219 = vld [vmem:[#allocation5 + $0xa8] sm:$0xff]
    %v220 = vld [vmem:[#allocation5 + $0xb0] sm:$0xff]
    %v221 = vld [vmem:[#allocation5 + $0xb8] sm:$0xff]
    %v222 = vld [vmem:[#allocation5 + $0xc0] sm:$0xff]
    %v223 = vld [vmem:[#allocation5 + $0xc8] sm:$0xff]
    %v224 = vld [vmem:[#allocation5 + $0xd0] sm:$0xff]
    %v225 = vld [vmem:[#allocation5 + $0xd8] sm:$0xff]
    %v226 = vld [vmem:[#allocation5 + $0xe0] sm:$0xff]
    %v227 = vld [vmem:[#allocation5 + $0xe8] sm:$0xff]
    %v228 = vld [vmem:[#allocation5 + $0xf0] sm:$0xff]
    %v229 = vld [vmem:[#allocation5 + $0xf8] sm:$0xff]
    %v230 = vld [vmem:[#allocation5 + $0x100] sm:$0xff]
    %v231 = vld [vmem:[#allocation5 + $0x108] sm:$0xff]
    %v232 = vld [vmem:[#allocation5 + $0x110] sm:$0xff]
    %v233 = vld [vmem:[#allocation5 + $0x118] sm:$0xff]
    %v234 = vld [vmem:[#allocation5 + $0x120] sm:$0xff]
    %v235 = vld [vmem:[#allocation5 + $0x128] sm:$0xff]
    %v236 = vld [vmem:[#allocation5 + $0x130] sm:$0xff]
    %v237 = vld [vmem:[#allocation5 + $0x138] sm:$0xff]
    %v238 = vld [vmem:[#allocation5 + $0x140] sm:$0xff]
    %v239 = vld [vmem:[#allocation5 + $0x148] sm:$0xff]
    %v240 = vld [vmem:[#allocation5 + $0x150] sm:$0xff]
    %v241 = vld [vmem:[#allocation5 + $0x158] sm:$0xff]
    %v242 = vld [vmem:[#allocation5 + $0x160] sm:$0xff]
    %v243 = vld [vmem:[#allocation5 + $0x168] sm:$0xff]
    %v244 = vld [vmem:[#allocation5 + $0x170] sm:$0xff]
    %v245 = vld [vmem:[#allocation5 + $0x178] sm:$0xff]
    %v246 = vld [vmem:[#allocation5 + $0x180] sm:$0xff]
    %v247 = vld [vmem:[#allocation5 + $0x188] sm:$0xff]
    %v248 = vld [vmem:[#allocation5 + $0x190] sm:$0xff]
    %v249 = vld [vmem:[#allocation5 + $0x198] sm:$0xff]
    %v250 = vld [vmem:[#allocation5 + $0x1a0] sm:$0xff]
    %v251 = vld [vmem:[#allocation5 + $0x1a8] sm:$0xff]
    %v252 = vld [vmem:[#allocation5 + $0x1b0] sm:$0xff]
    %v253 = vld [vmem:[#allocation5 + $0x1b8] sm:$0xff]
    %v254 = vld [vmem:[#allocation5 + $0x1c0] sm:$0xff]
    %v255 = vld [vmem:[#allocation5 + $0x1c8] sm:$0xff]
    %v256 = vld [vmem:[#allocation5 + $0x1d0] sm:$0xff]
    %v257 = vld [vmem:[#allocation5 + $0x1d8] sm:$0xff]
    %v258 = vld [vmem:[#allocation5 + $0x1e0] sm:$0xff]
    %v259 = vld [vmem:[#allocation5 + $0x1e8] sm:$0xff]
    %v260 = vld [vmem:[#allocation5 + $0x1f0] sm:$0xff]
    %v261 = vld [vmem:[#allocation5 + $0x1f8] sm:$0xff]
    %v262 = vld [vmem:[#allocation7] sm:$0xff]
    %v263 = vld [vmem:[#allocation7 + $0x8] sm:$0xff]
    %v264 = vld [vmem:[#allocation7 + $0x10] sm:$0xff]
    %v265 = vld [vmem:[#allocation7 + $0x18] sm:$0xff]
    %266 = vmatprep.subr.mxu0 0.0
    %267 = vmatpush1.msra.mxu0 %v181
    %268 = vmatprep.subr.mxu0 0.0
    %269 = vmatpush1.msra.mxu0 %v180
    %270 = vmatprep.subr.mxu0 0.0
    %271 = vmatpush1.msra.mxu0 %v179
    %272 = vmatprep.subr.mxu0 0.0
    %273 = vmatpush1.msra.mxu0 %v178
    %274 = vmatprep.subr.mxu0 0.0
    %275 = vmatpush1.msra.mxu0 %v177
    %276 = vmatprep.subr.mxu0 0.0
    %277 = vmatpush1.msra.mxu0 %v176
    %278 = vmatprep.subr.mxu0 0.0
    %279 = vmatpush1.msra.mxu0 %v175
    %280 = vmatprep.subr.mxu0 0.0
    %281 = vmatpush1.msra.mxu0 %v174
    %282 = vmatprep.subr.mxu0 0.0
    %283 = vmatpush1.msra.mxu0 %v173
    %284 = vmatprep.subr.mxu0 0.0
    %285 = vmatpush1.msra.mxu0 %v172
    %286 = vmatprep.subr.mxu0 0.0
    %287 = vmatpush1.msra.mxu0 %v171
    %288 = vmatprep.subr.mxu0 0.0
    %289 = vmatpush1.msra.mxu0 %v170
    %290 = vmatprep.subr.mxu0 0.0
    %291 = vmatpush1.msra.mxu0 %v169
    %292 = vmatprep.subr.mxu0 0.0
    %293 = vmatpush1.msra.mxu0 %v168
    %294 = vmatprep.subr.mxu0 0.0
    %295 = vmatpush1.msra.mxu0 %v167
    %296 = vmatprep.subr.mxu0 0.0
    %297 = vmatpush1.msra.mxu0 %v166
    %298 = vmatprep.subr.mxu0 0.0
    %299 = vmatpush2.msra.mxu0 %v197
    %300 = vmatprep.subr.mxu0 0.0
    %301 = vmatpush2.msra.mxu0 %v196
    %302 = vmatprep.subr.mxu0 0.0
    %303 = vmatpush2.msra.mxu0 %v195
    %304 = vmatprep.subr.mxu0 0.0
    %305 = vmatpush2.msra.mxu0 %v194
    %306 = vmatprep.subr.mxu0 0.0
    %307 = vmatpush2.msra.mxu0 %v193
    %308 = vmatprep.subr.mxu0 0.0
    %309 = vmatpush2.msra.mxu0 %v192
    %310 = vmatprep.subr.mxu0 0.0
    %311 = vmatpush2.msra.mxu0 %v191
    %312 = vmatprep.subr.mxu0 0.0
    %313 = vmatpush2.msra.mxu0 %v190
    %314 = vmatprep.subr.mxu0 0.0
    %315 = vmatpush2.msra.mxu0 %v189
    %316 = vmatprep.subr.mxu0 0.0
    %317 = vmatpush2.msra.mxu0 %v188
    %318 = vmatprep.subr.mxu0 0.0
    %319 = vmatpush2.msra.mxu0 %v187
    %320 = vmatprep.subr.mxu0 0.0
    %321 = vmatpush2.msra.mxu0 %v186
    %322 = vmatprep.subr.mxu0 0.0
    %323 = vmatpush2.msra.mxu0 %v185
    %324 = vmatprep.subr.mxu0 0.0
    %325 = vmatpush2.msra.mxu0 %v184
    %326 = vmatprep.subr.mxu0 0.0
    %327 = vmatpush2.msra.mxu0 %v183
    %328 = vmatprep.subr.mxu0 0.0
    %329 = vmatpush2.msra.mxu0 %v182
    %330 = vmatprep.mubr.f32.mxu0 %v199
    %331 = vmatmul.mubr.f32.gmra.mxu0 %v198
    %v332 = vpop.f32.mrf.mxu0
    %v333 = vadd.f32 0.0, %v332
    %v334 = vpop.f32.mrf.mxu0
    %335 = vmatprep.mubr.f32.mxu0 %v201
    %336 = vmatmul.mubr.f32.gmra.mxu0 %v200
    %v337 = vpop.f32.mrf.mxu0
    %v338 = vadd.f32 0.0, %v337
    %v339 = vpop.f32.mrf.mxu0
    %340 = vmatprep.mubr.f32.mxu0 %v203
    %341 = vmatmul.mubr.f32.gmra.mxu0 %v202
    %v342 = vpop.f32.mrf.mxu0
    %v343 = vadd.f32 0.0, %v342
    %v344 = vpop.f32.mrf.mxu0
    %345 = vmatprep.mubr.f32.mxu0 %v205
    %346 = vmatmul.mubr.f32.gmra.mxu0 %v204
    %v347 = vpop.f32.mrf.mxu0
    %v348 = vadd.f32 0.0, %v347
    %v349 = vpop.f32.mrf.mxu0
    %350 = vmatprep.mubr.f32.mxu0 %v207
    %351 = vmatmul.mubr.f32.gmra.mxu0 %v206
    %v352 = vpop.f32.mrf.mxu0
    %v353 = vadd.f32 0.0, %v352
    %v354 = vpop.f32.mrf.mxu0
    %355 = vmatprep.mubr.f32.mxu0 %v209
    %356 = vmatmul.mubr.f32.gmra.mxu0 %v208
    %v357 = vpop.f32.mrf.mxu0
    %v358 = vadd.f32 0.0, %v357
    %v359 = vpop.f32.mrf.mxu0
    %360 = vmatprep.mubr.f32.mxu0 %v211
    %361 = vmatmul.mubr.f32.gmra.mxu0 %v210
    %v362 = vpop.f32.mrf.mxu0
    %v363 = vadd.f32 0.0, %v362
    %v364 = vpop.f32.mrf.mxu0
    %365 = vmatprep.mubr.f32.mxu0 %v213
    %366 = vmatmul.mubr.f32.gmra.mxu0 %v212
    %v367 = vpop.f32.mrf.mxu0
    %v368 = vadd.f32 0.0, %v367
    %v369 = vpop.f32.mrf.mxu0
    %370 = vmatprep.mubr.f32.mxu0 %v215
    %371 = vmatmul.mubr.f32.gmra.mxu0 %v214
    %v372 = vpop.f32.mrf.mxu0
    %v373 = vadd.f32 0.0, %v372
    %v374 = vpop.f32.mrf.mxu0
    %375 = vmatprep.mubr.f32.mxu0 %v217
    %376 = vmatmul.mubr.f32.gmra.mxu0 %v216
    %v377 = vpop.f32.mrf.mxu0
    %v378 = vadd.f32 0.0, %v377
    %v379 = vpop.f32.mrf.mxu0
    %380 = vmatprep.mubr.f32.mxu0 %v219
    %381 = vmatmul.mubr.f32.gmra.mxu0 %v218
    %v382 = vpop.f32.mrf.mxu0
    %v383 = vadd.f32 0.0, %v382
    %v384 = vpop.f32.mrf.mxu0
    %385 = vmatprep.mubr.f32.mxu0 %v221
    %386 = vmatmul.mubr.f32.gmra.mxu0 %v220
    %v387 = vpop.f32.mrf.mxu0
    %v388 = vadd.f32 0.0, %v387
    %v389 = vpop.f32.mrf.mxu0
    %390 = vmatprep.mubr.f32.mxu0 %v223
    %391 = vmatmul.mubr.f32.gmra.mxu0 %v222
    %v392 = vpop.f32.mrf.mxu0
    %v393 = vadd.f32 0.0, %v392
    %v394 = vpop.f32.mrf.mxu0
    %395 = vmatprep.mubr.f32.mxu0 %v225
    %396 = vmatmul.mubr.f32.gmra.mxu0 %v224
    %v397 = vpop.f32.mrf.mxu0
    %v398 = vadd.f32 0.0, %v397
    %v399 = vpop.f32.mrf.mxu0
    %400 = vmatprep.mubr.f32.mxu0 %v227
    %401 = vmatmul.mubr.f32.gmra.mxu0 %v226
    %v402 = vpop.f32.mrf.mxu0
    %v403 = vadd.f32 0.0, %v402
    %v404 = vpop.f32.mrf.mxu0
    %405 = vmatprep.mubr.f32.mxu0 %v229
    %406 = vmatmul.mubr.f32.gmra.mxu0 %v228
    %v407 = vpop.f32.mrf.mxu0
    %v408 = vadd.f32 0.0, %v407
    %v409 = vpop.f32.mrf.mxu0
    %410 = vmatprep.mubr.f32.mxu0 %v231
    %411 = vmatmul.mubr.f32.gmra.mxu0 %v230
    %v412 = vpop.f32.mrf.mxu0
    %v413 = vadd.f32 0.0, %v412
    %v414 = vpop.f32.mrf.mxu0
    %415 = vmatprep.mubr.f32.mxu0 %v233
    %416 = vmatmul.mubr.f32.gmra.mxu0 %v232
    %v417 = vpop.f32.mrf.mxu0
    %v418 = vadd.f32 0.0, %v417
    %v419 = vpop.f32.mrf.mxu0
    %420 = vmatprep.mubr.f32.mxu0 %v235
    %421 = vmatmul.mubr.f32.gmra.mxu0 %v234
    %v422 = vpop.f32.mrf.mxu0
    %v423 = vadd.f32 0.0, %v422
    %v424 = vpop.f32.mrf.mxu0
    %425 = vmatprep.mubr.f32.mxu0 %v237
    %426 = vmatmul.mubr.f32.gmra.mxu0 %v236
    %v427 = vpop.f32.mrf.mxu0
    %v428 = vadd.f32 0.0, %v427
    %v429 = vpop.f32.mrf.mxu0
    %430 = vmatprep.mubr.f32.mxu0 %v239
    %431 = vmatmul.mubr.f32.gmra.mxu0 %v238
    %v432 = vpop.f32.mrf.mxu0
    %v433 = vadd.f32 0.0, %v432
    %v434 = vpop.f32.mrf.mxu0
    %435 = vmatprep.mubr.f32.mxu0 %v241
    %436 = vmatmul.mubr.f32.gmra.mxu0 %v240
    %v437 = vpop.f32.mrf.mxu0
    %v438 = vadd.f32 0.0, %v437
    %v439 = vpop.f32.mrf.mxu0
    %440 = vmatprep.mubr.f32.mxu0 %v243
    %441 = vmatmul.mubr.f32.gmra.mxu0 %v242
    %v442 = vpop.f32.mrf.mxu0
    %v443 = vadd.f32 0.0, %v442
    %v444 = vpop.f32.mrf.mxu0
    %445 = vmatprep.mubr.f32.mxu0 %v245
    %446 = vmatmul.mubr.f32.gmra.mxu0 %v244
    %v447 = vpop.f32.mrf.mxu0
    %v448 = vadd.f32 0.0, %v447
    %v449 = vpop.f32.mrf.mxu0
    %450 = vmatprep.mubr.f32.mxu0 %v247
    %451 = vmatmul.mubr.f32.gmra.mxu0 %v246
    %v452 = vpop.f32.mrf.mxu0
    %v453 = vadd.f32 0.0, %v452
    %v454 = vpop.f32.mrf.mxu0
    %455 = vmatprep.mubr.f32.mxu0 %v249
    %456 = vmatmul.mubr.f32.gmra.mxu0 %v248
    %v457 = vpop.f32.mrf.mxu0
    %v458 = vadd.f32 0.0, %v457
    %v459 = vpop.f32.mrf.mxu0
    %460 = vmatprep.mubr.f32.mxu0 %v251
    %461 = vmatmul.mubr.f32.gmra.mxu0 %v250
    %v462 = vpop.f32.mrf.mxu0
    %v463 = vadd.f32 0.0, %v462
    %v464 = vpop.f32.mrf.mxu0
    %465 = vmatprep.mubr.f32.mxu0 %v253
    %466 = vmatmul.mubr.f32.gmra.mxu0 %v252
    %v467 = vpop.f32.mrf.mxu0
    %v468 = vadd.f32 0.0, %v467
    %v469 = vpop.f32.mrf.mxu0
    %470 = vmatprep.mubr.f32.mxu0 %v255
    %471 = vmatmul.mubr.f32.gmra.mxu0 %v254
    %v472 = vpop.f32.mrf.mxu0
    %v473 = vadd.f32 0.0, %v472
    %v474 = vpop.f32.mrf.mxu0
    %475 = vmatprep.mubr.f32.mxu0 %v257
    %476 = vmatmul.mubr.f32.gmra.mxu0 %v256
    %v477 = vpop.f32.mrf.mxu0
    %v478 = vadd.f32 0.0, %v477
    %v479 = vpop.f32.mrf.mxu0
    %480 = vmatprep.mubr.f32.mxu0 %v259
    %481 = vmatmul.mubr.f32.gmra.mxu0 %v258
    %v482 = vpop.f32.mrf.mxu0
    %v483 = vadd.f32 0.0, %v482
    %v484 = vpop.f32.mrf.mxu0
    %485 = vmatprep.mubr.f32.mxu0 %v261
    %486 = vmatmul.mubr.f32.gmra.mxu0 %v260
    %v487 = vpop.f32.mrf.mxu0
    %v488 = vadd.f32 0.0, %v487
    %v489 = vpop.f32.mrf.mxu0
    %490 = vdwg.mxu0
    %vm491 = vcmask 261120
    %v493 = vsel %vm491, %v333, 0
    %v496 = vsel %vm491, %v338, 0
    %v499 = vsel %vm491, %v343, 0
    %v502 = vsel %vm491, %v348, 0
    %v505 = vsel %vm491, %v353, 0
    %v508 = vsel %vm491, %v358, 0
    %v511 = vsel %vm491, %v363, 0
    %v514 = vsel %vm491, %v368, 0
    %v517 = vsel %vm491, %v373, 0
    %v520 = vsel %vm491, %v378, 0
    %v523 = vsel %vm491, %v383, 0
    %v526 = vsel %vm491, %v388, 0
    %v529 = vsel %vm491, %v393, 0
    %v532 = vsel %vm491, %v398, 0
    %v535 = vsel %vm491, %v403, 0
    %v538 = vsel %vm491, %v408, 0
    %v541 = vsel %vm491, %v413, 0
    %v544 = vsel %vm491, %v418, 0
    %v547 = vsel %vm491, %v423, 0
    %v550 = vsel %vm491, %v428, 0
    %v553 = vsel %vm491, %v433, 0
    %v556 = vsel %vm491, %v438, 0
    %v559 = vsel %vm491, %v443, 0
    %v562 = vsel %vm491, %v448, 0
    %v565 = vsel %vm491, %v453, 0
    %v568 = vsel %vm491, %v458, 0
    %v571 = vsel %vm491, %v463, 0
    %v574 = vsel %vm491, %v468, 0
    %v577 = vsel %vm491, %v473, 0
    %v580 = vsel %vm491, %v478, 0
    %v583 = vsel %vm491, %v483, 0
    %v586 = vsel %vm491, %v488, 0
    %588 = vmatprep.subr.mxu0 0.0
    %589 = vmatpush1.msra.mxu0 0.0
    %590 = vmatprep.subr.mxu0 0.0
    %591 = vmatpush1.msra.mxu0 0.0
    %592 = vmatprep.subr.mxu0 0.0
    %593 = vmatpush1.msra.mxu0 0.0
    %594 = vmatprep.subr.mxu0 0.0
    %595 = vmatpush1.msra.mxu0 0.0
    %596 = vmatprep.subr.mxu0 0.0
    %597 = vmatpush1.msra.mxu0 0.0
    %598 = vmatprep.subr.mxu0 0.0
    %599 = vmatpush1.msra.mxu0 0.0
    %600 = vmatprep.subr.mxu0 0.0
    %601 = vmatpush1.msra.mxu0 0.0
    %602 = vmatprep.subr.mxu0 0.0
    %603 = vmatpush1.msra.mxu0 0.0
    %604 = vmatprep.subr.mxu0 0.0
    %605 = vmatpush1.msra.mxu0 0.0
    %606 = vmatprep.subr.mxu0 0.0
    %607 = vmatpush1.msra.mxu0 0.0
    %608 = vmatprep.subr.mxu0 0.0
    %609 = vmatpush1.msra.mxu0 0.0
    %610 = vmatprep.subr.mxu0 0.0
    %611 = vmatpush1.msra.mxu0 0.0
    %612 = vmatprep.subr.mxu0 0.0
    %613 = vmatpush1.msra.mxu0 %v265
    %614 = vmatprep.subr.mxu0 0.0
    %615 = vmatpush1.msra.mxu0 %v264
    %616 = vmatprep.subr.mxu0 0.0
    %617 = vmatpush1.msra.mxu0 %v263
    %618 = vmatprep.subr.mxu0 0.0
    %619 = vmatpush1.msra.mxu0 %v262
    %620 = vmatprep.subr.mxu0 0.0
    %621 = vmatpush2.msra.mxu0 0.0
    %622 = vmatprep.subr.mxu0 0.0
    %623 = vmatpush2.msra.mxu0 0.0
    %624 = vmatprep.subr.mxu0 0.0
    %625 = vmatpush2.msra.mxu0 0.0
    %626 = vmatprep.subr.mxu0 0.0
    %627 = vmatpush2.msra.mxu0 0.0
    %628 = vmatprep.subr.mxu0 0.0
    %629 = vmatpush2.msra.mxu0 0.0
    %630 = vmatprep.subr.mxu0 0.0
    %631 = vmatpush2.msra.mxu0 0.0
    %632 = vmatprep.subr.mxu0 0.0
    %633 = vmatpush2.msra.mxu0 0.0
    %634 = vmatprep.subr.mxu0 0.0
    %635 = vmatpush2.msra.mxu0 0.0
    %636 = vmatprep.subr.mxu0 0.0
    %637 = vmatpush2.msra.mxu0 0.0
    %638 = vmatprep.subr.mxu0 0.0
    %639 = vmatpush2.msra.mxu0 0.0
    %640 = vmatprep.subr.mxu0 0.0
    %641 = vmatpush2.msra.mxu0 0.0
    %642 = vmatprep.subr.mxu0 0.0
    %643 = vmatpush2.msra.mxu0 0.0
    %644 = vmatprep.subr.mxu0 0.0
    %645 = vmatpush2.msra.mxu0 0.0
    %646 = vmatprep.subr.mxu0 0.0
    %647 = vmatpush2.msra.mxu0 0.0
    %648 = vmatprep.subr.mxu0 0.0
    %649 = vmatpush2.msra.mxu0 0.0
    %650 = vmatprep.subr.mxu0 0.0
    %651 = vmatpush2.msra.mxu0 0.0
    %652 = vmatprep.mubr.f32.mxu0 0.0
    %653 = vmatmul.mubr.f32.gmra.mxu0 %v493
    %v654 = vpop.f32.mrf.mxu0
    %v655 = vadd.f32 0.0, %v654
    %v656 = vpop.f32.mrf.mxu0
    %657 = vmatprep.mubr.f32.mxu0 0.0
    %658 = vmatmul.mubr.f32.gmra.mxu0 %v496
    %v659 = vpop.f32.mrf.mxu0
    %v660 = vadd.f32 0.0, %v659
    %v661 = vpop.f32.mrf.mxu0
    %662 = vmatprep.mubr.f32.mxu0 0.0
    %663 = vmatmul.mubr.f32.gmra.mxu0 %v499
    %v664 = vpop.f32.mrf.mxu0
    %v665 = vadd.f32 0.0, %v664
    %v666 = vpop.f32.mrf.mxu0
    %667 = vmatprep.mubr.f32.mxu0 0.0
    %668 = vmatmul.mubr.f32.gmra.mxu0 %v502
    %v669 = vpop.f32.mrf.mxu0
    %v670 = vadd.f32 0.0, %v669
    %v671 = vpop.f32.mrf.mxu0
    %672 = vmatprep.mubr.f32.mxu0 0.0
    %673 = vmatmul.mubr.f32.gmra.mxu0 %v505
    %v674 = vpop.f32.mrf.mxu0
    %v675 = vadd.f32 0.0, %v674
    %v676 = vpop.f32.mrf.mxu0
    %677 = vmatprep.mubr.f32.mxu0 0.0
    %678 = vmatmul.mubr.f32.gmra.mxu0 %v508
    %v679 = vpop.f32.mrf.mxu0
    %v680 = vadd.f32 0.0, %v679
    %v681 = vpop.f32.mrf.mxu0
    %682 = vmatprep.mubr.f32.mxu0 0.0
    %683 = vmatmul.mubr.f32.gmra.mxu0 %v511
    %v684 = vpop.f32.mrf.mxu0
    %v685 = vadd.f32 0.0, %v684
    %v686 = vpop.f32.mrf.mxu0
    %687 = vmatprep.mubr.f32.mxu0 0.0
    %688 = vmatmul.mubr.f32.gmra.mxu0 %v514
    %v689 = vpop.f32.mrf.mxu0
    %v690 = vadd.f32 0.0, %v689
    %v691 = vpop.f32.mrf.mxu0
    %692 = vmatprep.mubr.f32.mxu0 0.0
    %693 = vmatmul.mubr.f32.gmra.mxu0 %v517
    %v694 = vpop.f32.mrf.mxu0
    %v695 = vadd.f32 0.0, %v694
    %v696 = vpop.f32.mrf.mxu0
    %697 = vmatprep.mubr.f32.mxu0 0.0
    %698 = vmatmul.mubr.f32.gmra.mxu0 %v520
    %v699 = vpop.f32.mrf.mxu0
    %v700 = vadd.f32 0.0, %v699
    %v701 = vpop.f32.mrf.mxu0
    %702 = vmatprep.mubr.f32.mxu0 0.0
    %703 = vmatmul.mubr.f32.gmra.mxu0 %v523
    %v704 = vpop.f32.mrf.mxu0
    %v705 = vadd.f32 0.0, %v704
    %v706 = vpop.f32.mrf.mxu0
    %707 = vmatprep.mubr.f32.mxu0 0.0
    %708 = vmatmul.mubr.f32.gmra.mxu0 %v526
    %v709 = vpop.f32.mrf.mxu0
    %v710 = vadd.f32 0.0, %v709
    %v711 = vpop.f32.mrf.mxu0
    %712 = vmatprep.mubr.f32.mxu0 0.0
    %713 = vmatmul.mubr.f32.gmra.mxu0 %v529
    %v714 = vpop.f32.mrf.mxu0
    %v715 = vadd.f32 0.0, %v714
    %v716 = vpop.f32.mrf.mxu0
    %717 = vmatprep.mubr.f32.mxu0 0.0
    %718 = vmatmul.mubr.f32.gmra.mxu0 %v532
    %v719 = vpop.f32.mrf.mxu0
    %v720 = vadd.f32 0.0, %v719
    %v721 = vpop.f32.mrf.mxu0
    %722 = vmatprep.mubr.f32.mxu0 0.0
    %723 = vmatmul.mubr.f32.gmra.mxu0 %v535
    %v724 = vpop.f32.mrf.mxu0
    %v725 = vadd.f32 0.0, %v724
    %v726 = vpop.f32.mrf.mxu0
    %727 = vmatprep.mubr.f32.mxu0 0.0
    %728 = vmatmul.mubr.f32.gmra.mxu0 %v538
    %v729 = vpop.f32.mrf.mxu0
    %v730 = vadd.f32 0.0, %v729
    %v731 = vpop.f32.mrf.mxu0
    %732 = vmatprep.mubr.f32.mxu0 0.0
    %733 = vmatmul.mubr.f32.gmra.mxu0 %v541
    %v734 = vpop.f32.mrf.mxu0
    %v735 = vadd.f32 0.0, %v734
    %v736 = vpop.f32.mrf.mxu0
    %737 = vmatprep.mubr.f32.mxu0 0.0
    %738 = vmatmul.mubr.f32.gmra.mxu0 %v544
    %v739 = vpop.f32.mrf.mxu0
    %v740 = vadd.f32 0.0, %v739
    %v741 = vpop.f32.mrf.mxu0
    %742 = vmatprep.mubr.f32.mxu0 0.0
    %743 = vmatmul.mubr.f32.gmra.mxu0 %v547
    %v744 = vpop.f32.mrf.mxu0
    %v745 = vadd.f32 0.0, %v744
    %v746 = vpop.f32.mrf.mxu0
    %747 = vmatprep.mubr.f32.mxu0 0.0
    %748 = vmatmul.mubr.f32.gmra.mxu0 %v550
    %v749 = vpop.f32.mrf.mxu0
    %v750 = vadd.f32 0.0, %v749
    %v751 = vpop.f32.mrf.mxu0
    %752 = vmatprep.mubr.f32.mxu0 0.0
    %753 = vmatmul.mubr.f32.gmra.mxu0 %v553
    %v754 = vpop.f32.mrf.mxu0
    %v755 = vadd.f32 0.0, %v754
    %v756 = vpop.f32.mrf.mxu0
    %757 = vmatprep.mubr.f32.mxu0 0.0
    %758 = vmatmul.mubr.f32.gmra.mxu0 %v556
    %v759 = vpop.f32.mrf.mxu0
    %v760 = vadd.f32 0.0, %v759
    %v761 = vpop.f32.mrf.mxu0
    %762 = vmatprep.mubr.f32.mxu0 0.0
    %763 = vmatmul.mubr.f32.gmra.mxu0 %v559
    %v764 = vpop.f32.mrf.mxu0
    %v765 = vadd.f32 0.0, %v764
    %v766 = vpop.f32.mrf.mxu0
    %767 = vmatprep.mubr.f32.mxu0 0.0
    %768 = vmatmul.mubr.f32.gmra.mxu0 %v562
    %v769 = vpop.f32.mrf.mxu0
    %v770 = vadd.f32 0.0, %v769
    %v771 = vpop.f32.mrf.mxu0
    %772 = vmatprep.mubr.f32.mxu0 0.0
    %773 = vmatmul.mubr.f32.gmra.mxu0 %v565
    %v774 = vpop.f32.mrf.mxu0
    %v775 = vadd.f32 0.0, %v774
    %v776 = vpop.f32.mrf.mxu0
    %777 = vmatprep.mubr.f32.mxu0 0.0
    %778 = vmatmul.mubr.f32.gmra.mxu0 %v568
    %v779 = vpop.f32.mrf.mxu0
    %v780 = vadd.f32 0.0, %v779
    %v781 = vpop.f32.mrf.mxu0
    %782 = vmatprep.mubr.f32.mxu0 0.0
    %783 = vmatmul.mubr.f32.gmra.mxu0 %v571
    %v784 = vpop.f32.mrf.mxu0
    %v785 = vadd.f32 0.0, %v784
    %v786 = vpop.f32.mrf.mxu0
    %787 = vmatprep.mubr.f32.mxu0 0.0
    %788 = vmatmul.mubr.f32.gmra.mxu0 %v574
    %v789 = vpop.f32.mrf.mxu0
    %v790 = vadd.f32 0.0, %v789
    %v791 = vpop.f32.mrf.mxu0
    %792 = vmatprep.mubr.f32.mxu0 0.0
    %793 = vmatmul.mubr.f32.gmra.mxu0 %v577
    %v794 = vpop.f32.mrf.mxu0
    %v795 = vadd.f32 0.0, %v794
    %v796 = vpop.f32.mrf.mxu0
    %797 = vmatprep.mubr.f32.mxu0 0.0
    %798 = vmatmul.mubr.f32.gmra.mxu0 %v580
    %v799 = vpop.f32.mrf.mxu0
    %v800 = vadd.f32 0.0, %v799
    %v801 = vpop.f32.mrf.mxu0
    %802 = vmatprep.mubr.f32.mxu0 0.0
    %803 = vmatmul.mubr.f32.gmra.mxu0 %v583
    %v804 = vpop.f32.mrf.mxu0
    %v805 = vadd.f32 0.0, %v804
    %v806 = vpop.f32.mrf.mxu0
    %807 = vmatprep.mubr.f32.mxu0 0.0
    %808 = vmatmul.mubr.f32.gmra.mxu0 %v586
    %v809 = vpop.f32.mrf.mxu0
    %v810 = vadd.f32 0.0, %v809
    %v811 = vpop.f32.mrf.mxu0
    %812 = vdwg.mxu0
    %813 = vst.msk [vmem:[#allocation17] sm:$0xff] %vm491, %v655
    %814 = vst.msk [vmem:[#allocation17 + $0x8] sm:$0xff] %vm491, %v660
    %815 = vst.msk [vmem:[#allocation17 + $0x10] sm:$0xff] %vm491, %v665
    %816 = vst.msk [vmem:[#allocation17 + $0x18] sm:$0xff] %vm491, %v670
    %817 = vst.msk [vmem:[#allocation17 + $0x20] sm:$0xff] %vm491, %v675
    %818 = vst.msk [vmem:[#allocation17 + $0x28] sm:$0xff] %vm491, %v680
    %819 = vst.msk [vmem:[#allocation17 + $0x30] sm:$0xff] %vm491, %v685
    %820 = vst.msk [vmem:[#allocation17 + $0x38] sm:$0xff] %vm491, %v690
    %821 = vst.msk [vmem:[#allocation17 + $0x40] sm:$0xff] %vm491, %v695
    %822 = vst.msk [vmem:[#allocation17 + $0x48] sm:$0xff] %vm491, %v700
    %823 = vst.msk [vmem:[#allocation17 + $0x50] sm:$0xff] %vm491, %v705
    %824 = vst.msk [vmem:[#allocation17 + $0x58] sm:$0xff] %vm491, %v710
    %825 = vst.msk [vmem:[#allocation17 + $0x60] sm:$0xff] %vm491, %v715
    %826 = vst.msk [vmem:[#allocation17 + $0x68] sm:$0xff] %vm491, %v720
    %827 = vst.msk [vmem:[#allocation17 + $0x70] sm:$0xff] %vm491, %v725
    %828 = vst.msk [vmem:[#allocation17 + $0x78] sm:$0xff] %vm491, %v730
    %829 = vst.msk [vmem:[#allocation17 + $0x80] sm:$0xff] %vm491, %v735
    %830 = vst.msk [vmem:[#allocation17 + $0x88] sm:$0xff] %vm491, %v740
    %831 = vst.msk [vmem:[#allocation17 + $0x90] sm:$0xff] %vm491, %v745
    %832 = vst.msk [vmem:[#allocation17 + $0x98] sm:$0xff] %vm491, %v750
    %833 = vst.msk [vmem:[#allocation17 + $0xa0] sm:$0xff] %vm491, %v755
    %834 = vst.msk [vmem:[#allocation17 + $0xa8] sm:$0xff] %vm491, %v760
    %835 = vst.msk [vmem:[#allocation17 + $0xb0] sm:$0xff] %vm491, %v765
    %836 = vst.msk [vmem:[#allocation17 + $0xb8] sm:$0xff] %vm491, %v770
    %837 = vst.msk [vmem:[#allocation17 + $0xc0] sm:$0xff] %vm491, %v775
    %838 = vst.msk [vmem:[#allocation17 + $0xc8] sm:$0xff] %vm491, %v780
    %839 = vst.msk [vmem:[#allocation17 + $0xd0] sm:$0xff] %vm491, %v785
    %840 = vst.msk [vmem:[#allocation17 + $0xd8] sm:$0xff] %vm491, %v790
    %841 = vst.msk [vmem:[#allocation17 + $0xe0] sm:$0xff] %vm491, %v795
    %842 = vst.msk [vmem:[#allocation17 + $0xe8] sm:$0xff] %vm491, %v800
    %843 = vst.msk [vmem:[#allocation17 + $0xf0] sm:$0xff] %vm491, %v805
    %844 = vst.msk [vmem:[#allocation17 + $0xf8] sm:$0xff] %vm491, %v810
    %v845 = vld [vmem:[#allocation8] sm:$0xff]
    %v846 = vld [vmem:[#allocation8 + $0x8] sm:$0xff]
    %v847 = vld [vmem:[#allocation8 + $0x10] sm:$0xff]
    %v848 = vld [vmem:[#allocation8 + $0x18] sm:$0xff]
    %v849 = vld [vmem:[#allocation8 + $0x20] sm:$0xff]
    %v850 = vld [vmem:[#allocation8 + $0x28] sm:$0xff]
    %v851 = vld [vmem:[#allocation8 + $0x30] sm:$0xff]
    %v852 = vld [vmem:[#allocation8 + $0x38] sm:$0xff]
    %v853 = vld [vmem:[#allocation8 + $0x40] sm:$0xff]
    %v854 = vld [vmem:[#allocation8 + $0x48] sm:$0xff]
    %v855 = vld [vmem:[#allocation8 + $0x50] sm:$0xff]
    %v856 = vld [vmem:[#allocation8 + $0x58] sm:$0xff]
    %v857 = vld [vmem:[#allocation8 + $0x60] sm:$0xff]
    %v858 = vld [vmem:[#allocation8 + $0x68] sm:$0xff]
    %v859 = vld [vmem:[#allocation8 + $0x70] sm:$0xff]
    %v860 = vld [vmem:[#allocation8 + $0x78] sm:$0xff]
    %v861 = vld [vmem:[#allocation8 + $0x80] sm:$0xff]
    %v862 = vld [vmem:[#allocation8 + $0x88] sm:$0xff]
    %v863 = vld [vmem:[#allocation8 + $0x90] sm:$0xff]
    %v864 = vld [vmem:[#allocation8 + $0x98] sm:$0xff]
    %v865 = vld [vmem:[#allocation8 + $0xa0] sm:$0xff]
    %v866 = vld [vmem:[#allocation8 + $0xa8] sm:$0xff]
    %v867 = vld [vmem:[#allocation8 + $0xb0] sm:$0xff]
    %v868 = vld [vmem:[#allocation8 + $0xb8] sm:$0xff]
    %v869 = vld [vmem:[#allocation8 + $0xc0] sm:$0xff]
    %v870 = vld [vmem:[#allocation8 + $0xc8] sm:$0xff]
    %v871 = vld [vmem:[#allocation8 + $0xd0] sm:$0xff]
    %v872 = vld [vmem:[#allocation8 + $0xd8] sm:$0xff]
    %v873 = vld [vmem:[#allocation8 + $0xe0] sm:$0xff]
    %v874 = vld [vmem:[#allocation8 + $0xe8] sm:$0xff]
    %v875 = vld [vmem:[#allocation8 + $0xf0] sm:$0xff]
    %v876 = vld [vmem:[#allocation8 + $0xf8] sm:$0xff]
    %v877 = vld [vmem:[#allocation10] sm:$0xff]
    %v878 = vld [vmem:[#allocation10 + $0x8] sm:$0xff]
    %v879 = vld [vmem:[#allocation10 + $0x10] sm:$0xff]
    %v880 = vld [vmem:[#allocation10 + $0x18] sm:$0xff]
    %881 = vmatprep.subr.mxu0 0.0
    %882 = vmatpush1.msra.mxu0 %v730
    %883 = vmatprep.subr.mxu0 0.0
    %884 = vmatpush1.msra.mxu0 %v725
    %885 = vmatprep.subr.mxu0 0.0
    %886 = vmatpush1.msra.mxu0 %v720
    %887 = vmatprep.subr.mxu0 0.0
    %888 = vmatpush1.msra.mxu0 %v715
    %889 = vmatprep.subr.mxu0 0.0
    %890 = vmatpush1.msra.mxu0 %v710
    %891 = vmatprep.subr.mxu0 0.0
    %892 = vmatpush1.msra.mxu0 %v705
    %893 = vmatprep.subr.mxu0 0.0
    %894 = vmatpush1.msra.mxu0 %v700
    %895 = vmatprep.subr.mxu0 0.0
    %896 = vmatpush1.msra.mxu0 %v695
    %897 = vmatprep.subr.mxu0 0.0
    %898 = vmatpush1.msra.mxu0 %v690
    %899 = vmatprep.subr.mxu0 0.0
    %900 = vmatpush1.msra.mxu0 %v685
    %901 = vmatprep.subr.mxu0 0.0
    %902 = vmatpush1.msra.mxu0 %v680
    %903 = vmatprep.subr.mxu0 0.0
    %904 = vmatpush1.msra.mxu0 %v675
    %905 = vmatprep.subr.mxu0 0.0
    %906 = vmatpush1.msra.mxu0 %v670
    %907 = vmatprep.subr.mxu0 0.0
    %908 = vmatpush1.msra.mxu0 %v665
    %909 = vmatprep.subr.mxu0 0.0
    %910 = vmatpush1.msra.mxu0 %v660
    %911 = vmatprep.subr.mxu0 0.0
    %912 = vmatpush1.msra.mxu0 %v655
    %913 = vmatprep.subr.mxu0 0.0
    %914 = vmatpush2.msra.mxu0 %v810
    %915 = vmatprep.subr.mxu0 0.0
    %916 = vmatpush2.msra.mxu0 %v805
    %917 = vmatprep.subr.mxu0 0.0
    %918 = vmatpush2.msra.mxu0 %v800
    %919 = vmatprep.subr.mxu0 0.0
    %920 = vmatpush2.msra.mxu0 %v795
    %921 = vmatprep.subr.mxu0 0.0
    %922 = vmatpush2.msra.mxu0 %v790
    %923 = vmatprep.subr.mxu0 0.0
    %924 = vmatpush2.msra.mxu0 %v785
    %925 = vmatprep.subr.mxu0 0.0
    %926 = vmatpush2.msra.mxu0 %v780
    %927 = vmatprep.subr.mxu0 0.0
    %928 = vmatpush2.msra.mxu0 %v775
    %929 = vmatprep.subr.mxu0 0.0
    %930 = vmatpush2.msra.mxu0 %v770
    %931 = vmatprep.subr.mxu0 0.0
    %932 = vmatpush2.msra.mxu0 %v765
    %933 = vmatprep.subr.mxu0 0.0
    %934 = vmatpush2.msra.mxu0 %v760
    %935 = vmatprep.subr.mxu0 0.0
    %936 = vmatpush2.msra.mxu0 %v755
    %937 = vmatprep.subr.mxu0 0.0
    %938 = vmatpush2.msra.mxu0 %v750
    %939 = vmatprep.subr.mxu0 0.0
    %940 = vmatpush2.msra.mxu0 %v745
    %941 = vmatprep.subr.mxu0 0.0
    %942 = vmatpush2.msra.mxu0 %v740
    %943 = vmatprep.subr.mxu0 0.0
    %944 = vmatpush2.msra.mxu0 %v735
    %945 = vmatprep.mubr.f32.mxu0 %v846
    %946 = vmatmul.mubr.f32.gmra.mxu0 %v845
    %v947 = vpop.f32.mrf.mxu0
    %v948 = vadd.f32 0.0, %v947
    %v949 = vpop.f32.mrf.mxu0
    %950 = vmatprep.mubr.f32.mxu0 %v848
    %951 = vmatmul.mubr.f32.gmra.mxu0 %v847
    %v952 = vpop.f32.mrf.mxu0
    %v953 = vadd.f32 0.0, %v952
    %v954 = vpop.f32.mrf.mxu0
    %955 = vmatprep.mubr.f32.mxu0 %v850
    %956 = vmatmul.mubr.f32.gmra.mxu0 %v849
    %v957 = vpop.f32.mrf.mxu0
    %v958 = vadd.f32 0.0, %v957
    %v959 = vpop.f32.mrf.mxu0
    %960 = vmatprep.mubr.f32.mxu0 %v852
    %961 = vmatmul.mubr.f32.gmra.mxu0 %v851
    %v962 = vpop.f32.mrf.mxu0
    %v963 = vadd.f32 0.0, %v962
    %v964 = vpop.f32.mrf.mxu0
    %965 = vmatprep.mubr.f32.mxu0 %v854
    %966 = vmatmul.mubr.f32.gmra.mxu0 %v853
    %v967 = vpop.f32.mrf.mxu0
    %v968 = vadd.f32 0.0, %v967
    %v969 = vpop.f32.mrf.mxu0
    %970 = vmatprep.mubr.f32.mxu0 %v856
    %971 = vmatmul.mubr.f32.gmra.mxu0 %v855
    %v972 = vpop.f32.mrf.mxu0
    %v973 = vadd.f32 0.0, %v972
    %v974 = vpop.f32.mrf.mxu0
    %975 = vmatprep.mubr.f32.mxu0 %v858
    %976 = vmatmul.mubr.f32.gmra.mxu0 %v857
    %v977 = vpop.f32.mrf.mxu0
    %v978 = vadd.f32 0.0, %v977
    %v979 = vpop.f32.mrf.mxu0
    %980 = vmatprep.mubr.f32.mxu0 %v860
    %981 = vmatmul.mubr.f32.gmra.mxu0 %v859
    %v982 = vpop.f32.mrf.mxu0
    %v983 = vadd.f32 0.0, %v982
    %v984 = vpop.f32.mrf.mxu0
    %985 = vmatprep.mubr.f32.mxu0 %v862
    %986 = vmatmul.mubr.f32.gmra.mxu0 %v861
    %v987 = vpop.f32.mrf.mxu0
    %v988 = vadd.f32 0.0, %v987
    %v989 = vpop.f32.mrf.mxu0
    %990 = vmatprep.mubr.f32.mxu0 %v864
    %991 = vmatmul.mubr.f32.gmra.mxu0 %v863
    %v992 = vpop.f32.mrf.mxu0
    %v993 = vadd.f32 0.0, %v992
    %v994 = vpop.f32.mrf.mxu0
    %995 = vmatprep.mubr.f32.mxu0 %v866
    %996 = vmatmul.mubr.f32.gmra.mxu0 %v865
    %v997 = vpop.f32.mrf.mxu0
    %v998 = vadd.f32 0.0, %v997
    %v999 = vpop.f32.mrf.mxu0
    %1000 = vmatprep.mubr.f32.mxu0 %v868
    %1001 = vmatmul.mubr.f32.gmra.mxu0 %v867
    %v1002 = vpop.f32.mrf.mxu0
    %v1003 = vadd.f32 0.0, %v1002
    %v1004 = vpop.f32.mrf.mxu0
    %1005 = vmatprep.mubr.f32.mxu0 %v870
    %1006 = vmatmul.mubr.f32.gmra.mxu0 %v869
    %v1007 = vpop.f32.mrf.mxu0
    %v1008 = vadd.f32 0.0, %v1007
    %v1009 = vpop.f32.mrf.mxu0
    %1010 = vmatprep.mubr.f32.mxu0 %v872
    %1011 = vmatmul.mubr.f32.gmra.mxu0 %v871
    %v1012 = vpop.f32.mrf.mxu0
    %v1013 = vadd.f32 0.0, %v1012
    %v1014 = vpop.f32.mrf.mxu0
    %1015 = vmatprep.mubr.f32.mxu0 %v874
    %1016 = vmatmul.mubr.f32.gmra.mxu0 %v873
    %v1017 = vpop.f32.mrf.mxu0
    %v1018 = vadd.f32 0.0, %v1017
    %v1019 = vpop.f32.mrf.mxu0
    %1020 = vmatprep.mubr.f32.mxu0 %v876
    %1021 = vmatmul.mubr.f32.gmra.mxu0 %v875
    %v1022 = vpop.f32.mrf.mxu0
    %v1023 = vadd.f32 0.0, %v1022
    %v1024 = vpop.f32.mrf.mxu0
    %1025 = vdwg.mxu0
    %v1027 = vsel %vm491, %v948, 0
    %v1030 = vsel %vm491, %v953, 0
    %v1033 = vsel %vm491, %v958, 0
    %v1036 = vsel %vm491, %v963, 0
    %v1039 = vsel %vm491, %v968, 0
    %v1042 = vsel %vm491, %v973, 0
    %v1045 = vsel %vm491, %v978, 0
    %v1048 = vsel %vm491, %v983, 0
    %v1051 = vsel %vm491, %v988, 0
    %v1054 = vsel %vm491, %v993, 0
    %v1057 = vsel %vm491, %v998, 0
    %v1060 = vsel %vm491, %v1003, 0
    %v1063 = vsel %vm491, %v1008, 0
    %v1066 = vsel %vm491, %v1013, 0
    %v1069 = vsel %vm491, %v1018, 0
    %v1072 = vsel %vm491, %v1023, 0
    %1074 = vmatprep.subr.mxu0 0.0
    %1075 = vmatpush1.msra.mxu0 0.0
    %1076 = vmatprep.subr.mxu0 0.0
    %1077 = vmatpush1.msra.mxu0 0.0
    %1078 = vmatprep.subr.mxu0 0.0
    %1079 = vmatpush1.msra.mxu0 0.0
    %1080 = vmatprep.subr.mxu0 0.0
    %1081 = vmatpush1.msra.mxu0 0.0
    %1082 = vmatprep.subr.mxu0 0.0
    %1083 = vmatpush1.msra.mxu0 0.0
    %1084 = vmatprep.subr.mxu0 0.0
    %1085 = vmatpush1.msra.mxu0 0.0
    %1086 = vmatprep.subr.mxu0 0.0
    %1087 = vmatpush1.msra.mxu0 0.0
    %1088 = vmatprep.subr.mxu0 0.0
    %1089 = vmatpush1.msra.mxu0 0.0
    %1090 = vmatprep.subr.mxu0 0.0
    %1091 = vmatpush1.msra.mxu0 0.0
    %1092 = vmatprep.subr.mxu0 0.0
    %1093 = vmatpush1.msra.mxu0 0.0
    %1094 = vmatprep.subr.mxu0 0.0
    %1095 = vmatpush1.msra.mxu0 0.0
    %1096 = vmatprep.subr.mxu0 0.0
    %1097 = vmatpush1.msra.mxu0 0.0
    %1098 = vmatprep.subr.mxu0 0.0
    %1099 = vmatpush1.msra.mxu0 %v880
    %1100 = vmatprep.subr.mxu0 0.0
    %1101 = vmatpush1.msra.mxu0 %v879
    %1102 = vmatprep.subr.mxu0 0.0
    %1103 = vmatpush1.msra.mxu0 %v878
    %1104 = vmatprep.subr.mxu0 0.0
    %1105 = vmatpush1.msra.mxu0 %v877
    %1106 = vmatprep.subr.mxu0 0.0
    %1107 = vmatpush2.msra.mxu0 0.0
    %1108 = vmatprep.subr.mxu0 0.0
    %1109 = vmatpush2.msra.mxu0 0.0
    %1110 = vmatprep.subr.mxu0 0.0
    %1111 = vmatpush2.msra.mxu0 0.0
    %1112 = vmatprep.subr.mxu0 0.0
    %1113 = vmatpush2.msra.mxu0 0.0
    %1114 = vmatprep.subr.mxu0 0.0
    %1115 = vmatpush2.msra.mxu0 0.0
    %1116 = vmatprep.subr.mxu0 0.0
    %1117 = vmatpush2.msra.mxu0 0.0
    %1118 = vmatprep.subr.mxu0 0.0
    %1119 = vmatpush2.msra.mxu0 0.0
    %1120 = vmatprep.subr.mxu0 0.0
    %1121 = vmatpush2.msra.mxu0 0.0
    %1122 = vmatprep.subr.mxu0 0.0
    %1123 = vmatpush2.msra.mxu0 0.0
    %1124 = vmatprep.subr.mxu0 0.0
    %1125 = vmatpush2.msra.mxu0 0.0
    %1126 = vmatprep.subr.mxu0 0.0
    %1127 = vmatpush2.msra.mxu0 0.0
    %1128 = vmatprep.subr.mxu0 0.0
    %1129 = vmatpush2.msra.mxu0 0.0
    %1130 = vmatprep.subr.mxu0 0.0
    %1131 = vmatpush2.msra.mxu0 0.0
    %1132 = vmatprep.subr.mxu0 0.0
    %1133 = vmatpush2.msra.mxu0 0.0
    %1134 = vmatprep.subr.mxu0 0.0
    %1135 = vmatpush2.msra.mxu0 0.0
    %1136 = vmatprep.subr.mxu0 0.0
    %1137 = vmatpush2.msra.mxu0 0.0
    %1138 = vmatprep.mubr.f32.mxu0 0.0
    %1139 = vmatmul.mubr.f32.gmra.mxu0 %v1027
    %v1140 = vpop.f32.mrf.mxu0
    %v1141 = vadd.f32 0.0, %v1140
    %v1142 = vpop.f32.mrf.mxu0
    %1143 = vmatprep.mubr.f32.mxu0 0.0
    %1144 = vmatmul.mubr.f32.gmra.mxu0 %v1030
    %v1145 = vpop.f32.mrf.mxu0
    %v1146 = vadd.f32 0.0, %v1145
    %v1147 = vpop.f32.mrf.mxu0
    %1148 = vmatprep.mubr.f32.mxu0 0.0
    %1149 = vmatmul.mubr.f32.gmra.mxu0 %v1033
    %v1150 = vpop.f32.mrf.mxu0
    %v1151 = vadd.f32 0.0, %v1150
    %v1152 = vpop.f32.mrf.mxu0
    %1153 = vmatprep.mubr.f32.mxu0 0.0
    %1154 = vmatmul.mubr.f32.gmra.mxu0 %v1036
    %v1155 = vpop.f32.mrf.mxu0
    %v1156 = vadd.f32 0.0, %v1155
    %v1157 = vpop.f32.mrf.mxu0
    %1158 = vmatprep.mubr.f32.mxu0 0.0
    %1159 = vmatmul.mubr.f32.gmra.mxu0 %v1039
    %v1160 = vpop.f32.mrf.mxu0
    %v1161 = vadd.f32 0.0, %v1160
    %v1162 = vpop.f32.mrf.mxu0
    %1163 = vmatprep.mubr.f32.mxu0 0.0
    %1164 = vmatmul.mubr.f32.gmra.mxu0 %v1042
    %v1165 = vpop.f32.mrf.mxu0
    %v1166 = vadd.f32 0.0, %v1165
    %v1167 = vpop.f32.mrf.mxu0
    %1168 = vmatprep.mubr.f32.mxu0 0.0
    %1169 = vmatmul.mubr.f32.gmra.mxu0 %v1045
    %v1170 = vpop.f32.mrf.mxu0
    %v1171 = vadd.f32 0.0, %v1170
    %v1172 = vpop.f32.mrf.mxu0
    %1173 = vmatprep.mubr.f32.mxu0 0.0
    %1174 = vmatmul.mubr.f32.gmra.mxu0 %v1048
    %v1175 = vpop.f32.mrf.mxu0
    %v1176 = vadd.f32 0.0, %v1175
    %v1177 = vpop.f32.mrf.mxu0
    %1178 = vmatprep.mubr.f32.mxu0 0.0
    %1179 = vmatmul.mubr.f32.gmra.mxu0 %v1051
    %v1180 = vpop.f32.mrf.mxu0
    %v1181 = vadd.f32 0.0, %v1180
    %v1182 = vpop.f32.mrf.mxu0
    %1183 = vmatprep.mubr.f32.mxu0 0.0
    %1184 = vmatmul.mubr.f32.gmra.mxu0 %v1054
    %v1185 = vpop.f32.mrf.mxu0
    %v1186 = vadd.f32 0.0, %v1185
    %v1187 = vpop.f32.mrf.mxu0
    %1188 = vmatprep.mubr.f32.mxu0 0.0
    %1189 = vmatmul.mubr.f32.gmra.mxu0 %v1057
    %v1190 = vpop.f32.mrf.mxu0
    %v1191 = vadd.f32 0.0, %v1190
    %v1192 = vpop.f32.mrf.mxu0
    %1193 = vmatprep.mubr.f32.mxu0 0.0
    %1194 = vmatmul.mubr.f32.gmra.mxu0 %v1060
    %v1195 = vpop.f32.mrf.mxu0
    %v1196 = vadd.f32 0.0, %v1195
    %v1197 = vpop.f32.mrf.mxu0
    %1198 = vmatprep.mubr.f32.mxu0 0.0
    %1199 = vmatmul.mubr.f32.gmra.mxu0 %v1063
    %v1200 = vpop.f32.mrf.mxu0
    %v1201 = vadd.f32 0.0, %v1200
    %v1202 = vpop.f32.mrf.mxu0
    %1203 = vmatprep.mubr.f32.mxu0 0.0
    %1204 = vmatmul.mubr.f32.gmra.mxu0 %v1066
    %v1205 = vpop.f32.mrf.mxu0
    %v1206 = vadd.f32 0.0, %v1205
    %v1207 = vpop.f32.mrf.mxu0
    %1208 = vmatprep.mubr.f32.mxu0 0.0
    %1209 = vmatmul.mubr.f32.gmra.mxu0 %v1069
    %v1210 = vpop.f32.mrf.mxu0
    %v1211 = vadd.f32 0.0, %v1210
    %v1212 = vpop.f32.mrf.mxu0
    %1213 = vmatprep.mubr.f32.mxu0 0.0
    %1214 = vmatmul.mubr.f32.gmra.mxu0 %v1072
    %v1215 = vpop.f32.mrf.mxu0
    %v1216 = vadd.f32 0.0, %v1215
    %v1217 = vpop.f32.mrf.mxu0
    %1218 = vdwg.mxu0
    %vm1219 = vcmask 130048
    %1220 = vst.msk [vmem:[#allocation18] sm:$0xff] %vm1219, %v1141
    %1221 = vst.msk [vmem:[#allocation18 + $0x8] sm:$0xff] %vm1219, %v1146
    %1222 = vst.msk [vmem:[#allocation18 + $0x10] sm:$0xff] %vm1219, %v1151
    %1223 = vst.msk [vmem:[#allocation18 + $0x18] sm:$0xff] %vm1219, %v1156
    %1224 = vst.msk [vmem:[#allocation18 + $0x20] sm:$0xff] %vm1219, %v1161
    %1225 = vst.msk [vmem:[#allocation18 + $0x28] sm:$0xff] %vm1219, %v1166
    %1226 = vst.msk [vmem:[#allocation18 + $0x30] sm:$0xff] %vm1219, %v1171
    %1227 = vst.msk [vmem:[#allocation18 + $0x38] sm:$0xff] %vm1219, %v1176
    %1228 = vst.msk [vmem:[#allocation18 + $0x40] sm:$0xff] %vm1219, %v1181
    %1229 = vst.msk [vmem:[#allocation18 + $0x48] sm:$0xff] %vm1219, %v1186
    %1230 = vst.msk [vmem:[#allocation18 + $0x50] sm:$0xff] %vm1219, %v1191
    %1231 = vst.msk [vmem:[#allocation18 + $0x58] sm:$0xff] %vm1219, %v1196
    %1232 = vst.msk [vmem:[#allocation18 + $0x60] sm:$0xff] %vm1219, %v1201
    %1233 = vst.msk [vmem:[#allocation18 + $0x68] sm:$0xff] %vm1219, %v1206
    %1234 = vst.msk [vmem:[#allocation18 + $0x70] sm:$0xff] %vm1219, %v1211
    %1235 = vst.msk [vmem:[#allocation18 + $0x78] sm:$0xff] %vm1219, %v1216
    %v1236 = vld [vmem:[#allocation11] sm:$0xff]
    %v1237 = vld [vmem:[#allocation11 + $0x8] sm:$0xff]
    %v1238 = vld [vmem:[#allocation11 + $0x10] sm:$0xff]
    %v1239 = vld [vmem:[#allocation11 + $0x18] sm:$0xff]
    %v1240 = vld [vmem:[#allocation11 + $0x20] sm:$0xff]
    %v1241 = vld [vmem:[#allocation11 + $0x28] sm:$0xff]
    %v1242 = vld [vmem:[#allocation11 + $0x30] sm:$0xff]
    %v1243 = vld [vmem:[#allocation11 + $0x38] sm:$0xff]
    %v1244 = vld [vmem:[#allocation13] sm:$0xff]
    %v1245 = vld [vmem:[#allocation13 + $0x8] sm:$0xff]
    %1246 = vmatprep.subr.mxu0 0.0
    %1247 = vmatpush1.msra.mxu0 %v1216
    %1248 = vmatprep.subr.mxu0 0.0
    %1249 = vmatpush1.msra.mxu0 %v1211
    %1250 = vmatprep.subr.mxu0 0.0
    %1251 = vmatpush1.msra.mxu0 %v1206
    %1252 = vmatprep.subr.mxu0 0.0
    %1253 = vmatpush1.msra.mxu0 %v1201
    %1254 = vmatprep.subr.mxu0 0.0
    %1255 = vmatpush1.msra.mxu0 %v1196
    %1256 = vmatprep.subr.mxu0 0.0
    %1257 = vmatpush1.msra.mxu0 %v1191
    %1258 = vmatprep.subr.mxu0 0.0
    %1259 = vmatpush1.msra.mxu0 %v1186
    %1260 = vmatprep.subr.mxu0 0.0
    %1261 = vmatpush1.msra.mxu0 %v1181
    %1262 = vmatprep.subr.mxu0 0.0
    %1263 = vmatpush1.msra.mxu0 %v1176
    %1264 = vmatprep.subr.mxu0 0.0
    %1265 = vmatpush1.msra.mxu0 %v1171
    %1266 = vmatprep.subr.mxu0 0.0
    %1267 = vmatpush1.msra.mxu0 %v1166
    %1268 = vmatprep.subr.mxu0 0.0
    %1269 = vmatpush1.msra.mxu0 %v1161
    %1270 = vmatprep.subr.mxu0 0.0
    %1271 = vmatpush1.msra.mxu0 %v1156
    %1272 = vmatprep.subr.mxu0 0.0
    %1273 = vmatpush1.msra.mxu0 %v1151
    %1274 = vmatprep.subr.mxu0 0.0
    %1275 = vmatpush1.msra.mxu0 %v1146
    %1276 = vmatprep.subr.mxu0 0.0
    %1277 = vmatpush1.msra.mxu0 %v1141
    %1278 = vmatprep.subr.mxu0 0.0
    %1279 = vmatpush2.msra.mxu0 0.0
    %1280 = vmatprep.subr.mxu0 0.0
    %1281 = vmatpush2.msra.mxu0 0.0
    %1282 = vmatprep.subr.mxu0 0.0
    %1283 = vmatpush2.msra.mxu0 0.0
    %1284 = vmatprep.subr.mxu0 0.0
    %1285 = vmatpush2.msra.mxu0 0.0
    %1286 = vmatprep.subr.mxu0 0.0
    %1287 = vmatpush2.msra.mxu0 0.0
    %1288 = vmatprep.subr.mxu0 0.0
    %1289 = vmatpush2.msra.mxu0 0.0
    %1290 = vmatprep.subr.mxu0 0.0
    %1291 = vmatpush2.msra.mxu0 0.0
    %1292 = vmatprep.subr.mxu0 0.0
    %1293 = vmatpush2.msra.mxu0 0.0
    %1294 = vmatprep.subr.mxu0 0.0
    %1295 = vmatpush2.msra.mxu0 0.0
    %1296 = vmatprep.subr.mxu0 0.0
    %1297 = vmatpush2.msra.mxu0 0.0
    %1298 = vmatprep.subr.mxu0 0.0
    %1299 = vmatpush2.msra.mxu0 0.0
    %1300 = vmatprep.subr.mxu0 0.0
    %1301 = vmatpush2.msra.mxu0 0.0
    %1302 = vmatprep.subr.mxu0 0.0
    %1303 = vmatpush2.msra.mxu0 0.0
    %1304 = vmatprep.subr.mxu0 0.0
    %1305 = vmatpush2.msra.mxu0 0.0
    %1306 = vmatprep.subr.mxu0 0.0
    %1307 = vmatpush2.msra.mxu0 0.0
    %1308 = vmatprep.subr.mxu0 0.0
    %1309 = vmatpush2.msra.mxu0 0.0
    %1310 = vmatprep.mubr.f32.mxu0 0.0
    %1311 = vmatmul.mubr.f32.gmra.mxu0 %v1236
    %v1312 = vpop.f32.mrf.mxu0
    %v1313 = vadd.f32 0.0, %v1312
    %v1314 = vpop.f32.mrf.mxu0
    %1315 = vmatprep.mubr.f32.mxu0 0.0
    %1316 = vmatmul.mubr.f32.gmra.mxu0 %v1237
    %v1317 = vpop.f32.mrf.mxu0
    %v1318 = vadd.f32 0.0, %v1317
    %v1319 = vpop.f32.mrf.mxu0
    %1320 = vmatprep.mubr.f32.mxu0 0.0
    %1321 = vmatmul.mubr.f32.gmra.mxu0 %v1238
    %v1322 = vpop.f32.mrf.mxu0
    %v1323 = vadd.f32 0.0, %v1322
    %v1324 = vpop.f32.mrf.mxu0
    %1325 = vmatprep.mubr.f32.mxu0 0.0
    %1326 = vmatmul.mubr.f32.gmra.mxu0 %v1239
    %v1327 = vpop.f32.mrf.mxu0
    %v1328 = vadd.f32 0.0, %v1327
    %v1329 = vpop.f32.mrf.mxu0
    %1330 = vmatprep.mubr.f32.mxu0 0.0
    %1331 = vmatmul.mubr.f32.gmra.mxu0 %v1240
    %v1332 = vpop.f32.mrf.mxu0
    %v1333 = vadd.f32 0.0, %v1332
    %v1334 = vpop.f32.mrf.mxu0
    %1335 = vmatprep.mubr.f32.mxu0 0.0
    %1336 = vmatmul.mubr.f32.gmra.mxu0 %v1241
    %v1337 = vpop.f32.mrf.mxu0
    %v1338 = vadd.f32 0.0, %v1337
    %v1339 = vpop.f32.mrf.mxu0
    %1340 = vmatprep.mubr.f32.mxu0 0.0
    %1341 = vmatmul.mubr.f32.gmra.mxu0 %v1242
    %v1342 = vpop.f32.mrf.mxu0
    %v1343 = vadd.f32 0.0, %v1342
    %v1344 = vpop.f32.mrf.mxu0
    %1345 = vmatprep.mubr.f32.mxu0 0.0
    %1346 = vmatmul.mubr.f32.gmra.mxu0 %v1243
    %v1347 = vpop.f32.mrf.mxu0
    %v1348 = vadd.f32 0.0, %v1347
    %v1349 = vpop.f32.mrf.mxu0
    %1350 = vdwg.mxu0
    %v1352 = vsel %vm1219, %v1313, 0
    %v1355 = vsel %vm1219, %v1318, 0
    %v1358 = vsel %vm1219, %v1323, 0
    %v1361 = vsel %vm1219, %v1328, 0
    %v1364 = vsel %vm1219, %v1333, 0
    %v1367 = vsel %vm1219, %v1338, 0
    %v1370 = vsel %vm1219, %v1343, 0
    %v1373 = vsel %vm1219, %v1348, 0
    %1375 = vmatprep.subr.mxu0 0.0
    %1376 = vmatpush1.msra.mxu0 0.0
    %1377 = vmatprep.subr.mxu0 0.0
    %1378 = vmatpush1.msra.mxu0 0.0
    %1379 = vmatprep.subr.mxu0 0.0
    %1380 = vmatpush1.msra.mxu0 0.0
    %1381 = vmatprep.subr.mxu0 0.0
    %1382 = vmatpush1.msra.mxu0 0.0
    %1383 = vmatprep.subr.mxu0 0.0
    %1384 = vmatpush1.msra.mxu0 0.0
    %1385 = vmatprep.subr.mxu0 0.0
    %1386 = vmatpush1.msra.mxu0 0.0
    %1387 = vmatprep.subr.mxu0 0.0
    %1388 = vmatpush1.msra.mxu0 0.0
    %1389 = vmatprep.subr.mxu0 0.0
    %1390 = vmatpush1.msra.mxu0 0.0
    %1391 = vmatprep.subr.mxu0 0.0
    %1392 = vmatpush1.msra.mxu0 0.0
    %1393 = vmatprep.subr.mxu0 0.0
    %1394 = vmatpush1.msra.mxu0 0.0
    %1395 = vmatprep.subr.mxu0 0.0
    %1396 = vmatpush1.msra.mxu0 0.0
    %1397 = vmatprep.subr.mxu0 0.0
    %1398 = vmatpush1.msra.mxu0 0.0
    %1399 = vmatprep.subr.mxu0 0.0
    %1400 = vmatpush1.msra.mxu0 0.0
    %1401 = vmatprep.subr.mxu0 0.0
    %1402 = vmatpush1.msra.mxu0 0.0
    %1403 = vmatprep.subr.mxu0 0.0
    %1404 = vmatpush1.msra.mxu0 %v1245
    %1405 = vmatprep.subr.mxu0 0.0
    %1406 = vmatpush1.msra.mxu0 %v1244
    %1407 = vmatprep.subr.mxu0 0.0
    %1408 = vmatpush2.msra.mxu0 0.0
    %1409 = vmatprep.subr.mxu0 0.0
    %1410 = vmatpush2.msra.mxu0 0.0
    %1411 = vmatprep.subr.mxu0 0.0
    %1412 = vmatpush2.msra.mxu0 0.0
    %1413 = vmatprep.subr.mxu0 0.0
    %1414 = vmatpush2.msra.mxu0 0.0
    %1415 = vmatprep.subr.mxu0 0.0
    %1416 = vmatpush2.msra.mxu0 0.0
    %1417 = vmatprep.subr.mxu0 0.0
    %1418 = vmatpush2.msra.mxu0 0.0
    %1419 = vmatprep.subr.mxu0 0.0
    %1420 = vmatpush2.msra.mxu0 0.0
    %1421 = vmatprep.subr.mxu0 0.0
    %1422 = vmatpush2.msra.mxu0 0.0
    %1423 = vmatprep.subr.mxu0 0.0
    %1424 = vmatpush2.msra.mxu0 0.0
    %1425 = vmatprep.subr.mxu0 0.0
    %1426 = vmatpush2.msra.mxu0 0.0
    %1427 = vmatprep.subr.mxu0 0.0
    %1428 = vmatpush2.msra.mxu0 0.0
    %1429 = vmatprep.subr.mxu0 0.0
    %1430 = vmatpush2.msra.mxu0 0.0
    %1431 = vmatprep.subr.mxu0 0.0
    %1432 = vmatpush2.msra.mxu0 0.0
    %1433 = vmatprep.subr.mxu0 0.0
    %1434 = vmatpush2.msra.mxu0 0.0
    %1435 = vmatprep.subr.mxu0 0.0
    %1436 = vmatpush2.msra.mxu0 0.0
    %1437 = vmatprep.subr.mxu0 0.0
    %1438 = vmatpush2.msra.mxu0 0.0
    %1439 = vmatprep.mubr.f32.mxu0 0.0
    %1440 = vmatmul.mubr.f32.gmra.mxu0 %v1352
    %v1441 = vpop.f32.mrf.mxu0
    %v1442 = vadd.f32 0.0, %v1441
    %v1443 = vpop.f32.mrf.mxu0
    %1444 = vmatprep.mubr.f32.mxu0 0.0
    %1445 = vmatmul.mubr.f32.gmra.mxu0 %v1355
    %v1446 = vpop.f32.mrf.mxu0
    %v1447 = vadd.f32 0.0, %v1446
    %v1448 = vpop.f32.mrf.mxu0
    %1449 = vmatprep.mubr.f32.mxu0 0.0
    %1450 = vmatmul.mubr.f32.gmra.mxu0 %v1358
    %v1451 = vpop.f32.mrf.mxu0
    %v1452 = vadd.f32 0.0, %v1451
    %v1453 = vpop.f32.mrf.mxu0
    %1454 = vmatprep.mubr.f32.mxu0 0.0
    %1455 = vmatmul.mubr.f32.gmra.mxu0 %v1361
    %v1456 = vpop.f32.mrf.mxu0
    %v1457 = vadd.f32 0.0, %v1456
    %v1458 = vpop.f32.mrf.mxu0
    %1459 = vmatprep.mubr.f32.mxu0 0.0
    %1460 = vmatmul.mubr.f32.gmra.mxu0 %v1364
    %v1461 = vpop.f32.mrf.mxu0
    %v1462 = vadd.f32 0.0, %v1461
    %v1463 = vpop.f32.mrf.mxu0
    %1464 = vmatprep.mubr.f32.mxu0 0.0
    %1465 = vmatmul.mubr.f32.gmra.mxu0 %v1367
    %v1466 = vpop.f32.mrf.mxu0
    %v1467 = vadd.f32 0.0, %v1466
    %v1468 = vpop.f32.mrf.mxu0
    %1469 = vmatprep.mubr.f32.mxu0 0.0
    %1470 = vmatmul.mubr.f32.gmra.mxu0 %v1370
    %v1471 = vpop.f32.mrf.mxu0
    %v1472 = vadd.f32 0.0, %v1471
    %v1473 = vpop.f32.mrf.mxu0
    %1474 = vmatprep.mubr.f32.mxu0 0.0
    %1475 = vmatmul.mubr.f32.gmra.mxu0 %v1373
    %v1476 = vpop.f32.mrf.mxu0
    %v1477 = vadd.f32 0.0, %v1476
    %v1478 = vpop.f32.mrf.mxu0
    %1479 = vdwg.mxu0
    %vm1480 = vcmask 64512
    %1481 = vst.msk [vmem:[#allocation20] sm:$0xff] %vm1480, %v1442
    %1482 = vst.msk [vmem:[#allocation20 + $0x8] sm:$0xff] %vm1480, %v1447
    %1483 = vst.msk [vmem:[#allocation20 + $0x10] sm:$0xff] %vm1480, %v1452
    %1484 = vst.msk [vmem:[#allocation20 + $0x18] sm:$0xff] %vm1480, %v1457
    %1485 = vst.msk [vmem:[#allocation20 + $0x20] sm:$0xff] %vm1480, %v1462
    %1486 = vst.msk [vmem:[#allocation20 + $0x28] sm:$0xff] %vm1480, %v1467
    %1487 = vst.msk [vmem:[#allocation20 + $0x30] sm:$0xff] %vm1480, %v1472
    %1488 = vst.msk [vmem:[#allocation20 + $0x38] sm:$0xff] %vm1480, %v1477
    %v1489 = vld [vmem:[#allocation14] sm:$0xff]
    %v1490 = vld [vmem:[#allocation14 + $0x8] sm:$0xff]
    %v1491 = vld [vmem:[#allocation14 + $0x10] sm:$0xff]
    %v1492 = vld [vmem:[#allocation14 + $0x18] sm:$0xff]
    %v1493 = vld [vmem:[#allocation16] sm:$0xff]
    %vm1494 = vcmask 523264
    %v1496 = vsel %vm1494, %v1489, 0
    %v1499 = vsel %vm1494, %v1490, 0
    %v1502 = vsel %vm1494, %v1491, 0
    %v1505 = vsel %vm1494, %v1492, 0
    %1507 = vmatprep.subr.mxu0 0.0
    %1508 = vmatpush1.msra.mxu0 0.0
    %1509 = vmatprep.subr.mxu0 0.0
    %1510 = vmatpush1.msra.mxu0 0.0
    %1511 = vmatprep.subr.mxu0 0.0
    %1512 = vmatpush1.msra.mxu0 0.0
    %1513 = vmatprep.subr.mxu0 0.0
    %1514 = vmatpush1.msra.mxu0 0.0
    %1515 = vmatprep.subr.mxu0 0.0
    %1516 = vmatpush1.msra.mxu0 0.0
    %1517 = vmatprep.subr.mxu0 0.0
    %1518 = vmatpush1.msra.mxu0 0.0
    %1519 = vmatprep.subr.mxu0 0.0
    %1520 = vmatpush1.msra.mxu0 0.0
    %1521 = vmatprep.subr.mxu0 0.0
    %1522 = vmatpush1.msra.mxu0 0.0
    %1523 = vmatprep.subr.mxu0 0.0
    %1524 = vmatpush1.msra.mxu0 %v1477
    %1525 = vmatprep.subr.mxu0 0.0
    %1526 = vmatpush1.msra.mxu0 %v1472
    %1527 = vmatprep.subr.mxu0 0.0
    %1528 = vmatpush1.msra.mxu0 %v1467
    %1529 = vmatprep.subr.mxu0 0.0
    %1530 = vmatpush1.msra.mxu0 %v1462
    %1531 = vmatprep.subr.mxu0 0.0
    %1532 = vmatpush1.msra.mxu0 %v1457
    %1533 = vmatprep.subr.mxu0 0.0
    %1534 = vmatpush1.msra.mxu0 %v1452
    %1535 = vmatprep.subr.mxu0 0.0
    %1536 = vmatpush1.msra.mxu0 %v1447
    %1537 = vmatprep.subr.mxu0 0.0
    %1538 = vmatpush1.msra.mxu0 %v1442
    %1539 = vmatprep.subr.mxu0 0.0
    %1540 = vmatpush2.msra.mxu0 0.0
    %1541 = vmatprep.subr.mxu0 0.0
    %1542 = vmatpush2.msra.mxu0 0.0
    %1543 = vmatprep.subr.mxu0 0.0
    %1544 = vmatpush2.msra.mxu0 0.0
    %1545 = vmatprep.subr.mxu0 0.0
    %1546 = vmatpush2.msra.mxu0 0.0
    %1547 = vmatprep.subr.mxu0 0.0
    %1548 = vmatpush2.msra.mxu0 0.0
    %1549 = vmatprep.subr.mxu0 0.0
    %1550 = vmatpush2.msra.mxu0 0.0
    %1551 = vmatprep.subr.mxu0 0.0
    %1552 = vmatpush2.msra.mxu0 0.0
    %1553 = vmatprep.subr.mxu0 0.0
    %1554 = vmatpush2.msra.mxu0 0.0
    %1555 = vmatprep.subr.mxu0 0.0
    %1556 = vmatpush2.msra.mxu0 0.0
    %1557 = vmatprep.subr.mxu0 0.0
    %1558 = vmatpush2.msra.mxu0 0.0
    %1559 = vmatprep.subr.mxu0 0.0
    %1560 = vmatpush2.msra.mxu0 0.0
    %1561 = vmatprep.subr.mxu0 0.0
    %1562 = vmatpush2.msra.mxu0 0.0
    %1563 = vmatprep.subr.mxu0 0.0
    %1564 = vmatpush2.msra.mxu0 0.0
    %1565 = vmatprep.subr.mxu0 0.0
    %1566 = vmatpush2.msra.mxu0 0.0
    %1567 = vmatprep.subr.mxu0 0.0
    %1568 = vmatpush2.msra.mxu0 0.0
    %1569 = vmatprep.subr.mxu0 0.0
    %1570 = vmatpush2.msra.mxu0 0.0
    %1571 = vmatprep.mubr.f32.mxu0 0.0
    %1572 = vmatmul.mubr.f32.gmra.mxu0 %v1496
    %v1573 = vpop.f32.mrf.mxu0
    %v1574 = vadd.f32 0.0, %v1573
    %v1575 = vpop.f32.mrf.mxu0
    %1576 = vmatprep.mubr.f32.mxu0 0.0
    %1577 = vmatmul.mubr.f32.gmra.mxu0 %v1499
    %v1578 = vpop.f32.mrf.mxu0
    %v1579 = vadd.f32 0.0, %v1578
    %v1580 = vpop.f32.mrf.mxu0
    %1581 = vmatprep.mubr.f32.mxu0 0.0
    %1582 = vmatmul.mubr.f32.gmra.mxu0 %v1502
    %v1583 = vpop.f32.mrf.mxu0
    %v1584 = vadd.f32 0.0, %v1583
    %v1585 = vpop.f32.mrf.mxu0
    %1586 = vmatprep.mubr.f32.mxu0 0.0
    %1587 = vmatmul.mubr.f32.gmra.mxu0 %v1505
    %v1588 = vpop.f32.mrf.mxu0
    %v1589 = vadd.f32 0.0, %v1588
    %v1590 = vpop.f32.mrf.mxu0
    %1591 = vdwg.mxu0
    %v1593 = vsel %vm1480, %v1574, 0
    %v1596 = vsel %vm1480, %v1579, 0
    %v1599 = vsel %vm1480, %v1584, 0
    %v1602 = vsel %vm1480, %v1589, 0
    %1604 = vmatprep.subr.mxu0 0.0
    %1605 = vmatpush1.msra.mxu0 0.0
    %1606 = vmatprep.subr.mxu0 0.0
    %1607 = vmatpush1.msra.mxu0 0.0
    %1608 = vmatprep.subr.mxu0 0.0
    %1609 = vmatpush1.msra.mxu0 0.0
    %1610 = vmatprep.subr.mxu0 0.0
    %1611 = vmatpush1.msra.mxu0 0.0
    %1612 = vmatprep.subr.mxu0 0.0
    %1613 = vmatpush1.msra.mxu0 0.0
    %1614 = vmatprep.subr.mxu0 0.0
    %1615 = vmatpush1.msra.mxu0 0.0
    %1616 = vmatprep.subr.mxu0 0.0
    %1617 = vmatpush1.msra.mxu0 0.0
    %1618 = vmatprep.subr.mxu0 0.0
    %1619 = vmatpush1.msra.mxu0 0.0
    %1620 = vmatprep.subr.mxu0 0.0
    %1621 = vmatpush1.msra.mxu0 0.0
    %1622 = vmatprep.subr.mxu0 0.0
    %1623 = vmatpush1.msra.mxu0 0.0
    %1624 = vmatprep.subr.mxu0 0.0
    %1625 = vmatpush1.msra.mxu0 0.0
    %1626 = vmatprep.subr.mxu0 0.0
    %1627 = vmatpush1.msra.mxu0 0.0
    %1628 = vmatprep.subr.mxu0 0.0
    %1629 = vmatpush1.msra.mxu0 0.0
    %1630 = vmatprep.subr.mxu0 0.0
    %1631 = vmatpush1.msra.mxu0 0.0
    %1632 = vmatprep.subr.mxu0 0.0
    %1633 = vmatpush1.msra.mxu0 0.0
    %1634 = vmatprep.subr.mxu0 0.0
    %1635 = vmatpush1.msra.mxu0 %v1493
    %1636 = vmatprep.subr.mxu0 0.0
    %1637 = vmatpush2.msra.mxu0 0.0
    %1638 = vmatprep.subr.mxu0 0.0
    %1639 = vmatpush2.msra.mxu0 0.0
    %1640 = vmatprep.subr.mxu0 0.0
    %1641 = vmatpush2.msra.mxu0 0.0
    %1642 = vmatprep.subr.mxu0 0.0
    %1643 = vmatpush2.msra.mxu0 0.0
    %1644 = vmatprep.subr.mxu0 0.0
    %1645 = vmatpush2.msra.mxu0 0.0
    %1646 = vmatprep.subr.mxu0 0.0
    %1647 = vmatpush2.msra.mxu0 0.0
    %1648 = vmatprep.subr.mxu0 0.0
    %1649 = vmatpush2.msra.mxu0 0.0
    %1650 = vmatprep.subr.mxu0 0.0
    %1651 = vmatpush2.msra.mxu0 0.0
    %1652 = vmatprep.subr.mxu0 0.0
    %1653 = vmatpush2.msra.mxu0 0.0
    %1654 = vmatprep.subr.mxu0 0.0
    %1655 = vmatpush2.msra.mxu0 0.0
    %1656 = vmatprep.subr.mxu0 0.0
    %1657 = vmatpush2.msra.mxu0 0.0
    %1658 = vmatprep.subr.mxu0 0.0
    %1659 = vmatpush2.msra.mxu0 0.0
    %1660 = vmatprep.subr.mxu0 0.0
    %1661 = vmatpush2.msra.mxu0 0.0
    %1662 = vmatprep.subr.mxu0 0.0
    %1663 = vmatpush2.msra.mxu0 0.0
    %1664 = vmatprep.subr.mxu0 0.0
    %1665 = vmatpush2.msra.mxu0 0.0
    %1666 = vmatprep.subr.mxu0 0.0
    %1667 = vmatpush2.msra.mxu0 0.0
    %1668 = vmatprep.mubr.f32.mxu0 0.0
    %1669 = vmatmul.mubr.f32.gmra.mxu0 %v1593
    %v1670 = vpop.f32.mrf.mxu0
    %v1671 = vadd.f32 0.0, %v1670
    %v1672 = vpop.f32.mrf.mxu0
    %1673 = vmatprep.mubr.f32.mxu0 0.0
    %1674 = vmatmul.mubr.f32.gmra.mxu0 %v1596
    %v1675 = vpop.f32.mrf.mxu0
    %v1676 = vadd.f32 0.0, %v1675
    %v1677 = vpop.f32.mrf.mxu0
    %1678 = vmatprep.mubr.f32.mxu0 0.0
    %1679 = vmatmul.mubr.f32.gmra.mxu0 %v1599
    %v1680 = vpop.f32.mrf.mxu0
    %v1681 = vadd.f32 0.0, %v1680
    %v1682 = vpop.f32.mrf.mxu0
    %1683 = vmatprep.mubr.f32.mxu0 0.0
    %1684 = vmatmul.mubr.f32.gmra.mxu0 %v1602
    %v1685 = vpop.f32.mrf.mxu0
    %v1686 = vadd.f32 0.0, %v1685
    %v1687 = vpop.f32.mrf.mxu0
    %1688 = vdwg.mxu0
    %vm1689 = vcmask 31744
    %1690 = vst.msk [vmem:[#allocation21] sm:$0xff] %vm1689, %v1671
    %1691 = vst.msk [vmem:[#allocation21 + $0x8] sm:$0xff] %vm1689, %v1676
    %1692 = vst.msk [vmem:[#allocation21 + $0x10] sm:$0xff] %vm1689, %v1681
    %1693 = vst.msk [vmem:[#allocation21 + $0x18] sm:$0xff] %vm1689, %v1686
    %v1694 = vld [vmem:[%s9] sm:$0xff]
    %v1695 = vld [vmem:[%s9 + $0x8] sm:$0xff]
    %v1696 = vld [vmem:[%s10] sm:$0xf]
    %v1698 = vsel %vm491, %v1694, 0
    %v1701 = vsel %vm491, %v1695, 0
    %1703 = vmatprep.subr.mxu0 0.0
    %1704 = vmatpush1.msra.mxu0 0.0
    %1705 = vmatprep.subr.mxu0 0.0
    %1706 = vmatpush1.msra.mxu0 0.0
    %1707 = vmatprep.subr.mxu0 0.0
    %1708 = vmatpush1.msra.mxu0 0.0
    %1709 = vmatprep.subr.mxu0 0.0
    %1710 = vmatpush1.msra.mxu0 0.0
    %1711 = vmatprep.subr.mxu0 0.0
    %1712 = vmatpush1.msra.mxu0 0.0
    %1713 = vmatprep.subr.mxu0 0.0
    %1714 = vmatpush1.msra.mxu0 0.0
    %1715 = vmatprep.subr.mxu0 0.0
    %1716 = vmatpush1.msra.mxu0 0.0
    %1717 = vmatprep.subr.mxu0 0.0
    %1718 = vmatpush1.msra.mxu0 0.0
    %1719 = vmatprep.subr.mxu0 0.0
    %1720 = vmatpush1.msra.mxu0 0.0
    %1721 = vmatprep.subr.mxu0 0.0
    %1722 = vmatpush1.msra.mxu0 0.0
    %1723 = vmatprep.subr.mxu0 0.0
    %1724 = vmatpush1.msra.mxu0 0.0
    %1725 = vmatprep.subr.mxu0 0.0
    %1726 = vmatpush1.msra.mxu0 0.0
    %1727 = vmatprep.subr.mxu0 0.0
    %1728 = vmatpush1.msra.mxu0 %v1686
    %1729 = vmatprep.subr.mxu0 0.0
    %1730 = vmatpush1.msra.mxu0 %v1681
    %1731 = vmatprep.subr.mxu0 0.0
    %1732 = vmatpush1.msra.mxu0 %v1676
    %1733 = vmatprep.subr.mxu0 0.0
    %1734 = vmatpush1.msra.mxu0 %v1671
    %1735 = vmatprep.subr.mxu0 0.0
    %1736 = vmatpush2.msra.mxu0 0.0
    %1737 = vmatprep.subr.mxu0 0.0
    %1738 = vmatpush2.msra.mxu0 0.0
    %1739 = vmatprep.subr.mxu0 0.0
    %1740 = vmatpush2.msra.mxu0 0.0
    %1741 = vmatprep.subr.mxu0 0.0
    %1742 = vmatpush2.msra.mxu0 0.0
    %1743 = vmatprep.subr.mxu0 0.0
    %1744 = vmatpush2.msra.mxu0 0.0
    %1745 = vmatprep.subr.mxu0 0.0
    %1746 = vmatpush2.msra.mxu0 0.0
    %1747 = vmatprep.subr.mxu0 0.0
    %1748 = vmatpush2.msra.mxu0 0.0
    %1749 = vmatprep.subr.mxu0 0.0
    %1750 = vmatpush2.msra.mxu0 0.0
    %1751 = vmatprep.subr.mxu0 0.0
    %1752 = vmatpush2.msra.mxu0 0.0
    %1753 = vmatprep.subr.mxu0 0.0
    %1754 = vmatpush2.msra.mxu0 0.0
    %1755 = vmatprep.subr.mxu0 0.0
    %1756 = vmatpush2.msra.mxu0 0.0
    %1757 = vmatprep.subr.mxu0 0.0
    %1758 = vmatpush2.msra.mxu0 0.0
    %1759 = vmatprep.subr.mxu0 0.0
    %1760 = vmatpush2.msra.mxu0 0.0
    %1761 = vmatprep.subr.mxu0 0.0
    %1762 = vmatpush2.msra.mxu0 0.0
    %1763 = vmatprep.subr.mxu0 0.0
    %1764 = vmatpush2.msra.mxu0 0.0
    %1765 = vmatprep.subr.mxu0 0.0
    %1766 = vmatpush2.msra.mxu0 0.0
    %1767 = vmatprep.mubr.f32.mxu0 0.0
    %1768 = vmatmul.mubr.f32.gmra.mxu0 %v1698
    %v1769 = vpop.f32.mrf.mxu0
    %v1770 = vadd.f32 0.0, %v1769
    %v1771 = vpop.f32.mrf.mxu0
    %1772 = vmatprep.mubr.f32.mxu0 0.0
    %1773 = vmatmul.mubr.f32.gmra.mxu0 %v1701
    %v1774 = vpop.f32.mrf.mxu0
    %v1775 = vadd.f32 0.0, %v1774
    %v1776 = vpop.f32.mrf.mxu0
    %1777 = vdwg.mxu0
    %v1779 = vsel %vm1689, %v1770, 0
    %v1782 = vsel %vm1689, %v1775, 0
    %vm1784 = vcmask 1043456
    %v1786 = vsel %vm1784, %v1696, 0
    %1788 = vmatprep.subr.mxu0 0.0
    %1789 = vmatpush1.msra.mxu0 0.0
    %1790 = vmatprep.subr.mxu0 0.0
    %1791 = vmatpush1.msra.mxu0 0.0
    %1792 = vmatprep.subr.mxu0 0.0
    %1793 = vmatpush1.msra.mxu0 0.0
    %1794 = vmatprep.subr.mxu0 0.0
    %1795 = vmatpush1.msra.mxu0 0.0
    %1796 = vmatprep.subr.mxu0 0.0
    %1797 = vmatpush1.msra.mxu0 0.0
    %1798 = vmatprep.subr.mxu0 0.0
    %1799 = vmatpush1.msra.mxu0 0.0
    %1800 = vmatprep.subr.mxu0 0.0
    %1801 = vmatpush1.msra.mxu0 0.0
    %1802 = vmatprep.subr.mxu0 0.0
    %1803 = vmatpush1.msra.mxu0 0.0
    %1804 = vmatprep.subr.mxu0 0.0
    %1805 = vmatpush1.msra.mxu0 0.0
    %1806 = vmatprep.subr.mxu0 0.0
    %1807 = vmatpush1.msra.mxu0 0.0
    %1808 = vmatprep.subr.mxu0 0.0
    %1809 = vmatpush1.msra.mxu0 0.0
    %1810 = vmatprep.subr.mxu0 0.0
    %1811 = vmatpush1.msra.mxu0 0.0
    %1812 = vmatprep.subr.mxu0 0.0
    %1813 = vmatpush1.msra.mxu0 0.0
    %1814 = vmatprep.subr.mxu0 0.0
    %1815 = vmatpush1.msra.mxu0 0.0
    %1816 = vmatprep.subr.mxu0 0.0
    %1817 = vmatpush1.msra.mxu0 0.0
    %1818 = vmatprep.subr.mxu0 0.0
    %1819 = vmatpush1.msra.mxu0 %v1786
    %1820 = vmatprep.subr.mxu0 0.0
    %1821 = vmatpush2.msra.mxu0 0.0
    %1822 = vmatprep.subr.mxu0 0.0
    %1823 = vmatpush2.msra.mxu0 0.0
    %1824 = vmatprep.subr.mxu0 0.0
    %1825 = vmatpush2.msra.mxu0 0.0
    %1826 = vmatprep.subr.mxu0 0.0
    %1827 = vmatpush2.msra.mxu0 0.0
    %1828 = vmatprep.subr.mxu0 0.0
    %1829 = vmatpush2.msra.mxu0 0.0
    %1830 = vmatprep.subr.mxu0 0.0
    %1831 = vmatpush2.msra.mxu0 0.0
    %1832 = vmatprep.subr.mxu0 0.0
    %1833 = vmatpush2.msra.mxu0 0.0
    %1834 = vmatprep.subr.mxu0 0.0
    %1835 = vmatpush2.msra.mxu0 0.0
    %1836 = vmatprep.subr.mxu0 0.0
    %1837 = vmatpush2.msra.mxu0 0.0
    %1838 = vmatprep.subr.mxu0 0.0
    %1839 = vmatpush2.msra.mxu0 0.0
    %1840 = vmatprep.subr.mxu0 0.0
    %1841 = vmatpush2.msra.mxu0 0.0
    %1842 = vmatprep.subr.mxu0 0.0
    %1843 = vmatpush2.msra.mxu0 0.0
    %1844 = vmatprep.subr.mxu0 0.0
    %1845 = vmatpush2.msra.mxu0 0.0
    %1846 = vmatprep.subr.mxu0 0.0
    %1847 = vmatpush2.msra.mxu0 0.0
    %1848 = vmatprep.subr.mxu0 0.0
    %1849 = vmatpush2.msra.mxu0 0.0
    %1850 = vmatprep.subr.mxu0 0.0
    %1851 = vmatpush2.msra.mxu0 0.0
    %1852 = vmatprep.mubr.f32.mxu0 0.0
    %1853 = vmatmul.mubr.f32.gmra.mxu0 %v1779
    %v1854 = vpop.f32.mrf.mxu0
    %v1855 = vadd.f32 0.0, %v1854
    %v1856 = vpop.f32.mrf.mxu0
    %1857 = vmatprep.mubr.f32.mxu0 0.0
    %1858 = vmatmul.mubr.f32.gmra.mxu0 %v1782
    %v1859 = vpop.f32.mrf.mxu0
    %v1860 = vadd.f32 0.0, %v1859
    %v1861 = vpop.f32.mrf.mxu0
    %1862 = vdwg.mxu0
    %vm1863 = vcmask 15360
    %1864 = vst.msk [vmem:[%s15] sm:$0xff] %vm1863, %v1855
    %1865 = vst.msk [vmem:[%s15 + $0x8] sm:$0xff] %vm1863, %v1860
    // Predicated region
    $region82: #{vgg19_mask_forward.1} parent=1 // pred_check
      _
    $region83: #{vgg19_mask_forward.1} parent=1 // pred_check_branch
      %1867 = sbr.rel (0) target = $region85
    $region84: #{vgg19_mask_forward.1} parent=1 // pred_region
      %s1869 = ssub.s32 4096, 4096
      %1870 = vsyncadd [#allocation4], %s1869
      %s1871 = sshll.u32 [#allocation17], 4
      %s1872 = int_to_ptr.vmem [resolvable:$true] %s1871
      %1877 = dma.vmem_to_hbm [thread:$0]  %s1872, 4096, %s11, [#allocation4], 128, 128, 8
    $region85: #{vgg19_mask_forward.1} parent=1 // pred_fallthru
      _
    // Predicated region
    $region86: #{vgg19_mask_forward.1} parent=1 // pred_check
      _
    $region87: #{vgg19_mask_forward.1} parent=1 // pred_check_branch
      %1879 = sbr.rel (0) target = $region89
    $region88: #{vgg19_mask_forward.1} parent=1 // pred_region
      %s1881 = ssub.s32 2048, 2048
      %1882 = vsyncadd [#allocation19], %s1881
      %s1883 = sshll.u32 [#allocation18], 4
      %s1884 = int_to_ptr.vmem [resolvable:$true] %s1883
      %1889 = dma.vmem_to_hbm [thread:$0]  %s1884, 2048, %s12, [#allocation19], 128, 128, 8
    $region89: #{vgg19_mask_forward.1} parent=1 // pred_fallthru
      _
    // Predicated region
    $region90: #{vgg19_mask_forward.1} parent=1 // pred_check
      _
    $region91: #{vgg19_mask_forward.1} parent=1 // pred_check_branch
      %1891 = sbr.rel (0) target = $region93
    $region92: #{vgg19_mask_forward.1} parent=1 // pred_region
      %s1893 = ssub.s32 1024, 1024
      %1894 = vsyncadd [#allocation19], %s1893
      %s1895 = sshll.u32 [#allocation20], 4
      %s1896 = int_to_ptr.vmem [resolvable:$true] %s1895
      %1901 = dma.vmem_to_hbm [thread:$0]  %s1896, 1024, %s13, [#allocation19], 128, 128, 8
    $region93: #{vgg19_mask_forward.1} parent=1 // pred_fallthru
      _
    // Predicated region
    $region94: #{vgg19_mask_forward.1} parent=1 // pred_check
      _
    $region95: #{vgg19_mask_forward.1} parent=1 // pred_check_branch
      %1903 = sbr.rel (0) target = $region97
    $region96: #{vgg19_mask_forward.1} parent=1 // pred_region
      %s1905 = ssub.s32 512, 512
      %1906 = vsyncadd [#allocation22], %s1905
      %s1907 = sshll.u32 [#allocation21], 4
      %s1908 = int_to_ptr.vmem [resolvable:$true] %s1907
      %1913 = dma.vmem_to_hbm [thread:$0]  %s1908, 512, %s14, [#allocation22], 128, 128, 8
    $region97: #{vgg19_mask_forward.1} parent=1 // pred_fallthru
      _
    // Predicated region
    $region98: #{vgg19_mask_forward.1} parent=1 // pred_check
      _
    $region99: #{vgg19_mask_forward.1} parent=1 // pred_check_branch
      %1915 = sbr.rel (0) target = $region101
    $region100: #{vgg19_mask_forward.1} parent=1 // pred_region
      _
    $region101: #{vgg19_mask_forward.1} parent=1 // pred_fallthru
      _
    // Predicated region
    $region102: #{vgg19_mask_forward.1} parent=1 // pred_check
      _
    $region103: #{vgg19_mask_forward.1} parent=1 // pred_check_branch
      %1917 = sbr.rel (0) target = $region105
    $region104: #{vgg19_mask_forward.1} parent=1 // pred_region
      %1918 = dma.done [#allocation4], 4096
    $region105: #{vgg19_mask_forward.1} parent=1 // pred_fallthru
      _
    // Predicated region
    $region106: #{vgg19_mask_forward.1} parent=1 // pred_check
      _
    $region107: #{vgg19_mask_forward.1} parent=1 // pred_check_branch
      %1920 = sbr.rel (0) target = $region109
    $region108: #{vgg19_mask_forward.1} parent=1 // pred_region
      %1921 = dma.done [#allocation19], 2048
    $region109: #{vgg19_mask_forward.1} parent=1 // pred_fallthru
      _
    // Predicated region
    $region110: #{vgg19_mask_forward.1} parent=1 // pred_check
      _
    $region111: #{vgg19_mask_forward.1} parent=1 // pred_check_branch
      %1923 = sbr.rel (0) target = $region113
    $region112: #{vgg19_mask_forward.1} parent=1 // pred_region
      %1924 = dma.done [#allocation19], 1024
    $region113: #{vgg19_mask_forward.1} parent=1 // pred_fallthru
      _
    // Predicated region
    $region114: #{vgg19_mask_forward.1} parent=1 // pred_check
      _
    $region115: #{vgg19_mask_forward.1} parent=1 // pred_check_branch
      %1926 = sbr.rel (0) target = $region117
    $region116: #{vgg19_mask_forward.1} parent=1 // pred_region
      %1927 = dma.done [#allocation22], 512
    $region117: #{vgg19_mask_forward.1} parent=1 // pred_fallthru
      _
    // Predicated region
    $region118: #{vgg19_mask_forward.1} parent=1 // pred_check
      _
    $region119: #{vgg19_mask_forward.1} parent=1 // pred_check_branch
      %1929 = sbr.rel (0) target = $region121
    $region120: #{vgg19_mask_forward.1} parent=1 // pred_region
      _
    $region121: #{vgg19_mask_forward.1} parent=1 // pred_fallthru
      _
    %1930 = vsyncpa [#allocation3], 1
    %1931 = vsyncpa [#allocation6], 1
    %1932 = vsyncpa [#allocation9], 1
    %1933 = vsyncpa [#allocation12], 1
    %1934 = vsyncpa [#allocation15], 1
    %1935 = vsyncpa [#allocation4], 1
    %1936 = vsyncpa [#allocation19], 1
    %1937 = vsyncpa [#allocation22], 1

// kernel: vgg19_mask_forward.1
$region0: #{vgg19_mask_forward.1}
  #allocation0 [shape = 'u32[]', space=smem, size = 0x4, offset = 0x4, fixed_abs, tag = 'smem constant byte address 0x4 - core index']
  #allocation1 [shape = 'u32[144,128]{1,0:T(1,128)}', space=vmem, size = 0x12000, scoped, tag = 'internal scratch']
  %s0 = inlined_call_operand.hbm [shape: f32[1,256,32], index: 0, kind: input, shape index: {}]
  %s1 = inlined_call_operand.hbm [shape: f32[256,256], index: 1, kind: input, shape index: {}]
  %s2 = inlined_call_operand.hbm [shape: f32[32,32], index: 2, kind: input, shape index: {}]
  %s3 = inlined_call_operand.hbm [shape: f32[128,256], index: 3, kind: input, shape index: {}]
  %s4 = inlined_call_operand.hbm [shape: f32[32,16], index: 4, kind: input, shape index: {}]
  %s5 = inlined_call_operand.hbm [shape: f32[64,128], index: 5, kind: input, shape index: {}]
  %s6 = inlined_call_operand.hbm [shape: f32[16,8], index: 6, kind: input, shape index: {}]
  %s7 = inlined_call_operand.hbm [shape: f32[32,64], index: 7, kind: input, shape index: {}]
  %s8 = inlined_call_operand.hbm [shape: f32[8,4], index: 8, kind: input, shape index: {}]
  %s9 = inlined_call_operand.vmem [shape: f32[16,32], index: 9, kind: input, shape index: {}]
  %s10 = inlined_call_operand.vmem [shape: f32[4,2], index: 10, kind: input, shape index: {}]
  %s11 = inlined_call_operand.hbm [shape: f32[1,256,32], index: 11, kind: output, shape index: {0}]
  %s12 = inlined_call_operand.hbm [shape: f32[1,128,16], index: 12, kind: output, shape index: {1}]
  %s13 = inlined_call_operand.hbm [shape: f32[1,64,8], index: 13, kind: output, shape index: {2}]
  %s14 = inlined_call_operand.hbm [shape: f32[1,32,4], index: 14, kind: output, shape index: {3}]
  %s15 = inlined_call_operand.vmem [shape: f32[1,16,2], index: 15, kind: output, shape index: {4}]
  %16 = xla_tuple %s11, %s12, %s13, %s14, %s15
  %s17 = sld [smem:[#allocation0]]
  $region122: #{vgg19_mask_forward.1} parent=0
    _
  %s19 = ssub.s32 1, %s17
  %s20 = scalar_select 0, %s19, %s17
  $region1: #{vgg19_mask_forward.1} parent=0
    #allocation2 [shape = 'u8[131072]{0}', space=vmem, size = 0x20000, scoped, tag = 'input window, operand 0, single buffered']
    #allocation3 [shape = 's32[1]{0}', space=sflag, size = 0x4, scoped, tag = 'scoped memory for vgg19_mask_forward.1']
    #allocation4 [shape = 's32[1]{0}', space=sflag, size = 0x4, scoped, tag = 'scoped memory for vgg19_mask_forward.1']
    #allocation5 [shape = 'u8[262144]{0}', space=vmem, size = 0x40000, scoped, tag = 'input window, operand 1, single buffered']
    #allocation6 [shape = 's32[1]{0}', space=sflag, size = 0x4, scoped, tag = 'scoped memory for vgg19_mask_forward.1']
    #allocation7 [shape = 'u8[16384]{0}', space=vmem, size = 0x4000, scoped, tag = 'input window, operand 2, single buffered']
    #allocation8 [shape = 'u8[131072]{0}', space=vmem, size = 0x20000, scoped, tag = 'input window, operand 3, single buffered']
    #allocation9 [shape = 's32[1]{0}', space=sflag, size = 0x4, scoped, tag = 'scoped memory for vgg19_mask_forward.1']
    #allocation10 [shape = 'u8[16384]{0}', space=vmem, size = 0x4000, scoped, tag = 'input window, operand 4, single buffered']
    #allocation11 [shape = 'u8[32768]{0}', space=vmem, size = 0x8000, scoped, tag = 'input window, operand 5, single buffered']
    #allocation12 [shape = 's32[1]{0}', space=sflag, size = 0x4, scoped, tag = 'scoped memory for vgg19_mask_forward.1']
    #allocation13 [shape = 'u8[8192]{0}', space=vmem, size = 0x2000, scoped, tag = 'input window, operand 6, single buffered']
    #allocation14 [shape = 'u8[16384]{0}', space=vmem, size = 0x4000, scoped, tag = 'input window, operand 7, single buffered']
    #allocation15 [shape = 's32[1]{0}', space=sflag, size = 0x4, scoped, tag = 'scoped memory for vgg19_mask_forward.1']
    #allocation16 [shape = 'u8[4096]{0}', space=vmem, size = 0x1000, scoped, tag = 'input window, operand 8, single buffered']
    #allocation17 [shape = 'u8[131072]{0}', space=vmem, size = 0x20000, scoped, tag = 'output window, operand 0, single buffered']
    #allocation18 [shape = 'u8[65536]{0}', space=vmem, size = 0x10000, scoped, tag = 'output window, operand 1, single buffered']
    #allocation19 [shape = 's32[1]{0}', space=sflag, size = 0x4, scoped, tag = 'scoped memory for vgg19_mask_forward.1']
    #allocation20 [shape = 'u8[32768]{0}', space=vmem, size = 0x8000, scoped, tag = 'output window, operand 2, single buffered']
    #allocation21 [shape = 'u8[16384]{0}', space=vmem, size = 0x4000, scoped, tag = 'output window, operand 3, single buffered']
    #allocation22 [shape = 's32[1]{0}', space=sflag, size = 0x4, scoped, tag = 'scoped memory for vgg19_mask_forward.1']
    %21 = vsyncpa [#allocation3], 0
    %22 = vsyncpa [#allocation6], 0
    %23 = vsyncpa [#allocation9], 0
    %24 = vsyncpa [#allocation12], 0
    %25 = vsyncpa [#allocation15], 0
    %26 = vsyncpa [#allocation4], 0
    %27 = vsyncpa [#allocation19], 0
    %28 = vsyncpa [#allocation22], 0
    // Predicated region
    $region2: #{vgg19_mask_forward.1} parent=1 // pred_check
      _
    $region3: #{vgg19_mask_forward.1} parent=1 // pred_check_branch
      %30 = sbr.rel (0) target = $region5
    $region4: #{vgg19_mask_forward.1} parent=1 // pred_region
      %s32 = ssub.s32 4096, 4096
      %33 = vsyncadd [#allocation3], %s32
      %s34 = sshll.u32 [#allocation2], 4
      %s35 = int_to_ptr.vmem [resolvable:$true] %s34
      %40 = dma.hbm_to_vmem [thread:$0]  %s0, 4096, %s35, [#allocation3], 128, 128, 8
    $region5: #{vgg19_mask_forward.1} parent=1 // pred_fallthru
      _
    // Predicated region
    $region6: #{vgg19_mask_forward.1} parent=1 // pred_check
      _
    $region7: #{vgg19_mask_forward.1} parent=1 // pred_check_branch
      %42 = sbr.rel (0) target = $region9
    $region8: #{vgg19_mask_forward.1} parent=1 // pred_region
      %s44 = ssub.s32 8192, 8192
      %45 = vsyncadd [#allocation6], %s44
      %s46 = sshll.u32 [#allocation5], 4
      %s47 = int_to_ptr.vmem [resolvable:$true] %s46
      %52 = dma.hbm_to_vmem [thread:$0]  %s1, 8192, %s47, [#allocation6], 256, 256, 16
    $region9: #{vgg19_mask_forward.1} parent=1 // pred_fallthru
      _
    // Predicated region
    $region10: #{vgg19_mask_forward.1} parent=1 // pred_check
      _
    $region11: #{vgg19_mask_forward.1} parent=1 // pred_check_branch
      %54 = sbr.rel (0) target = $region13
    $region12: #{vgg19_mask_forward.1} parent=1 // pred_region
      %s56 = ssub.s32 512, 512
      %57 = vsyncadd [#allocation6], %s56
      %s58 = sshll.u32 [#allocation7], 4
      %s59 = int_to_ptr.vmem [resolvable:$true] %s58
      %64 = dma.hbm_to_vmem [thread:$0]  %s2, 512, %s59, [#allocation6], 128, 128, 8
    $region13: #{vgg19_mask_forward.1} parent=1 // pred_fallthru
      _
    // Predicated region
    $region14: #{vgg19_mask_forward.1} parent=1 // pred_check
      _
    $region15: #{vgg19_mask_forward.1} parent=1 // pred_check_branch
      %66 = sbr.rel (0) target = $region17
    $region16: #{vgg19_mask_forward.1} parent=1 // pred_region
      %s68 = ssub.s32 4096, 4096
      %69 = vsyncadd [#allocation9], %s68
      %s70 = sshll.u32 [#allocation8], 4
      %s71 = int_to_ptr.vmem [resolvable:$true] %s70
      %76 = dma.hbm_to_vmem [thread:$0]  %s3, 4096, %s71, [#allocation9], 256, 256, 16
    $region17: #{vgg19_mask_forward.1} parent=1 // pred_fallthru
      _
    // Predicated region
    $region18: #{vgg19_mask_forward.1} parent=1 // pred_check
      _
    $region19: #{vgg19_mask_forward.1} parent=1 // pred_check_branch
      %78 = sbr.rel (0) target = $region21
    $region20: #{vgg19_mask_forward.1} parent=1 // pred_region
      %s80 = ssub.s32 512, 512
      %81 = vsyncadd [#allocation9], %s80
      %s82 = sshll.u32 [#allocation10], 4
      %s83 = int_to_ptr.vmem [resolvable:$true] %s82
      %88 = dma.hbm_to_vmem [thread:$0]  %s4, 512, %s83, [#allocation9], 128, 128, 8
    $region21: #{vgg19_mask_forward.1} parent=1 // pred_fallthru
      _
    // Predicated region
    $region22: #{vgg19_mask_forward.1} parent=1 // pred_check
      _
    $region23: #{vgg19_mask_forward.1} parent=1 // pred_check_branch
      %90 = sbr.rel (0) target = $region25
    $region24: #{vgg19_mask_forward.1} parent=1 // pred_region
      %s92 = ssub.s32 1024, 1024
      %93 = vsyncadd [#allocation12], %s92
      %s94 = sshll.u32 [#allocation11], 4
      %s95 = int_to_ptr.vmem [resolvable:$true] %s94
      %100 = dma.hbm_to_vmem [thread:$0]  %s5, 1024, %s95, [#allocation12], 128, 128, 8
    $region25: #{vgg19_mask_forward.1} parent=1 // pred_fallthru
      _
    // Predicated region
    $region26: #{vgg19_mask_forward.1} parent=1 // pred_check
      _
    $region27: #{vgg19_mask_forward.1} parent=1 // pred_check_branch
      %102 = sbr.rel (0) target = $region29
    $region28: #{vgg19_mask_forward.1} parent=1 // pred_region
      %s104 = ssub.s32 256, 256
      %105 = vsyncadd [#allocation12], %s104
      %s106 = sshll.u32 [#allocation13], 4
      %s107 = int_to_ptr.vmem [resolvable:$true] %s106
      %112 = dma.hbm_to_vmem [thread:$0]  %s6, 256, %s107, [#allocation12], 128, 128, 8
    $region29: #{vgg19_mask_forward.1} parent=1 // pred_fallthru
      _
    // Predicated region
    $region30: #{vgg19_mask_forward.1} parent=1 // pred_check
      _
    $region31: #{vgg19_mask_forward.1} parent=1 // pred_check_branch
      %114 = sbr.rel (0) target = $region33
    $region32: #{vgg19_mask_forward.1} parent=1 // pred_region
      %s116 = ssub.s32 512, 512
      %117 = vsyncadd [#allocation15], %s116
      %s118 = sshll.u32 [#allocation14], 4
      %s119 = int_to_ptr.vmem [resolvable:$true] %s118
      %124 = dma.hbm_to_vmem [thread:$0]  %s7, 512, %s119, [#allocation15], 128, 128, 8
    $region33: #{vgg19_mask_forward.1} parent=1 // pred_fallthru
      _
    // Predicated region
    $region34: #{vgg19_mask_forward.1} parent=1 // pred_check
      _
    $region35: #{vgg19_mask_forward.1} parent=1 // pred_check_branch
      %126 = sbr.rel (0) target = $region37
    $region36: #{vgg19_mask_forward.1} parent=1 // pred_region
      %s128 = ssub.s32 128, 128
      %129 = vsyncadd [#allocation15], %s128
      %s131 = sshll.u32 [#allocation16], 4
      %s132 = int_to_ptr.vmem [resolvable:$true] %s131
      %134 = dma.hbm_to_vmem [thread:$0]  %s8, 128, %s132, [#allocation15]
    $region37: #{vgg19_mask_forward.1} parent=1 // pred_fallthru
      _
    // Predicated region
    $region38: #{vgg19_mask_forward.1} parent=1 // pred_check
      _
    $region39: #{vgg19_mask_forward.1} parent=1 // pred_check_branch
      %136 = sbr.rel (0) target = $region41
    $region40: #{vgg19_mask_forward.1} parent=1 // pred_region
      _
    $region41: #{vgg19_mask_forward.1} parent=1 // pred_fallthru
      _
    // Predicated region
    $region42: #{vgg19_mask_forward.1} parent=1 // pred_check
      _
    $region43: #{vgg19_mask_forward.1} parent=1 // pred_check_branch
      %138 = sbr.rel (0) target = $region45
    $region44: #{vgg19_mask_forward.1} parent=1 // pred_region
      _
    $region45: #{vgg19_mask_forward.1} parent=1 // pred_fallthru
      _
    // Predicated region
    $region46: #{vgg19_mask_forward.1} parent=1 // pred_check
      _
    $region47: #{vgg19_mask_forward.1} parent=1 // pred_check_branch
      %140 = sbr.rel (0) target = $region49
    $region48: #{vgg19_mask_forward.1} parent=1 // pred_region
      %141 = dma.done [#allocation3], 4096
    $region49: #{vgg19_mask_forward.1} parent=1 // pred_fallthru
      _
    // Predicated region
    $region50: #{vgg19_mask_forward.1} parent=1 // pred_check
      _
    $region51: #{vgg19_mask_forward.1} parent=1 // pred_check_branch
      %143 = sbr.rel (0) target = $region53
    $region52: #{vgg19_mask_forward.1} parent=1 // pred_region
      %144 = dma.done [#allocation6], 8192
    $region53: #{vgg19_mask_forward.1} parent=1 // pred_fallthru
      _
    // Predicated region
    $region54: #{vgg19_mask_forward.1} parent=1 // pred_check
      _
    $region55: #{vgg19_mask_forward.1} parent=1 // pred_check_branch
      %146 = sbr.rel (0) target = $region57
    $region56: #{vgg19_mask_forward.1} parent=1 // pred_region
      %147 = dma.done [#allocation6], 512
    $region57: #{vgg19_mask_forward.1} parent=1 // pred_fallthru
      _
    // Predicated region
    $region58: #{vgg19_mask_forward.1} parent=1 // pred_check
      _
    $region59: #{vgg19_mask_forward.1} parent=1 // pred_check_branch
      %149 = sbr.rel (0) target = $region61
    $region60: #{vgg19_mask_forward.1} parent=1 // pred_region
      %150 = dma.done [#allocation9], 4096
    $region61: #{vgg19_mask_forward.1} parent=1 // pred_fallthru
      _
    // Predicated region
    $region62: #{vgg19_mask_forward.1} parent=1 // pred_check
      _
    $region63: #{vgg19_mask_forward.1} parent=1 // pred_check_branch
      %152 = sbr.rel (0) target = $region65
    $region64: #{vgg19_mask_forward.1} parent=1 // pred_region
      %153 = dma.done [#allocation9], 512
    $region65: #{vgg19_mask_forward.1} parent=1 // pred_fallthru
      _
    // Predicated region
    $region66: #{vgg19_mask_forward.1} parent=1 // pred_check
      _
    $region67: #{vgg19_mask_forward.1} parent=1 // pred_check_branch
      %155 = sbr.rel (0) target = $region69
    $region68: #{vgg19_mask_forward.1} parent=1 // pred_region
      %156 = dma.done [#allocation12], 1024
    $region69: #{vgg19_mask_forward.1} parent=1 // pred_fallthru
      _
    // Predicated region
    $region70: #{vgg19_mask_forward.1} parent=1 // pred_check
      _
    $region71: #{vgg19_mask_forward.1} parent=1 // pred_check_branch
      %158 = sbr.rel (0) target = $region73
    $region72: #{vgg19_mask_forward.1} parent=1 // pred_region
      %159 = dma.done [#allocation12], 256
    $region73: #{vgg19_mask_forward.1} parent=1 // pred_fallthru
      _
    // Predicated region
    $region74: #{vgg19_mask_forward.1} parent=1 // pred_check
      _
    $region75: #{vgg19_mask_forward.1} parent=1 // pred_check_branch
      %161 = sbr.rel (0) target = $region77
    $region76: #{vgg19_mask_forward.1} parent=1 // pred_region
      %162 = dma.done [#allocation15], 512
    $region77: #{vgg19_mask_forward.1} parent=1 // pred_fallthru
      _
    // Predicated region
    $region78: #{vgg19_mask_forward.1} parent=1 // pred_check
      _
    $region79: #{vgg19_mask_forward.1} parent=1 // pred_check_branch
      %164 = sbr.rel (0) target = $region81
    $region80: #{vgg19_mask_forward.1} parent=1 // pred_region
      %165 = dma.done [#allocation15], 128
    $region81: #{vgg19_mask_forward.1} parent=1 // pred_fallthru
      _
    %v166 = vld [vmem:[#allocation2] sm:$0xff]
    %v167 = vld [vmem:[#allocation2 + $0x8] sm:$0xff]
    %v168 = vld [vmem:[#allocation2 + $0x10] sm:$0xff]
    %v169 = vld [vmem:[#allocation2 + $0x18] sm:$0xff]
    %v170 = vld [vmem:[#allocation2 + $0x20] sm:$0xff]
    %v171 = vld [vmem:[#allocation2 + $0x28] sm:$0xff]
    %v172 = vld [vmem:[#allocation2 + $0x30] sm:$0xff]
    %v173 = vld [vmem:[#allocation2 + $0x38] sm:$0xff]
    %v174 = vld [vmem:[#allocation2 + $0x40] sm:$0xff]
    %v175 = vld [vmem:[#allocation2 + $0x48] sm:$0xff]
    %v176 = vld [vmem:[#allocation2 + $0x50] sm:$0xff]
    %v177 = vld [vmem:[#allocation2 + $0x58] sm:$0xff]
    %v178 = vld [vmem:[#allocation2 + $0x60] sm:$0xff]
    %v179 = vld [vmem:[#allocation2 + $0x68] sm:$0xff]
    %v180 = vld [vmem:[#allocation2 + $0x70] sm:$0xff]
    %v181 = vld [vmem:[#allocation2 + $0x78] sm:$0xff]
    %v182 = vld [vmem:[#allocation2 + $0x80] sm:$0xff]
    %v183 = vld [vmem:[#allocation2 + $0x88] sm:$0xff]
    %v184 = vld [vmem:[#allocation2 + $0x90] sm:$0xff]
    %v185 = vld [vmem:[#allocation2 + $0x98] sm:$0xff]
    %v186 = vld [vmem:[#allocation2 + $0xa0] sm:$0xff]
    %v187 = vld [vmem:[#allocation2 + $0xa8] sm:$0xff]
    %v188 = vld [vmem:[#allocation2 + $0xb0] sm:$0xff]
    %v189 = vld [vmem:[#allocation2 + $0xb8] sm:$0xff]
    %v190 = vld [vmem:[#allocation2 + $0xc0] sm:$0xff]
    %v191 = vld [vmem:[#allocation2 + $0xc8] sm:$0xff]
    %v192 = vld [vmem:[#allocation2 + $0xd0] sm:$0xff]
    %v193 = vld [vmem:[#allocation2 + $0xd8] sm:$0xff]
    %v194 = vld [vmem:[#allocation2 + $0xe0] sm:$0xff]
    %v195 = vld [vmem:[#allocation2 + $0xe8] sm:$0xff]
    %v196 = vld [vmem:[#allocation2 + $0xf0] sm:$0xff]
    %v197 = vld [vmem:[#allocation2 + $0xf8] sm:$0xff]
    %v198 = vld [vmem:[#allocation5] sm:$0xff]
    %v199 = vld [vmem:[#allocation5 + $0x8] sm:$0xff]
    %v200 = vld [vmem:[#allocation5 + $0x10] sm:$0xff]
    %v201 = vld [vmem:[#allocation5 + $0x18] sm:$0xff]
    %v202 = vld [vmem:[#allocation5 + $0x20] sm:$0xff]
    %v203 = vld [vmem:[#allocation5 + $0x28] sm:$0xff]
    %v204 = vld [vmem:[#allocation5 + $0x30] sm:$0xff]
    %v205 = vld [vmem:[#allocation5 + $0x38] sm:$0xff]
    %v206 = vld [vmem:[#allocation5 + $0x40] sm:$0xff]
    %v207 = vld [vmem:[#allocation5 + $0x48] sm:$0xff]
    %v208 = vld [vmem:[#allocation5 + $0x50] sm:$0xff]
    %v209 = vld [vmem:[#allocation5 + $0x58] sm:$0xff]
    %v210 = vld [vmem:[#allocation5 + $0x60] sm:$0xff]
    %v211 = vld [vmem:[#allocation5 + $0x68] sm:$0xff]
    %v212 = vld [vmem:[#allocation5 + $0x70] sm:$0xff]
    %v213 = vld [vmem:[#allocation5 + $0x78] sm:$0xff]
    %v214 = vld [vmem:[#allocation5 + $0x80] sm:$0xff]
    %v215 = vld [vmem:[#allocation5 + $0x88] sm:$0xff]
    %v216 = vld [vmem:[#allocation5 + $0x90] sm:$0xff]
    %v217 = vld [vmem:[#allocation5 + $0x98] sm:$0xff]
    %v218 = vld [vmem:[#allocation5 + $0xa0] sm:$0xff]
    %v219 = vld [vmem:[#allocation5 + $0xa8] sm:$0xff]
    %v220 = vld [vmem:[#allocation5 + $0xb0] sm:$0xff]
    %v221 = vld [vmem:[#allocation5 + $0xb8] sm:$0xff]
    %v222 = vld [vmem:[#allocation5 + $0xc0] sm:$0xff]
    %v223 = vld [vmem:[#allocation5 + $0xc8] sm:$0xff]
    %v224 = vld [vmem:[#allocation5 + $0xd0] sm:$0xff]
    %v225 = vld [vmem:[#allocation5 + $0xd8] sm:$0xff]
    %v226 = vld [vmem:[#allocation5 + $0xe0] sm:$0xff]
    %v227 = vld [vmem:[#allocation5 + $0xe8] sm:$0xff]
    %v228 = vld [vmem:[#allocation5 + $0xf0] sm:$0xff]
    %v229 = vld [vmem:[#allocation5 + $0xf8] sm:$0xff]
    %v230 = vld [vmem:[#allocation5 + $0x100] sm:$0xff]
    %v231 = vld [vmem:[#allocation5 + $0x108] sm:$0xff]
    %v232 = vld [vmem:[#allocation5 + $0x110] sm:$0xff]
    %v233 = vld [vmem:[#allocation5 + $0x118] sm:$0xff]
    %v234 = vld [vmem:[#allocation5 + $0x120] sm:$0xff]
    %v235 = vld [vmem:[#allocation5 + $0x128] sm:$0xff]
    %v236 = vld [vmem:[#allocation5 + $0x130] sm:$0xff]
    %v237 = vld [vmem:[#allocation5 + $0x138] sm:$0xff]
    %v238 = vld [vmem:[#allocation5 + $0x140] sm:$0xff]
    %v239 = vld [vmem:[#allocation5 + $0x148] sm:$0xff]
    %v240 = vld [vmem:[#allocation5 + $0x150] sm:$0xff]
    %v241 = vld [vmem:[#allocation5 + $0x158] sm:$0xff]
    %v242 = vld [vmem:[#allocation5 + $0x160] sm:$0xff]
    %v243 = vld [vmem:[#allocation5 + $0x168] sm:$0xff]
    %v244 = vld [vmem:[#allocation5 + $0x170] sm:$0xff]
    %v245 = vld [vmem:[#allocation5 + $0x178] sm:$0xff]
    %v246 = vld [vmem:[#allocation5 + $0x180] sm:$0xff]
    %v247 = vld [vmem:[#allocation5 + $0x188] sm:$0xff]
    %v248 = vld [vmem:[#allocation5 + $0x190] sm:$0xff]
    %v249 = vld [vmem:[#allocation5 + $0x198] sm:$0xff]
    %v250 = vld [vmem:[#allocation5 + $0x1a0] sm:$0xff]
    %v251 = vld [vmem:[#allocation5 + $0x1a8] sm:$0xff]
    %v252 = vld [vmem:[#allocation5 + $0x1b0] sm:$0xff]
    %v253 = vld [vmem:[#allocation5 + $0x1b8] sm:$0xff]
    %v254 = vld [vmem:[#allocation5 + $0x1c0] sm:$0xff]
    %v255 = vld [vmem:[#allocation5 + $0x1c8] sm:$0xff]
    %v256 = vld [vmem:[#allocation5 + $0x1d0] sm:$0xff]
    %v257 = vld [vmem:[#allocation5 + $0x1d8] sm:$0xff]
    %v258 = vld [vmem:[#allocation5 + $0x1e0] sm:$0xff]
    %v259 = vld [vmem:[#allocation5 + $0x1e8] sm:$0xff]
    %v260 = vld [vmem:[#allocation5 + $0x1f0] sm:$0xff]
    %v261 = vld [vmem:[#allocation5 + $0x1f8] sm:$0xff]
    %v262 = vld [vmem:[#allocation7] sm:$0xff]
    %v263 = vld [vmem:[#allocation7 + $0x8] sm:$0xff]
    %v264 = vld [vmem:[#allocation7 + $0x10] sm:$0xff]
    %v265 = vld [vmem:[#allocation7 + $0x18] sm:$0xff]
    %266 = vmatprep.subr.mxu0 0.0
    %267 = vmatpush1.msra.mxu0 %v181
    %268 = vmatprep.subr.mxu0 0.0
    %269 = vmatpush1.msra.mxu0 %v180
    %270 = vmatprep.subr.mxu0 0.0
    %271 = vmatpush1.msra.mxu0 %v179
    %272 = vmatprep.subr.mxu0 0.0
    %273 = vmatpush1.msra.mxu0 %v178
    %274 = vmatprep.subr.mxu0 0.0
    %275 = vmatpush1.msra.mxu0 %v177
    %276 = vmatprep.subr.mxu0 0.0
    %277 = vmatpush1.msra.mxu0 %v176
    %278 = vmatprep.subr.mxu0 0.0
    %279 = vmatpush1.msra.mxu0 %v175
    %280 = vmatprep.subr.mxu0 0.0
    %281 = vmatpush1.msra.mxu0 %v174
    %282 = vmatprep.subr.mxu0 0.0
    %283 = vmatpush1.msra.mxu0 %v173
    %284 = vmatprep.subr.mxu0 0.0
    %285 = vmatpush1.msra.mxu0 %v172
    %286 = vmatprep.subr.mxu0 0.0
    %287 = vmatpush1.msra.mxu0 %v171
    %288 = vmatprep.subr.mxu0 0.0
    %289 = vmatpush1.msra.mxu0 %v170
    %290 = vmatprep.subr.mxu0 0.0
    %291 = vmatpush1.msra.mxu0 %v169
    %292 = vmatprep.subr.mxu0 0.0
    %293 = vmatpush1.msra.mxu0 %v168
    %294 = vmatprep.subr.mxu0 0.0
    %295 = vmatpush1.msra.mxu0 %v167
    %296 = vmatprep.subr.mxu0 0.0
    %297 = vmatpush1.msra.mxu0 %v166
    %298 = vmatprep.subr.mxu0 0.0
    %299 = vmatpush2.msra.mxu0 %v197
    %300 = vmatprep.subr.mxu0 0.0
    %301 = vmatpush2.msra.mxu0 %v196
    %302 = vmatprep.subr.mxu0 0.0
    %303 = vmatpush2.msra.mxu0 %v195
    %304 = vmatprep.subr.mxu0 0.0
    %305 = vmatpush2.msra.mxu0 %v194
    %306 = vmatprep.subr.mxu0 0.0
    %307 = vmatpush2.msra.mxu0 %v193
    %308 = vmatprep.subr.mxu0 0.0
    %309 = vmatpush2.msra.mxu0 %v192
    %310 = vmatprep.subr.mxu0 0.0
    %311 = vmatpush2.msra.mxu0 %v191
    %312 = vmatprep.subr.mxu0 0.0
    %313 = vmatpush2.msra.mxu0 %v190
    %314 = vmatprep.subr.mxu0 0.0
    %315 = vmatpush2.msra.mxu0 %v189
    %316 = vmatprep.subr.mxu0 0.0
    %317 = vmatpush2.msra.mxu0 %v188
    %318 = vmatprep.subr.mxu0 0.0
    %319 = vmatpush2.msra.mxu0 %v187
    %320 = vmatprep.subr.mxu0 0.0
    %321 = vmatpush2.msra.mxu0 %v186
    %322 = vmatprep.subr.mxu0 0.0
    %323 = vmatpush2.msra.mxu0 %v185
    %324 = vmatprep.subr.mxu0 0.0
    %325 = vmatpush2.msra.mxu0 %v184
    %326 = vmatprep.subr.mxu0 0.0
    %327 = vmatpush2.msra.mxu0 %v183
    %328 = vmatprep.subr.mxu0 0.0
    %329 = vmatpush2.msra.mxu0 %v182
    %330 = vmatprep.mubr.f32.mxu0 %v199
    %331 = vmatmul.mubr.f32.gmra.mxu0 %v198
    %v332 = vpop.f32.mrf.mxu0
    %v333 = vadd.f32 0.0, %v332
    %v334 = vpop.f32.mrf.mxu0
    %335 = vmatprep.mubr.f32.mxu0 %v201
    %336 = vmatmul.mubr.f32.gmra.mxu0 %v200
    %v337 = vpop.f32.mrf.mxu0
    %v338 = vadd.f32 0.0, %v337
    %v339 = vpop.f32.mrf.mxu0
    %340 = vmatprep.mubr.f32.mxu0 %v203
    %341 = vmatmul.mubr.f32.gmra.mxu0 %v202
    %v342 = vpop.f32.mrf.mxu0
    %v343 = vadd.f32 0.0, %v342
    %v344 = vpop.f32.mrf.mxu0
    %345 = vmatprep.mubr.f32.mxu0 %v205
    %346 = vmatmul.mubr.f32.gmra.mxu0 %v204
    %v347 = vpop.f32.mrf.mxu0
    %v348 = vadd.f32 0.0, %v347
    %v349 = vpop.f32.mrf.mxu0
    %350 = vmatprep.mubr.f32.mxu0 %v207
    %351 = vmatmul.mubr.f32.gmra.mxu0 %v206
    %v352 = vpop.f32.mrf.mxu0
    %v353 = vadd.f32 0.0, %v352
    %v354 = vpop.f32.mrf.mxu0
    %355 = vmatprep.mubr.f32.mxu0 %v209
    %356 = vmatmul.mubr.f32.gmra.mxu0 %v208
    %v357 = vpop.f32.mrf.mxu0
    %v358 = vadd.f32 0.0, %v357
    %v359 = vpop.f32.mrf.mxu0
    %360 = vmatprep.mubr.f32.mxu0 %v211
    %361 = vmatmul.mubr.f32.gmra.mxu0 %v210
    %v362 = vpop.f32.mrf.mxu0
    %v363 = vadd.f32 0.0, %v362
    %v364 = vpop.f32.mrf.mxu0
    %365 = vmatprep.mubr.f32.mxu0 %v213
    %366 = vmatmul.mubr.f32.gmra.mxu0 %v212
    %v367 = vpop.f32.mrf.mxu0
    %v368 = vadd.f32 0.0, %v367
    %v369 = vpop.f32.mrf.mxu0
    %370 = vmatprep.mubr.f32.mxu0 %v215
    %371 = vmatmul.mubr.f32.gmra.mxu0 %v214
    %v372 = vpop.f32.mrf.mxu0
    %v373 = vadd.f32 0.0, %v372
    %v374 = vpop.f32.mrf.mxu0
    %375 = vmatprep.mubr.f32.mxu0 %v217
    %376 = vmatmul.mubr.f32.gmra.mxu0 %v216
    %v377 = vpop.f32.mrf.mxu0
    %v378 = vadd.f32 0.0, %v377
    %v379 = vpop.f32.mrf.mxu0
    %380 = vmatprep.mubr.f32.mxu0 %v219
    %381 = vmatmul.mubr.f32.gmra.mxu0 %v218
    %v382 = vpop.f32.mrf.mxu0
    %v383 = vadd.f32 0.0, %v382
    %v384 = vpop.f32.mrf.mxu0
    %385 = vmatprep.mubr.f32.mxu0 %v221
    %386 = vmatmul.mubr.f32.gmra.mxu0 %v220
    %v387 = vpop.f32.mrf.mxu0
    %v388 = vadd.f32 0.0, %v387
    %v389 = vpop.f32.mrf.mxu0
    %390 = vmatprep.mubr.f32.mxu0 %v223
    %391 = vmatmul.mubr.f32.gmra.mxu0 %v222
    %v392 = vpop.f32.mrf.mxu0
    %v393 = vadd.f32 0.0, %v392
    %v394 = vpop.f32.mrf.mxu0
    %395 = vmatprep.mubr.f32.mxu0 %v225
    %396 = vmatmul.mubr.f32.gmra.mxu0 %v224
    %v397 = vpop.f32.mrf.mxu0
    %v398 = vadd.f32 0.0, %v397
    %v399 = vpop.f32.mrf.mxu0
    %400 = vmatprep.mubr.f32.mxu0 %v227
    %401 = vmatmul.mubr.f32.gmra.mxu0 %v226
    %v402 = vpop.f32.mrf.mxu0
    %v403 = vadd.f32 0.0, %v402
    %v404 = vpop.f32.mrf.mxu0
    %405 = vmatprep.mubr.f32.mxu0 %v229
    %406 = vmatmul.mubr.f32.gmra.mxu0 %v228
    %v407 = vpop.f32.mrf.mxu0
    %v408 = vadd.f32 0.0, %v407
    %v409 = vpop.f32.mrf.mxu0
    %410 = vmatprep.mubr.f32.mxu0 %v231
    %411 = vmatmul.mubr.f32.gmra.mxu0 %v230
    %v412 = vpop.f32.mrf.mxu0
    %v413 = vadd.f32 0.0, %v412
    %v414 = vpop.f32.mrf.mxu0
    %415 = vmatprep.mubr.f32.mxu0 %v233
    %416 = vmatmul.mubr.f32.gmra.mxu0 %v232
    %v417 = vpop.f32.mrf.mxu0
    %v418 = vadd.f32 0.0, %v417
    %v419 = vpop.f32.mrf.mxu0
    %420 = vmatprep.mubr.f32.mxu0 %v235
    %421 = vmatmul.mubr.f32.gmra.mxu0 %v234
    %v422 = vpop.f32.mrf.mxu0
    %v423 = vadd.f32 0.0, %v422
    %v424 = vpop.f32.mrf.mxu0
    %425 = vmatprep.mubr.f32.mxu0 %v237
    %426 = vmatmul.mubr.f32.gmra.mxu0 %v236
    %v427 = vpop.f32.mrf.mxu0
    %v428 = vadd.f32 0.0, %v427
    %v429 = vpop.f32.mrf.mxu0
    %430 = vmatprep.mubr.f32.mxu0 %v239
    %431 = vmatmul.mubr.f32.gmra.mxu0 %v238
    %v432 = vpop.f32.mrf.mxu0
    %v433 = vadd.f32 0.0, %v432
    %v434 = vpop.f32.mrf.mxu0
    %435 = vmatprep.mubr.f32.mxu0 %v241
    %436 = vmatmul.mubr.f32.gmra.mxu0 %v240
    %v437 = vpop.f32.mrf.mxu0
    %v438 = vadd.f32 0.0, %v437
    %v439 = vpop.f32.mrf.mxu0
    %440 = vmatprep.mubr.f32.mxu0 %v243
    %441 = vmatmul.mubr.f32.gmra.mxu0 %v242
    %v442 = vpop.f32.mrf.mxu0
    %v443 = vadd.f32 0.0, %v442
    %v444 = vpop.f32.mrf.mxu0
    %445 = vmatprep.mubr.f32.mxu0 %v245
    %446 = vmatmul.mubr.f32.gmra.mxu0 %v244
    %v447 = vpop.f32.mrf.mxu0
    %v448 = vadd.f32 0.0, %v447
    %v449 = vpop.f32.mrf.mxu0
    %450 = vmatprep.mubr.f32.mxu0 %v247
    %451 = vmatmul.mubr.f32.gmra.mxu0 %v246
    %v452 = vpop.f32.mrf.mxu0
    %v453 = vadd.f32 0.0, %v452
    %v454 = vpop.f32.mrf.mxu0
    %455 = vmatprep.mubr.f32.mxu0 %v249
    %456 = vmatmul.mubr.f32.gmra.mxu0 %v248
    %v457 = vpop.f32.mrf.mxu0
    %v458 = vadd.f32 0.0, %v457
    %v459 = vpop.f32.mrf.mxu0
    %460 = vmatprep.mubr.f32.mxu0 %v251
    %461 = vmatmul.mubr.f32.gmra.mxu0 %v250
    %v462 = vpop.f32.mrf.mxu0
    %v463 = vadd.f32 0.0, %v462
    %v464 = vpop.f32.mrf.mxu0
    %465 = vmatprep.mubr.f32.mxu0 %v253
    %466 = vmatmul.mubr.f32.gmra.mxu0 %v252
    %v467 = vpop.f32.mrf.mxu0
    %v468 = vadd.f32 0.0, %v467
    %v469 = vpop.f32.mrf.mxu0
    %470 = vmatprep.mubr.f32.mxu0 %v255
    %471 = vmatmul.mubr.f32.gmra.mxu0 %v254
    %v472 = vpop.f32.mrf.mxu0
    %v473 = vadd.f32 0.0, %v472
    %v474 = vpop.f32.mrf.mxu0
    %475 = vmatprep.mubr.f32.mxu0 %v257
    %476 = vmatmul.mubr.f32.gmra.mxu0 %v256
    %v477 = vpop.f32.mrf.mxu0
    %v478 = vadd.f32 0.0, %v477
    %v479 = vpop.f32.mrf.mxu0
    %480 = vmatprep.mubr.f32.mxu0 %v259
    %481 = vmatmul.mubr.f32.gmra.mxu0 %v258
    %v482 = vpop.f32.mrf.mxu0
    %v483 = vadd.f32 0.0, %v482
    %v484 = vpop.f32.mrf.mxu0
    %485 = vmatprep.mubr.f32.mxu0 %v261
    %486 = vmatmul.mubr.f32.gmra.mxu0 %v260
    %v487 = vpop.f32.mrf.mxu0
    %v488 = vadd.f32 0.0, %v487
    %v489 = vpop.f32.mrf.mxu0
    %490 = vdwg.mxu0
    %vm491 = vcmask 261120
    %v493 = vsel %vm491, %v333, 0
    %v496 = vsel %vm491, %v338, 0
    %v499 = vsel %vm491, %v343, 0
    %v502 = vsel %vm491, %v348, 0
    %v505 = vsel %vm491, %v353, 0
    %v508 = vsel %vm491, %v358, 0
    %v511 = vsel %vm491, %v363, 0
    %v514 = vsel %vm491, %v368, 0
    %v517 = vsel %vm491, %v373, 0
    %v520 = vsel %vm491, %v378, 0
    %v523 = vsel %vm491, %v383, 0
    %v526 = vsel %vm491, %v388, 0
    %v529 = vsel %vm491, %v393, 0
    %v532 = vsel %vm491, %v398, 0
    %v535 = vsel %vm491, %v403, 0
    %v538 = vsel %vm491, %v408, 0
    %v541 = vsel %vm491, %v413, 0
    %v544 = vsel %vm491, %v418, 0
    %v547 = vsel %vm491, %v423, 0
    %v550 = vsel %vm491, %v428, 0
    %v553 = vsel %vm491, %v433, 0
    %v556 = vsel %vm491, %v438, 0
    %v559 = vsel %vm491, %v443, 0
    %v562 = vsel %vm491, %v448, 0
    %v565 = vsel %vm491, %v453, 0
    %v568 = vsel %vm491, %v458, 0
    %v571 = vsel %vm491, %v463, 0
    %v574 = vsel %vm491, %v468, 0
    %v577 = vsel %vm491, %v473, 0
    %v580 = vsel %vm491, %v478, 0
    %v583 = vsel %vm491, %v483, 0
    %v586 = vsel %vm491, %v488, 0
    %588 = vmatprep.subr.mxu0 0.0
    %589 = vmatpush1.msra.mxu0 0.0
    %590 = vmatprep.subr.mxu0 0.0
    %591 = vmatpush1.msra.mxu0 0.0
    %592 = vmatprep.subr.mxu0 0.0
    %593 = vmatpush1.msra.mxu0 0.0
    %594 = vmatprep.subr.mxu0 0.0
    %595 = vmatpush1.msra.mxu0 0.0
    %596 = vmatprep.subr.mxu0 0.0
    %597 = vmatpush1.msra.mxu0 0.0
    %598 = vmatprep.subr.mxu0 0.0
    %599 = vmatpush1.msra.mxu0 0.0
    %600 = vmatprep.subr.mxu0 0.0
    %601 = vmatpush1.msra.mxu0 0.0
    %602 = vmatprep.subr.mxu0 0.0
    %603 = vmatpush1.msra.mxu0 0.0
    %604 = vmatprep.subr.mxu0 0.0
    %605 = vmatpush1.msra.mxu0 0.0
    %606 = vmatprep.subr.mxu0 0.0
    %607 = vmatpush1.msra.mxu0 0.0
    %608 = vmatprep.subr.mxu0 0.0
    %609 = vmatpush1.msra.mxu0 0.0
    %610 = vmatprep.subr.mxu0 0.0
    %611 = vmatpush1.msra.mxu0 0.0
    %612 = vmatprep.subr.mxu0 0.0
    %613 = vmatpush1.msra.mxu0 %v265
    %614 = vmatprep.subr.mxu0 0.0
    %615 = vmatpush1.msra.mxu0 %v264
    %616 = vmatprep.subr.mxu0 0.0
    %617 = vmatpush1.msra.mxu0 %v263
    %618 = vmatprep.subr.mxu0 0.0
    %619 = vmatpush1.msra.mxu0 %v262
    %620 = vmatprep.subr.mxu0 0.0
    %621 = vmatpush2.msra.mxu0 0.0
    %622 = vmatprep.subr.mxu0 0.0
    %623 = vmatpush2.msra.mxu0 0.0
    %624 = vmatprep.subr.mxu0 0.0
    %625 = vmatpush2.msra.mxu0 0.0
    %626 = vmatprep.subr.mxu0 0.0
    %627 = vmatpush2.msra.mxu0 0.0
    %628 = vmatprep.subr.mxu0 0.0
    %629 = vmatpush2.msra.mxu0 0.0
    %630 = vmatprep.subr.mxu0 0.0
    %631 = vmatpush2.msra.mxu0 0.0
    %632 = vmatprep.subr.mxu0 0.0
    %633 = vmatpush2.msra.mxu0 0.0
    %634 = vmatprep.subr.mxu0 0.0
    %635 = vmatpush2.msra.mxu0 0.0
    %636 = vmatprep.subr.mxu0 0.0
    %637 = vmatpush2.msra.mxu0 0.0
    %638 = vmatprep.subr.mxu0 0.0
    %639 = vmatpush2.msra.mxu0 0.0
    %640 = vmatprep.subr.mxu0 0.0
    %641 = vmatpush2.msra.mxu0 0.0
    %642 = vmatprep.subr.mxu0 0.0
    %643 = vmatpush2.msra.mxu0 0.0
    %644 = vmatprep.subr.mxu0 0.0
    %645 = vmatpush2.msra.mxu0 0.0
    %646 = vmatprep.subr.mxu0 0.0
    %647 = vmatpush2.msra.mxu0 0.0
    %648 = vmatprep.subr.mxu0 0.0
    %649 = vmatpush2.msra.mxu0 0.0
    %650 = vmatprep.subr.mxu0 0.0
    %651 = vmatpush2.msra.mxu0 0.0
    %652 = vmatprep.mubr.f32.mxu0 0.0
    %653 = vmatmul.mubr.f32.gmra.mxu0 %v493
    %v654 = vpop.f32.mrf.mxu0
    %v655 = vadd.f32 0.0, %v654
    %v656 = vpop.f32.mrf.mxu0
    %657 = vmatprep.mubr.f32.mxu0 0.0
    %658 = vmatmul.mubr.f32.gmra.mxu0 %v496
    %v659 = vpop.f32.mrf.mxu0
    %v660 = vadd.f32 0.0, %v659
    %v661 = vpop.f32.mrf.mxu0
    %662 = vmatprep.mubr.f32.mxu0 0.0
    %663 = vmatmul.mubr.f32.gmra.mxu0 %v499
    %v664 = vpop.f32.mrf.mxu0
    %v665 = vadd.f32 0.0, %v664
    %v666 = vpop.f32.mrf.mxu0
    %667 = vmatprep.mubr.f32.mxu0 0.0
    %668 = vmatmul.mubr.f32.gmra.mxu0 %v502
    %v669 = vpop.f32.mrf.mxu0
    %v670 = vadd.f32 0.0, %v669
    %v671 = vpop.f32.mrf.mxu0
    %672 = vmatprep.mubr.f32.mxu0 0.0
    %673 = vmatmul.mubr.f32.gmra.mxu0 %v505
    %v674 = vpop.f32.mrf.mxu0
    %v675 = vadd.f32 0.0, %v674
    %v676 = vpop.f32.mrf.mxu0
    %677 = vmatprep.mubr.f32.mxu0 0.0
    %678 = vmatmul.mubr.f32.gmra.mxu0 %v508
    %v679 = vpop.f32.mrf.mxu0
    %v680 = vadd.f32 0.0, %v679
    %v681 = vpop.f32.mrf.mxu0
    %682 = vmatprep.mubr.f32.mxu0 0.0
    %683 = vmatmul.mubr.f32.gmra.mxu0 %v511
    %v684 = vpop.f32.mrf.mxu0
    %v685 = vadd.f32 0.0, %v684
    %v686 = vpop.f32.mrf.mxu0
    %687 = vmatprep.mubr.f32.mxu0 0.0
    %688 = vmatmul.mubr.f32.gmra.mxu0 %v514
    %v689 = vpop.f32.mrf.mxu0
    %v690 = vadd.f32 0.0, %v689
    %v691 = vpop.f32.mrf.mxu0
    %692 = vmatprep.mubr.f32.mxu0 0.0
    %693 = vmatmul.mubr.f32.gmra.mxu0 %v517
    %v694 = vpop.f32.mrf.mxu0
    %v695 = vadd.f32 0.0, %v694
    %v696 = vpop.f32.mrf.mxu0
    %697 = vmatprep.mubr.f32.mxu0 0.0
    %698 = vmatmul.mubr.f32.gmra.mxu0 %v520
    %v699 = vpop.f32.mrf.mxu0
    %v700 = vadd.f32 0.0, %v699
    %v701 = vpop.f32.mrf.mxu0
    %702 = vmatprep.mubr.f32.mxu0 0.0
    %703 = vmatmul.mubr.f32.gmra.mxu0 %v523
    %v704 = vpop.f32.mrf.mxu0
    %v705 = vadd.f32 0.0, %v704
    %v706 = vpop.f32.mrf.mxu0
    %707 = vmatprep.mubr.f32.mxu0 0.0
    %708 = vmatmul.mubr.f32.gmra.mxu0 %v526
    %v709 = vpop.f32.mrf.mxu0
    %v710 = vadd.f32 0.0, %v709
    %v711 = vpop.f32.mrf.mxu0
    %712 = vmatprep.mubr.f32.mxu0 0.0
    %713 = vmatmul.mubr.f32.gmra.mxu0 %v529
    %v714 = vpop.f32.mrf.mxu0
    %v715 = vadd.f32 0.0, %v714
    %v716 = vpop.f32.mrf.mxu0
    %717 = vmatprep.mubr.f32.mxu0 0.0
    %718 = vmatmul.mubr.f32.gmra.mxu0 %v532
    %v719 = vpop.f32.mrf.mxu0
    %v720 = vadd.f32 0.0, %v719
    %v721 = vpop.f32.mrf.mxu0
    %722 = vmatprep.mubr.f32.mxu0 0.0
    %723 = vmatmul.mubr.f32.gmra.mxu0 %v535
    %v724 = vpop.f32.mrf.mxu0
    %v725 = vadd.f32 0.0, %v724
    %v726 = vpop.f32.mrf.mxu0
    %727 = vmatprep.mubr.f32.mxu0 0.0
    %728 = vmatmul.mubr.f32.gmra.mxu0 %v538
    %v729 = vpop.f32.mrf.mxu0
    %v730 = vadd.f32 0.0, %v729
    %v731 = vpop.f32.mrf.mxu0
    %732 = vmatprep.mubr.f32.mxu0 0.0
    %733 = vmatmul.mubr.f32.gmra.mxu0 %v541
    %v734 = vpop.f32.mrf.mxu0
    %v735 = vadd.f32 0.0, %v734
    %v736 = vpop.f32.mrf.mxu0
    %737 = vmatprep.mubr.f32.mxu0 0.0
    %738 = vmatmul.mubr.f32.gmra.mxu0 %v544
    %v739 = vpop.f32.mrf.mxu0
    %v740 = vadd.f32 0.0, %v739
    %v741 = vpop.f32.mrf.mxu0
    %742 = vmatprep.mubr.f32.mxu0 0.0
    %743 = vmatmul.mubr.f32.gmra.mxu0 %v547
    %v744 = vpop.f32.mrf.mxu0
    %v745 = vadd.f32 0.0, %v744
    %v746 = vpop.f32.mrf.mxu0
    %747 = vmatprep.mubr.f32.mxu0 0.0
    %748 = vmatmul.mubr.f32.gmra.mxu0 %v550
    %v749 = vpop.f32.mrf.mxu0
    %v750 = vadd.f32 0.0, %v749
    %v751 = vpop.f32.mrf.mxu0
    %752 = vmatprep.mubr.f32.mxu0 0.0
    %753 = vmatmul.mubr.f32.gmra.mxu0 %v553
    %v754 = vpop.f32.mrf.mxu0
    %v755 = vadd.f32 0.0, %v754
    %v756 = vpop.f32.mrf.mxu0
    %757 = vmatprep.mubr.f32.mxu0 0.0
    %758 = vmatmul.mubr.f32.gmra.mxu0 %v556
    %v759 = vpop.f32.mrf.mxu0
    %v760 = vadd.f32 0.0, %v759
    %v761 = vpop.f32.mrf.mxu0
    %762 = vmatprep.mubr.f32.mxu0 0.0
    %763 = vmatmul.mubr.f32.gmra.mxu0 %v559
    %v764 = vpop.f32.mrf.mxu0
    %v765 = vadd.f32 0.0, %v764
    %v766 = vpop.f32.mrf.mxu0
    %767 = vmatprep.mubr.f32.mxu0 0.0
    %768 = vmatmul.mubr.f32.gmra.mxu0 %v562
    %v769 = vpop.f32.mrf.mxu0
    %v770 = vadd.f32 0.0, %v769
    %v771 = vpop.f32.mrf.mxu0
    %772 = vmatprep.mubr.f32.mxu0 0.0
    %773 = vmatmul.mubr.f32.gmra.mxu0 %v565
    %v774 = vpop.f32.mrf.mxu0
    %v775 = vadd.f32 0.0, %v774
    %v776 = vpop.f32.mrf.mxu0
    %777 = vmatprep.mubr.f32.mxu0 0.0
    %778 = vmatmul.mubr.f32.gmra.mxu0 %v568
    %v779 = vpop.f32.mrf.mxu0
    %v780 = vadd.f32 0.0, %v779
    %v781 = vpop.f32.mrf.mxu0
    %782 = vmatprep.mubr.f32.mxu0 0.0
    %783 = vmatmul.mubr.f32.gmra.mxu0 %v571
    %v784 = vpop.f32.mrf.mxu0
    %v785 = vadd.f32 0.0, %v784
    %v786 = vpop.f32.mrf.mxu0
    %787 = vmatprep.mubr.f32.mxu0 0.0
    %788 = vmatmul.mubr.f32.gmra.mxu0 %v574
    %v789 = vpop.f32.mrf.mxu0
    %v790 = vadd.f32 0.0, %v789
    %v791 = vpop.f32.mrf.mxu0
    %792 = vmatprep.mubr.f32.mxu0 0.0
    %793 = vmatmul.mubr.f32.gmra.mxu0 %v577
    %v794 = vpop.f32.mrf.mxu0
    %v795 = vadd.f32 0.0, %v794
    %v796 = vpop.f32.mrf.mxu0
    %797 = vmatprep.mubr.f32.mxu0 0.0
    %798 = vmatmul.mubr.f32.gmra.mxu0 %v580
    %v799 = vpop.f32.mrf.mxu0
    %v800 = vadd.f32 0.0, %v799
    %v801 = vpop.f32.mrf.mxu0
    %802 = vmatprep.mubr.f32.mxu0 0.0
    %803 = vmatmul.mubr.f32.gmra.mxu0 %v583
    %v804 = vpop.f32.mrf.mxu0
    %v805 = vadd.f32 0.0, %v804
    %v806 = vpop.f32.mrf.mxu0
    %807 = vmatprep.mubr.f32.mxu0 0.0
    %808 = vmatmul.mubr.f32.gmra.mxu0 %v586
    %v809 = vpop.f32.mrf.mxu0
    %v810 = vadd.f32 0.0, %v809
    %v811 = vpop.f32.mrf.mxu0
    %812 = vdwg.mxu0
    %813 = vst.msk [vmem:[#allocation17] sm:$0xff] %vm491, %v655
    %814 = vst.msk [vmem:[#allocation17 + $0x8] sm:$0xff] %vm491, %v660
    %815 = vst.msk [vmem:[#allocation17 + $0x10] sm:$0xff] %vm491, %v665
    %816 = vst.msk [vmem:[#allocation17 + $0x18] sm:$0xff] %vm491, %v670
    %817 = vst.msk [vmem:[#allocation17 + $0x20] sm:$0xff] %vm491, %v675
    %818 = vst.msk [vmem:[#allocation17 + $0x28] sm:$0xff] %vm491, %v680
    %819 = vst.msk [vmem:[#allocation17 + $0x30] sm:$0xff] %vm491, %v685
    %820 = vst.msk [vmem:[#allocation17 + $0x38] sm:$0xff] %vm491, %v690
    %821 = vst.msk [vmem:[#allocation17 + $0x40] sm:$0xff] %vm491, %v695
    %822 = vst.msk [vmem:[#allocation17 + $0x48] sm:$0xff] %vm491, %v700
    %823 = vst.msk [vmem:[#allocation17 + $0x50] sm:$0xff] %vm491, %v705
    %824 = vst.msk [vmem:[#allocation17 + $0x58] sm:$0xff] %vm491, %v710
    %825 = vst.msk [vmem:[#allocation17 + $0x60] sm:$0xff] %vm491, %v715
    %826 = vst.msk [vmem:[#allocation17 + $0x68] sm:$0xff] %vm491, %v720
    %827 = vst.msk [vmem:[#allocation17 + $0x70] sm:$0xff] %vm491, %v725
    %828 = vst.msk [vmem:[#allocation17 + $0x78] sm:$0xff] %vm491, %v730
    %829 = vst.msk [vmem:[#allocation17 + $0x80] sm:$0xff] %vm491, %v735
    %830 = vst.msk [vmem:[#allocation17 + $0x88] sm:$0xff] %vm491, %v740
    %831 = vst.msk [vmem:[#allocation17 + $0x90] sm:$0xff] %vm491, %v745
    %832 = vst.msk [vmem:[#allocation17 + $0x98] sm:$0xff] %vm491, %v750
    %833 = vst.msk [vmem:[#allocation17 + $0xa0] sm:$0xff] %vm491, %v755
    %834 = vst.msk [vmem:[#allocation17 + $0xa8] sm:$0xff] %vm491, %v760
    %835 = vst.msk [vmem:[#allocation17 + $0xb0] sm:$0xff] %vm491, %v765
    %836 = vst.msk [vmem:[#allocation17 + $0xb8] sm:$0xff] %vm491, %v770
    %837 = vst.msk [vmem:[#allocation17 + $0xc0] sm:$0xff] %vm491, %v775
    %838 = vst.msk [vmem:[#allocation17 + $0xc8] sm:$0xff] %vm491, %v780
    %839 = vst.msk [vmem:[#allocation17 + $0xd0] sm:$0xff] %vm491, %v785
    %840 = vst.msk [vmem:[#allocation17 + $0xd8] sm:$0xff] %vm491, %v790
    %841 = vst.msk [vmem:[#allocation17 + $0xe0] sm:$0xff] %vm491, %v795
    %842 = vst.msk [vmem:[#allocation17 + $0xe8] sm:$0xff] %vm491, %v800
    %843 = vst.msk [vmem:[#allocation17 + $0xf0] sm:$0xff] %vm491, %v805
    %844 = vst.msk [vmem:[#allocation17 + $0xf8] sm:$0xff] %vm491, %v810
    %v845 = vld [vmem:[#allocation8] sm:$0xff]
    %v846 = vld [vmem:[#allocation8 + $0x8] sm:$0xff]
    %v847 = vld [vmem:[#allocation8 + $0x10] sm:$0xff]
    %v848 = vld [vmem:[#allocation8 + $0x18] sm:$0xff]
    %v849 = vld [vmem:[#allocation8 + $0x20] sm:$0xff]
    %v850 = vld [vmem:[#allocation8 + $0x28] sm:$0xff]
    %v851 = vld [vmem:[#allocation8 + $0x30] sm:$0xff]
    %v852 = vld [vmem:[#allocation8 + $0x38] sm:$0xff]
    %v853 = vld [vmem:[#allocation8 + $0x40] sm:$0xff]
    %v854 = vld [vmem:[#allocation8 + $0x48] sm:$0xff]
    %v855 = vld [vmem:[#allocation8 + $0x50] sm:$0xff]
    %v856 = vld [vmem:[#allocation8 + $0x58] sm:$0xff]
    %v857 = vld [vmem:[#allocation8 + $0x60] sm:$0xff]
    %v858 = vld [vmem:[#allocation8 + $0x68] sm:$0xff]
    %v859 = vld [vmem:[#allocation8 + $0x70] sm:$0xff]
    %v860 = vld [vmem:[#allocation8 + $0x78] sm:$0xff]
    %v861 = vld [vmem:[#allocation8 + $0x80] sm:$0xff]
    %v862 = vld [vmem:[#allocation8 + $0x88] sm:$0xff]
    %v863 = vld [vmem:[#allocation8 + $0x90] sm:$0xff]
    %v864 = vld [vmem:[#allocation8 + $0x98] sm:$0xff]
    %v865 = vld [vmem:[#allocation8 + $0xa0] sm:$0xff]
    %v866 = vld [vmem:[#allocation8 + $0xa8] sm:$0xff]
    %v867 = vld [vmem:[#allocation8 + $0xb0] sm:$0xff]
    %v868 = vld [vmem:[#allocation8 + $0xb8] sm:$0xff]
    %v869 = vld [vmem:[#allocation8 + $0xc0] sm:$0xff]
    %v870 = vld [vmem:[#allocation8 + $0xc8] sm:$0xff]
    %v871 = vld [vmem:[#allocation8 + $0xd0] sm:$0xff]
    %v872 = vld [vmem:[#allocation8 + $0xd8] sm:$0xff]
    %v873 = vld [vmem:[#allocation8 + $0xe0] sm:$0xff]
    %v874 = vld [vmem:[#allocation8 + $0xe8] sm:$0xff]
    %v875 = vld [vmem:[#allocation8 + $0xf0] sm:$0xff]
    %v876 = vld [vmem:[#allocation8 + $0xf8] sm:$0xff]
    %v877 = vld [vmem:[#allocation10] sm:$0xff]
    %v878 = vld [vmem:[#allocation10 + $0x8] sm:$0xff]
    %v879 = vld [vmem:[#allocation10 + $0x10] sm:$0xff]
    %v880 = vld [vmem:[#allocation10 + $0x18] sm:$0xff]
    %881 = vmatprep.subr.mxu0 0.0
    %882 = vmatpush1.msra.mxu0 %v730
    %883 = vmatprep.subr.mxu0 0.0
    %884 = vmatpush1.msra.mxu0 %v725
    %885 = vmatprep.subr.mxu0 0.0
    %886 = vmatpush1.msra.mxu0 %v720
    %887 = vmatprep.subr.mxu0 0.0
    %888 = vmatpush1.msra.mxu0 %v715
    %889 = vmatprep.subr.mxu0 0.0
    %890 = vmatpush1.msra.mxu0 %v710
    %891 = vmatprep.subr.mxu0 0.0
    %892 = vmatpush1.msra.mxu0 %v705
    %893 = vmatprep.subr.mxu0 0.0
    %894 = vmatpush1.msra.mxu0 %v700
    %895 = vmatprep.subr.mxu0 0.0
    %896 = vmatpush1.msra.mxu0 %v695
    %897 = vmatprep.subr.mxu0 0.0
    %898 = vmatpush1.msra.mxu0 %v690
    %899 = vmatprep.subr.mxu0 0.0
    %900 = vmatpush1.msra.mxu0 %v685
    %901 = vmatprep.subr.mxu0 0.0
    %902 = vmatpush1.msra.mxu0 %v680
    %903 = vmatprep.subr.mxu0 0.0
    %904 = vmatpush1.msra.mxu0 %v675
    %905 = vmatprep.subr.mxu0 0.0
    %906 = vmatpush1.msra.mxu0 %v670
    %907 = vmatprep.subr.mxu0 0.0
    %908 = vmatpush1.msra.mxu0 %v665
    %909 = vmatprep.subr.mxu0 0.0
    %910 = vmatpush1.msra.mxu0 %v660
    %911 = vmatprep.subr.mxu0 0.0
    %912 = vmatpush1.msra.mxu0 %v655
    %913 = vmatprep.subr.mxu0 0.0
    %914 = vmatpush2.msra.mxu0 %v810
    %915 = vmatprep.subr.mxu0 0.0
    %916 = vmatpush2.msra.mxu0 %v805
    %917 = vmatprep.subr.mxu0 0.0
    %918 = vmatpush2.msra.mxu0 %v800
    %919 = vmatprep.subr.mxu0 0.0
    %920 = vmatpush2.msra.mxu0 %v795
    %921 = vmatprep.subr.mxu0 0.0
    %922 = vmatpush2.msra.mxu0 %v790
    %923 = vmatprep.subr.mxu0 0.0
    %924 = vmatpush2.msra.mxu0 %v785
    %925 = vmatprep.subr.mxu0 0.0
    %926 = vmatpush2.msra.mxu0 %v780
    %927 = vmatprep.subr.mxu0 0.0
    %928 = vmatpush2.msra.mxu0 %v775
    %929 = vmatprep.subr.mxu0 0.0
    %930 = vmatpush2.msra.mxu0 %v770
    %931 = vmatprep.subr.mxu0 0.0
    %932 = vmatpush2.msra.mxu0 %v765
    %933 = vmatprep.subr.mxu0 0.0
    %934 = vmatpush2.msra.mxu0 %v760
    %935 = vmatprep.subr.mxu0 0.0
    %936 = vmatpush2.msra.mxu0 %v755
    %937 = vmatprep.subr.mxu0 0.0
    %938 = vmatpush2.msra.mxu0 %v750
    %939 = vmatprep.subr.mxu0 0.0
    %940 = vmatpush2.msra.mxu0 %v745
    %941 = vmatprep.subr.mxu0 0.0
    %942 = vmatpush2.msra.mxu0 %v740
    %943 = vmatprep.subr.mxu0 0.0
    %944 = vmatpush2.msra.mxu0 %v735
    %945 = vmatprep.mubr.f32.mxu0 %v846
    %946 = vmatmul.mubr.f32.gmra.mxu0 %v845
    %v947 = vpop.f32.mrf.mxu0
    %v948 = vadd.f32 0.0, %v947
    %v949 = vpop.f32.mrf.mxu0
    %950 = vmatprep.mubr.f32.mxu0 %v848
    %951 = vmatmul.mubr.f32.gmra.mxu0 %v847
    %v952 = vpop.f32.mrf.mxu0
    %v953 = vadd.f32 0.0, %v952
    %v954 = vpop.f32.mrf.mxu0
    %955 = vmatprep.mubr.f32.mxu0 %v850
    %956 = vmatmul.mubr.f32.gmra.mxu0 %v849
    %v957 = vpop.f32.mrf.mxu0
    %v958 = vadd.f32 0.0, %v957
    %v959 = vpop.f32.mrf.mxu0
    %960 = vmatprep.mubr.f32.mxu0 %v852
    %961 = vmatmul.mubr.f32.gmra.mxu0 %v851
    %v962 = vpop.f32.mrf.mxu0
    %v963 = vadd.f32 0.0, %v962
    %v964 = vpop.f32.mrf.mxu0
    %965 = vmatprep.mubr.f32.mxu0 %v854
    %966 = vmatmul.mubr.f32.gmra.mxu0 %v853
    %v967 = vpop.f32.mrf.mxu0
    %v968 = vadd.f32 0.0, %v967
    %v969 = vpop.f32.mrf.mxu0
    %970 = vmatprep.mubr.f32.mxu0 %v856
    %971 = vmatmul.mubr.f32.gmra.mxu0 %v855
    %v972 = vpop.f32.mrf.mxu0
    %v973 = vadd.f32 0.0, %v972
    %v974 = vpop.f32.mrf.mxu0
    %975 = vmatprep.mubr.f32.mxu0 %v858
    %976 = vmatmul.mubr.f32.gmra.mxu0 %v857
    %v977 = vpop.f32.mrf.mxu0
    %v978 = vadd.f32 0.0, %v977
    %v979 = vpop.f32.mrf.mxu0
    %980 = vmatprep.mubr.f32.mxu0 %v860
    %981 = vmatmul.mubr.f32.gmra.mxu0 %v859
    %v982 = vpop.f32.mrf.mxu0
    %v983 = vadd.f32 0.0, %v982
    %v984 = vpop.f32.mrf.mxu0
    %985 = vmatprep.mubr.f32.mxu0 %v862
    %986 = vmatmul.mubr.f32.gmra.mxu0 %v861
    %v987 = vpop.f32.mrf.mxu0
    %v988 = vadd.f32 0.0, %v987
    %v989 = vpop.f32.mrf.mxu0
    %990 = vmatprep.mubr.f32.mxu0 %v864
    %991 = vmatmul.mubr.f32.gmra.mxu0 %v863
    %v992 = vpop.f32.mrf.mxu0
    %v993 = vadd.f32 0.0, %v992
    %v994 = vpop.f32.mrf.mxu0
    %995 = vmatprep.mubr.f32.mxu0 %v866
    %996 = vmatmul.mubr.f32.gmra.mxu0 %v865
    %v997 = vpop.f32.mrf.mxu0
    %v998 = vadd.f32 0.0, %v997
    %v999 = vpop.f32.mrf.mxu0
    %1000 = vmatprep.mubr.f32.mxu0 %v868
    %1001 = vmatmul.mubr.f32.gmra.mxu0 %v867
    %v1002 = vpop.f32.mrf.mxu0
    %v1003 = vadd.f32 0.0, %v1002
    %v1004 = vpop.f32.mrf.mxu0
    %1005 = vmatprep.mubr.f32.mxu0 %v870
    %1006 = vmatmul.mubr.f32.gmra.mxu0 %v869
    %v1007 = vpop.f32.mrf.mxu0
    %v1008 = vadd.f32 0.0, %v1007
    %v1009 = vpop.f32.mrf.mxu0
    %1010 = vmatprep.mubr.f32.mxu0 %v872
    %1011 = vmatmul.mubr.f32.gmra.mxu0 %v871
    %v1012 = vpop.f32.mrf.mxu0
    %v1013 = vadd.f32 0.0, %v1012
    %v1014 = vpop.f32.mrf.mxu0
    %1015 = vmatprep.mubr.f32.mxu0 %v874
    %1016 = vmatmul.mubr.f32.gmra.mxu0 %v873
    %v1017 = vpop.f32.mrf.mxu0
    %v1018 = vadd.f32 0.0, %v1017
    %v1019 = vpop.f32.mrf.mxu0
    %1020 = vmatprep.mubr.f32.mxu0 %v876
    %1021 = vmatmul.mubr.f32.gmra.mxu0 %v875
    %v1022 = vpop.f32.mrf.mxu0
    %v1023 = vadd.f32 0.0, %v1022
    %v1024 = vpop.f32.mrf.mxu0
    %1025 = vdwg.mxu0
    %v1027 = vsel %vm491, %v948, 0
    %v1030 = vsel %vm491, %v953, 0
    %v1033 = vsel %vm491, %v958, 0
    %v1036 = vsel %vm491, %v963, 0
    %v1039 = vsel %vm491, %v968, 0
    %v1042 = vsel %vm491, %v973, 0
    %v1045 = vsel %vm491, %v978, 0
    %v1048 = vsel %vm491, %v983, 0
    %v1051 = vsel %vm491, %v988, 0
    %v1054 = vsel %vm491, %v993, 0
    %v1057 = vsel %vm491, %v998, 0
    %v1060 = vsel %vm491, %v1003, 0
    %v1063 = vsel %vm491, %v1008, 0
    %v1066 = vsel %vm491, %v1013, 0
    %v1069 = vsel %vm491, %v1018, 0
    %v1072 = vsel %vm491, %v1023, 0
    %1074 = vmatprep.subr.mxu0 0.0
    %1075 = vmatpush1.msra.mxu0 0.0
    %1076 = vmatprep.subr.mxu0 0.0
    %1077 = vmatpush1.msra.mxu0 0.0
    %1078 = vmatprep.subr.mxu0 0.0
    %1079 = vmatpush1.msra.mxu0 0.0
    %1080 = vmatprep.subr.mxu0 0.0
    %1081 = vmatpush1.msra.mxu0 0.0
    %1082 = vmatprep.subr.mxu0 0.0
    %1083 = vmatpush1.msra.mxu0 0.0
    %1084 = vmatprep.subr.mxu0 0.0
    %1085 = vmatpush1.msra.mxu0 0.0
    %1086 = vmatprep.subr.mxu0 0.0
    %1087 = vmatpush1.msra.mxu0 0.0
    %1088 = vmatprep.subr.mxu0 0.0
    %1089 = vmatpush1.msra.mxu0 0.0
    %1090 = vmatprep.subr.mxu0 0.0
    %1091 = vmatpush1.msra.mxu0 0.0
    %1092 = vmatprep.subr.mxu0 0.0
    %1093 = vmatpush1.msra.mxu0 0.0
    %1094 = vmatprep.subr.mxu0 0.0
    %1095 = vmatpush1.msra.mxu0 0.0
    %1096 = vmatprep.subr.mxu0 0.0
    %1097 = vmatpush1.msra.mxu0 0.0
    %1098 = vmatprep.subr.mxu0 0.0
    %1099 = vmatpush1.msra.mxu0 %v880
    %1100 = vmatprep.subr.mxu0 0.0
    %1101 = vmatpush1.msra.mxu0 %v879
    %1102 = vmatprep.subr.mxu0 0.0
    %1103 = vmatpush1.msra.mxu0 %v878
    %1104 = vmatprep.subr.mxu0 0.0
    %1105 = vmatpush1.msra.mxu0 %v877
    %1106 = vmatprep.subr.mxu0 0.0
    %1107 = vmatpush2.msra.mxu0 0.0
    %1108 = vmatprep.subr.mxu0 0.0
    %1109 = vmatpush2.msra.mxu0 0.0
    %1110 = vmatprep.subr.mxu0 0.0
    %1111 = vmatpush2.msra.mxu0 0.0
    %1112 = vmatprep.subr.mxu0 0.0
    %1113 = vmatpush2.msra.mxu0 0.0
    %1114 = vmatprep.subr.mxu0 0.0
    %1115 = vmatpush2.msra.mxu0 0.0
    %1116 = vmatprep.subr.mxu0 0.0
    %1117 = vmatpush2.msra.mxu0 0.0
    %1118 = vmatprep.subr.mxu0 0.0
    %1119 = vmatpush2.msra.mxu0 0.0
    %1120 = vmatprep.subr.mxu0 0.0
    %1121 = vmatpush2.msra.mxu0 0.0
    %1122 = vmatprep.subr.mxu0 0.0
    %1123 = vmatpush2.msra.mxu0 0.0
    %1124 = vmatprep.subr.mxu0 0.0
    %1125 = vmatpush2.msra.mxu0 0.0
    %1126 = vmatprep.subr.mxu0 0.0
    %1127 = vmatpush2.msra.mxu0 0.0
    %1128 = vmatprep.subr.mxu0 0.0
    %1129 = vmatpush2.msra.mxu0 0.0
    %1130 = vmatprep.subr.mxu0 0.0
    %1131 = vmatpush2.msra.mxu0 0.0
    %1132 = vmatprep.subr.mxu0 0.0
    %1133 = vmatpush2.msra.mxu0 0.0
    %1134 = vmatprep.subr.mxu0 0.0
    %1135 = vmatpush2.msra.mxu0 0.0
    %1136 = vmatprep.subr.mxu0 0.0
    %1137 = vmatpush2.msra.mxu0 0.0
    %1138 = vmatprep.mubr.f32.mxu0 0.0
    %1139 = vmatmul.mubr.f32.gmra.mxu0 %v1027
    %v1140 = vpop.f32.mrf.mxu0
    %v1141 = vadd.f32 0.0, %v1140
    %v1142 = vpop.f32.mrf.mxu0
    %1143 = vmatprep.mubr.f32.mxu0 0.0
    %1144 = vmatmul.mubr.f32.gmra.mxu0 %v1030
    %v1145 = vpop.f32.mrf.mxu0
    %v1146 = vadd.f32 0.0, %v1145
    %v1147 = vpop.f32.mrf.mxu0
    %1148 = vmatprep.mubr.f32.mxu0 0.0
    %1149 = vmatmul.mubr.f32.gmra.mxu0 %v1033
    %v1150 = vpop.f32.mrf.mxu0
    %v1151 = vadd.f32 0.0, %v1150
    %v1152 = vpop.f32.mrf.mxu0
    %1153 = vmatprep.mubr.f32.mxu0 0.0
    %1154 = vmatmul.mubr.f32.gmra.mxu0 %v1036
    %v1155 = vpop.f32.mrf.mxu0
    %v1156 = vadd.f32 0.0, %v1155
    %v1157 = vpop.f32.mrf.mxu0
    %1158 = vmatprep.mubr.f32.mxu0 0.0
    %1159 = vmatmul.mubr.f32.gmra.mxu0 %v1039
    %v1160 = vpop.f32.mrf.mxu0
    %v1161 = vadd.f32 0.0, %v1160
    %v1162 = vpop.f32.mrf.mxu0
    %1163 = vmatprep.mubr.f32.mxu0 0.0
    %1164 = vmatmul.mubr.f32.gmra.mxu0 %v1042
    %v1165 = vpop.f32.mrf.mxu0
    %v1166 = vadd.f32 0.0, %v1165
    %v1167 = vpop.f32.mrf.mxu0
    %1168 = vmatprep.mubr.f32.mxu0 0.0
    %1169 = vmatmul.mubr.f32.gmra.mxu0 %v1045
    %v1170 = vpop.f32.mrf.mxu0
    %v1171 = vadd.f32 0.0, %v1170
    %v1172 = vpop.f32.mrf.mxu0
    %1173 = vmatprep.mubr.f32.mxu0 0.0
    %1174 = vmatmul.mubr.f32.gmra.mxu0 %v1048
    %v1175 = vpop.f32.mrf.mxu0
    %v1176 = vadd.f32 0.0, %v1175
    %v1177 = vpop.f32.mrf.mxu0
    %1178 = vmatprep.mubr.f32.mxu0 0.0
    %1179 = vmatmul.mubr.f32.gmra.mxu0 %v1051
    %v1180 = vpop.f32.mrf.mxu0
    %v1181 = vadd.f32 0.0, %v1180
    %v1182 = vpop.f32.mrf.mxu0
    %1183 = vmatprep.mubr.f32.mxu0 0.0
    %1184 = vmatmul.mubr.f32.gmra.mxu0 %v1054
    %v1185 = vpop.f32.mrf.mxu0
    %v1186 = vadd.f32 0.0, %v1185
    %v1187 = vpop.f32.mrf.mxu0
    %1188 = vmatprep.mubr.f32.mxu0 0.0
    %1189 = vmatmul.mubr.f32.gmra.mxu0 %v1057
    %v1190 = vpop.f32.mrf.mxu0
    %v1191 = vadd.f32 0.0, %v1190
    %v1192 = vpop.f32.mrf.mxu0
    %1193 = vmatprep.mubr.f32.mxu0 0.0
    %1194 = vmatmul.mubr.f32.gmra.mxu0 %v1060
    %v1195 = vpop.f32.mrf.mxu0
    %v1196 = vadd.f32 0.0, %v1195
    %v1197 = vpop.f32.mrf.mxu0
    %1198 = vmatprep.mubr.f32.mxu0 0.0
    %1199 = vmatmul.mubr.f32.gmra.mxu0 %v1063
    %v1200 = vpop.f32.mrf.mxu0
    %v1201 = vadd.f32 0.0, %v1200
    %v1202 = vpop.f32.mrf.mxu0
    %1203 = vmatprep.mubr.f32.mxu0 0.0
    %1204 = vmatmul.mubr.f32.gmra.mxu0 %v1066
    %v1205 = vpop.f32.mrf.mxu0
    %v1206 = vadd.f32 0.0, %v1205
    %v1207 = vpop.f32.mrf.mxu0
    %1208 = vmatprep.mubr.f32.mxu0 0.0
    %1209 = vmatmul.mubr.f32.gmra.mxu0 %v1069
    %v1210 = vpop.f32.mrf.mxu0
    %v1211 = vadd.f32 0.0, %v1210
    %v1212 = vpop.f32.mrf.mxu0
    %1213 = vmatprep.mubr.f32.mxu0 0.0
    %1214 = vmatmul.mubr.f32.gmra.mxu0 %v1072
    %v1215 = vpop.f32.mrf.mxu0
    %v1216 = vadd.f32 0.0, %v1215
    %v1217 = vpop.f32.mrf.mxu0
    %1218 = vdwg.mxu0
    %vm1219 = vcmask 130048
    %1220 = vst.msk [vmem:[#allocation18] sm:$0xff] %vm1219, %v1141
    %1221 = vst.msk [vmem:[#allocation18 + $0x8] sm:$0xff] %vm1219, %v1146
    %1222 = vst.msk [vmem:[#allocation18 + $0x10] sm:$0xff] %vm1219, %v1151
    %1223 = vst.msk [vmem:[#allocation18 + $0x18] sm:$0xff] %vm1219, %v1156
    %1224 = vst.msk [vmem:[#allocation18 + $0x20] sm:$0xff] %vm1219, %v1161
    %1225 = vst.msk [vmem:[#allocation18 + $0x28] sm:$0xff] %vm1219, %v1166
    %1226 = vst.msk [vmem:[#allocation18 + $0x30] sm:$0xff] %vm1219, %v1171
    %1227 = vst.msk [vmem:[#allocation18 + $0x38] sm:$0xff] %vm1219, %v1176
    %1228 = vst.msk [vmem:[#allocation18 + $0x40] sm:$0xff] %vm1219, %v1181
    %1229 = vst.msk [vmem:[#allocation18 + $0x48] sm:$0xff] %vm1219, %v1186
    %1230 = vst.msk [vmem:[#allocation18 + $0x50] sm:$0xff] %vm1219, %v1191
    %1231 = vst.msk [vmem:[#allocation18 + $0x58] sm:$0xff] %vm1219, %v1196
    %1232 = vst.msk [vmem:[#allocation18 + $0x60] sm:$0xff] %vm1219, %v1201
    %1233 = vst.msk [vmem:[#allocation18 + $0x68] sm:$0xff] %vm1219, %v1206
    %1234 = vst.msk [vmem:[#allocation18 + $0x70] sm:$0xff] %vm1219, %v1211
    %1235 = vst.msk [vmem:[#allocation18 + $0x78] sm:$0xff] %vm1219, %v1216
    %v1236 = vld [vmem:[#allocation11] sm:$0xff]
    %v1237 = vld [vmem:[#allocation11 + $0x8] sm:$0xff]
    %v1238 = vld [vmem:[#allocation11 + $0x10] sm:$0xff]
    %v1239 = vld [vmem:[#allocation11 + $0x18] sm:$0xff]
    %v1240 = vld [vmem:[#allocation11 + $0x20] sm:$0xff]
    %v1241 = vld [vmem:[#allocation11 + $0x28] sm:$0xff]
    %v1242 = vld [vmem:[#allocation11 + $0x30] sm:$0xff]
    %v1243 = vld [vmem:[#allocation11 + $0x38] sm:$0xff]
    %v1244 = vld [vmem:[#allocation13] sm:$0xff]
    %v1245 = vld [vmem:[#allocation13 + $0x8] sm:$0xff]
    %1246 = vmatprep.subr.mxu0 0.0
    %1247 = vmatpush1.msra.mxu0 %v1216
    %1248 = vmatprep.subr.mxu0 0.0
    %1249 = vmatpush1.msra.mxu0 %v1211
    %1250 = vmatprep.subr.mxu0 0.0
    %1251 = vmatpush1.msra.mxu0 %v1206
    %1252 = vmatprep.subr.mxu0 0.0
    %1253 = vmatpush1.msra.mxu0 %v1201
    %1254 = vmatprep.subr.mxu0 0.0
    %1255 = vmatpush1.msra.mxu0 %v1196
    %1256 = vmatprep.subr.mxu0 0.0
    %1257 = vmatpush1.msra.mxu0 %v1191
    %1258 = vmatprep.subr.mxu0 0.0
    %1259 = vmatpush1.msra.mxu0 %v1186
    %1260 = vmatprep.subr.mxu0 0.0
    %1261 = vmatpush1.msra.mxu0 %v1181
    %1262 = vmatprep.subr.mxu0 0.0
    %1263 = vmatpush1.msra.mxu0 %v1176
    %1264 = vmatprep.subr.mxu0 0.0
    %1265 = vmatpush1.msra.mxu0 %v1171
    %1266 = vmatprep.subr.mxu0 0.0
    %1267 = vmatpush1.msra.mxu0 %v1166
    %1268 = vmatprep.subr.mxu0 0.0
    %1269 = vmatpush1.msra.mxu0 %v1161
    %1270 = vmatprep.subr.mxu0 0.0
    %1271 = vmatpush1.msra.mxu0 %v1156
    %1272 = vmatprep.subr.mxu0 0.0
    %1273 = vmatpush1.msra.mxu0 %v1151
    %1274 = vmatprep.subr.mxu0 0.0
    %1275 = vmatpush1.msra.mxu0 %v1146
    %1276 = vmatprep.subr.mxu0 0.0
    %1277 = vmatpush1.msra.mxu0 %v1141
    %1278 = vmatprep.subr.mxu0 0.0
    %1279 = vmatpush2.msra.mxu0 0.0
    %1280 = vmatprep.subr.mxu0 0.0
    %1281 = vmatpush2.msra.mxu0 0.0
    %1282 = vmatprep.subr.mxu0 0.0
    %1283 = vmatpush2.msra.mxu0 0.0
    %1284 = vmatprep.subr.mxu0 0.0
    %1285 = vmatpush2.msra.mxu0 0.0
    %1286 = vmatprep.subr.mxu0 0.0
    %1287 = vmatpush2.msra.mxu0 0.0
    %1288 = vmatprep.subr.mxu0 0.0
    %1289 = vmatpush2.msra.mxu0 0.0
    %1290 = vmatprep.subr.mxu0 0.0
    %1291 = vmatpush2.msra.mxu0 0.0
    %1292 = vmatprep.subr.mxu0 0.0
    %1293 = vmatpush2.msra.mxu0 0.0
    %1294 = vmatprep.subr.mxu0 0.0
    %1295 = vmatpush2.msra.mxu0 0.0
    %1296 = vmatprep.subr.mxu0 0.0
    %1297 = vmatpush2.msra.mxu0 0.0
    %1298 = vmatprep.subr.mxu0 0.0
    %1299 = vmatpush2.msra.mxu0 0.0
    %1300 = vmatprep.subr.mxu0 0.0
    %1301 = vmatpush2.msra.mxu0 0.0
    %1302 = vmatprep.subr.mxu0 0.0
    %1303 = vmatpush2.msra.mxu0 0.0
    %1304 = vmatprep.subr.mxu0 0.0
    %1305 = vmatpush2.msra.mxu0 0.0
    %1306 = vmatprep.subr.mxu0 0.0
    %1307 = vmatpush2.msra.mxu0 0.0
    %1308 = vmatprep.subr.mxu0 0.0
    %1309 = vmatpush2.msra.mxu0 0.0
    %1310 = vmatprep.mubr.f32.mxu0 0.0
    %1311 = vmatmul.mubr.f32.gmra.mxu0 %v1236
    %v1312 = vpop.f32.mrf.mxu0
    %v1313 = vadd.f32 0.0, %v1312
    %v1314 = vpop.f32.mrf.mxu0
    %1315 = vmatprep.mubr.f32.mxu0 0.0
    %1316 = vmatmul.mubr.f32.gmra.mxu0 %v1237
    %v1317 = vpop.f32.mrf.mxu0
    %v1318 = vadd.f32 0.0, %v1317
    %v1319 = vpop.f32.mrf.mxu0
    %1320 = vmatprep.mubr.f32.mxu0 0.0
    %1321 = vmatmul.mubr.f32.gmra.mxu0 %v1238
    %v1322 = vpop.f32.mrf.mxu0
    %v1323 = vadd.f32 0.0, %v1322
    %v1324 = vpop.f32.mrf.mxu0
    %1325 = vmatprep.mubr.f32.mxu0 0.0
    %1326 = vmatmul.mubr.f32.gmra.mxu0 %v1239
    %v1327 = vpop.f32.mrf.mxu0
    %v1328 = vadd.f32 0.0, %v1327
    %v1329 = vpop.f32.mrf.mxu0
    %1330 = vmatprep.mubr.f32.mxu0 0.0
    %1331 = vmatmul.mubr.f32.gmra.mxu0 %v1240
    %v1332 = vpop.f32.mrf.mxu0
    %v1333 = vadd.f32 0.0, %v1332
    %v1334 = vpop.f32.mrf.mxu0
    %1335 = vmatprep.mubr.f32.mxu0 0.0
    %1336 = vmatmul.mubr.f32.gmra.mxu0 %v1241
    %v1337 = vpop.f32.mrf.mxu0
    %v1338 = vadd.f32 0.0, %v1337
    %v1339 = vpop.f32.mrf.mxu0
    %1340 = vmatprep.mubr.f32.mxu0 0.0
    %1341 = vmatmul.mubr.f32.gmra.mxu0 %v1242
    %v1342 = vpop.f32.mrf.mxu0
    %v1343 = vadd.f32 0.0, %v1342
    %v1344 = vpop.f32.mrf.mxu0
    %1345 = vmatprep.mubr.f32.mxu0 0.0
    %1346 = vmatmul.mubr.f32.gmra.mxu0 %v1243
    %v1347 = vpop.f32.mrf.mxu0
    %v1348 = vadd.f32 0.0, %v1347
    %v1349 = vpop.f32.mrf.mxu0
    %1350 = vdwg.mxu0
    %v1352 = vsel %vm1219, %v1313, 0
    %v1355 = vsel %vm1219, %v1318, 0
    %v1358 = vsel %vm1219, %v1323, 0
    %v1361 = vsel %vm1219, %v1328, 0
    %v1364 = vsel %vm1219, %v1333, 0
    %v1367 = vsel %vm1219, %v1338, 0
    %v1370 = vsel %vm1219, %v1343, 0
    %v1373 = vsel %vm1219, %v1348, 0
    %1375 = vmatprep.subr.mxu0 0.0
    %1376 = vmatpush1.msra.mxu0 0.0
    %1377 = vmatprep.subr.mxu0 0.0
    %1378 = vmatpush1.msra.mxu0 0.0
    %1379 = vmatprep.subr.mxu0 0.0
    %1380 = vmatpush1.msra.mxu0 0.0
    %1381 = vmatprep.subr.mxu0 0.0
    %1382 = vmatpush1.msra.mxu0 0.0
    %1383 = vmatprep.subr.mxu0 0.0
    %1384 = vmatpush1.msra.mxu0 0.0
    %1385 = vmatprep.subr.mxu0 0.0
    %1386 = vmatpush1.msra.mxu0 0.0
    %1387 = vmatprep.subr.mxu0 0.0
    %1388 = vmatpush1.msra.mxu0 0.0
    %1389 = vmatprep.subr.mxu0 0.0
    %1390 = vmatpush1.msra.mxu0 0.0
    %1391 = vmatprep.subr.mxu0 0.0
    %1392 = vmatpush1.msra.mxu0 0.0
    %1393 = vmatprep.subr.mxu0 0.0
    %1394 = vmatpush1.msra.mxu0 0.0
    %1395 = vmatprep.subr.mxu0 0.0
    %1396 = vmatpush1.msra.mxu0 0.0
    %1397 = vmatprep.subr.mxu0 0.0
    %1398 = vmatpush1.msra.mxu0 0.0
    %1399 = vmatprep.subr.mxu0 0.0
    %1400 = vmatpush1.msra.mxu0 0.0
    %1401 = vmatprep.subr.mxu0 0.0
    %1402 = vmatpush1.msra.mxu0 0.0
    %1403 = vmatprep.subr.mxu0 0.0
    %1404 = vmatpush1.msra.mxu0 %v1245
    %1405 = vmatprep.subr.mxu0 0.0
    %1406 = vmatpush1.msra.mxu0 %v1244
    %1407 = vmatprep.subr.mxu0 0.0
    %1408 = vmatpush2.msra.mxu0 0.0
    %1409 = vmatprep.subr.mxu0 0.0
    %1410 = vmatpush2.msra.mxu0 0.0
    %1411 = vmatprep.subr.mxu0 0.0
    %1412 = vmatpush2.msra.mxu0 0.0
    %1413 = vmatprep.subr.mxu0 0.0
    %1414 = vmatpush2.msra.mxu0 0.0
    %1415 = vmatprep.subr.mxu0 0.0
    %1416 = vmatpush2.msra.mxu0 0.0
    %1417 = vmatprep.subr.mxu0 0.0
    %1418 = vmatpush2.msra.mxu0 0.0
    %1419 = vmatprep.subr.mxu0 0.0
    %1420 = vmatpush2.msra.mxu0 0.0
    %1421 = vmatprep.subr.mxu0 0.0
    %1422 = vmatpush2.msra.mxu0 0.0
    %1423 = vmatprep.subr.mxu0 0.0
    %1424 = vmatpush2.msra.mxu0 0.0
    %1425 = vmatprep.subr.mxu0 0.0
    %1426 = vmatpush2.msra.mxu0 0.0
    %1427 = vmatprep.subr.mxu0 0.0
    %1428 = vmatpush2.msra.mxu0 0.0
    %1429 = vmatprep.subr.mxu0 0.0
    %1430 = vmatpush2.msra.mxu0 0.0
    %1431 = vmatprep.subr.mxu0 0.0
    %1432 = vmatpush2.msra.mxu0 0.0
    %1433 = vmatprep.subr.mxu0 0.0
    %1434 = vmatpush2.msra.mxu0 0.0
    %1435 = vmatprep.subr.mxu0 0.0
    %1436 = vmatpush2.msra.mxu0 0.0
    %1437 = vmatprep.subr.mxu0 0.0
    %1438 = vmatpush2.msra.mxu0 0.0
    %1439 = vmatprep.mubr.f32.mxu0 0.0
    %1440 = vmatmul.mubr.f32.gmra.mxu0 %v1352
    %v1441 = vpop.f32.mrf.mxu0
    %v1442 = vadd.f32 0.0, %v1441
    %v1443 = vpop.f32.mrf.mxu0
    %1444 = vmatprep.mubr.f32.mxu0 0.0
    %1445 = vmatmul.mubr.f32.gmra.mxu0 %v1355
    %v1446 = vpop.f32.mrf.mxu0
    %v1447 = vadd.f32 0.0, %v1446
    %v1448 = vpop.f32.mrf.mxu0
    %1449 = vmatprep.mubr.f32.mxu0 0.0
    %1450 = vmatmul.mubr.f32.gmra.mxu0 %v1358
    %v1451 = vpop.f32.mrf.mxu0
    %v1452 = vadd.f32 0.0, %v1451
    %v1453 = vpop.f32.mrf.mxu0
    %1454 = vmatprep.mubr.f32.mxu0 0.0
    %1455 = vmatmul.mubr.f32.gmra.mxu0 %v1361
    %v1456 = vpop.f32.mrf.mxu0
    %v1457 = vadd.f32 0.0, %v1456
    %v1458 = vpop.f32.mrf.mxu0
    %1459 = vmatprep.mubr.f32.mxu0 0.0
    %1460 = vmatmul.mubr.f32.gmra.mxu0 %v1364
    %v1461 = vpop.f32.mrf.mxu0
    %v1462 = vadd.f32 0.0, %v1461
    %v1463 = vpop.f32.mrf.mxu0
    %1464 = vmatprep.mubr.f32.mxu0 0.0
    %1465 = vmatmul.mubr.f32.gmra.mxu0 %v1367
    %v1466 = vpop.f32.mrf.mxu0
    %v1467 = vadd.f32 0.0, %v1466
    %v1468 = vpop.f32.mrf.mxu0
    %1469 = vmatprep.mubr.f32.mxu0 0.0
    %1470 = vmatmul.mubr.f32.gmra.mxu0 %v1370
    %v1471 = vpop.f32.mrf.mxu0
    %v1472 = vadd.f32 0.0, %v1471
    %v1473 = vpop.f32.mrf.mxu0
    %1474 = vmatprep.mubr.f32.mxu0 0.0
    %1475 = vmatmul.mubr.f32.gmra.mxu0 %v1373
    %v1476 = vpop.f32.mrf.mxu0
    %v1477 = vadd.f32 0.0, %v1476
    %v1478 = vpop.f32.mrf.mxu0
    %1479 = vdwg.mxu0
    %vm1480 = vcmask 64512
    %1481 = vst.msk [vmem:[#allocation20] sm:$0xff] %vm1480, %v1442
    %1482 = vst.msk [vmem:[#allocation20 + $0x8] sm:$0xff] %vm1480, %v1447
    %1483 = vst.msk [vmem:[#allocation20 + $0x10] sm:$0xff] %vm1480, %v1452
    %1484 = vst.msk [vmem:[#allocation20 + $0x18] sm:$0xff] %vm1480, %v1457
    %1485 = vst.msk [vmem:[#allocation20 + $0x20] sm:$0xff] %vm1480, %v1462
    %1486 = vst.msk [vmem:[#allocation20 + $0x28] sm:$0xff] %vm1480, %v1467
    %1487 = vst.msk [vmem:[#allocation20 + $0x30] sm:$0xff] %vm1480, %v1472
    %1488 = vst.msk [vmem:[#allocation20 + $0x38] sm:$0xff] %vm1480, %v1477
    %v1489 = vld [vmem:[#allocation14] sm:$0xff]
    %v1490 = vld [vmem:[#allocation14 + $0x8] sm:$0xff]
    %v1491 = vld [vmem:[#allocation14 + $0x10] sm:$0xff]
    %v1492 = vld [vmem:[#allocation14 + $0x18] sm:$0xff]
    %v1493 = vld [vmem:[#allocation16] sm:$0xff]
    %vm1494 = vcmask 523264
    %v1496 = vsel %vm1494, %v1489, 0
    %v1499 = vsel %vm1494, %v1490, 0
    %v1502 = vsel %vm1494, %v1491, 0
    %v1505 = vsel %vm1494, %v1492, 0
    %1507 = vmatprep.subr.mxu0 0.0
    %1508 = vmatpush1.msra.mxu0 0.0
    %1509 = vmatprep.subr.mxu0 0.0
    %1510 = vmatpush1.msra.mxu0 0.0
    %1511 = vmatprep.subr.mxu0 0.0
    %1512 = vmatpush1.msra.mxu0 0.0
    %1513 = vmatprep.subr.mxu0 0.0
    %1514 = vmatpush1.msra.mxu0 0.0
    %1515 = vmatprep.subr.mxu0 0.0
    %1516 = vmatpush1.msra.mxu0 0.0
    %1517 = vmatprep.subr.mxu0 0.0
    %1518 = vmatpush1.msra.mxu0 0.0
    %1519 = vmatprep.subr.mxu0 0.0
    %1520 = vmatpush1.msra.mxu0 0.0
    %1521 = vmatprep.subr.mxu0 0.0
    %1522 = vmatpush1.msra.mxu0 0.0
    %1523 = vmatprep.subr.mxu0 0.0
    %1524 = vmatpush1.msra.mxu0 %v1477
    %1525 = vmatprep.subr.mxu0 0.0
    %1526 = vmatpush1.msra.mxu0 %v1472
    %1527 = vmatprep.subr.mxu0 0.0
    %1528 = vmatpush1.msra.mxu0 %v1467
    %1529 = vmatprep.subr.mxu0 0.0
    %1530 = vmatpush1.msra.mxu0 %v1462
    %1531 = vmatprep.subr.mxu0 0.0
    %1532 = vmatpush1.msra.mxu0 %v1457
    %1533 = vmatprep.subr.mxu0 0.0
    %1534 = vmatpush1.msra.mxu0 %v1452
    %1535 = vmatprep.subr.mxu0 0.0
    %1536 = vmatpush1.msra.mxu0 %v1447
    %1537 = vmatprep.subr.mxu0 0.0
    %1538 = vmatpush1.msra.mxu0 %v1442
    %1539 = vmatprep.subr.mxu0 0.0
    %1540 = vmatpush2.msra.mxu0 0.0
    %1541 = vmatprep.subr.mxu0 0.0
    %1542 = vmatpush2.msra.mxu0 0.0
    %1543 = vmatprep.subr.mxu0 0.0
    %1544 = vmatpush2.msra.mxu0 0.0
    %1545 = vmatprep.subr.mxu0 0.0
    %1546 = vmatpush2.msra.mxu0 0.0
    %1547 = vmatprep.subr.mxu0 0.0
    %1548 = vmatpush2.msra.mxu0 0.0
    %1549 = vmatprep.subr.mxu0 0.0
    %1550 = vmatpush2.msra.mxu0 0.0
    %1551 = vmatprep.subr.mxu0 0.0
    %1552 = vmatpush2.msra.mxu0 0.0
    %1553 = vmatprep.subr.mxu0 0.0
    %1554 = vmatpush2.msra.mxu0 0.0
    %1555 = vmatprep.subr.mxu0 0.0
    %1556 = vmatpush2.msra.mxu0 0.0
    %1557 = vmatprep.subr.mxu0 0.0
    %1558 = vmatpush2.msra.mxu0 0.0
    %1559 = vmatprep.subr.mxu0 0.0
    %1560 = vmatpush2.msra.mxu0 0.0
    %1561 = vmatprep.subr.mxu0 0.0
    %1562 = vmatpush2.msra.mxu0 0.0
    %1563 = vmatprep.subr.mxu0 0.0
    %1564 = vmatpush2.msra.mxu0 0.0
    %1565 = vmatprep.subr.mxu0 0.0
    %1566 = vmatpush2.msra.mxu0 0.0
    %1567 = vmatprep.subr.mxu0 0.0
    %1568 = vmatpush2.msra.mxu0 0.0
    %1569 = vmatprep.subr.mxu0 0.0
    %1570 = vmatpush2.msra.mxu0 0.0
    %1571 = vmatprep.mubr.f32.mxu0 0.0
    %1572 = vmatmul.mubr.f32.gmra.mxu0 %v1496
    %v1573 = vpop.f32.mrf.mxu0
    %v1574 = vadd.f32 0.0, %v1573
    %v1575 = vpop.f32.mrf.mxu0
    %1576 = vmatprep.mubr.f32.mxu0 0.0
    %1577 = vmatmul.mubr.f32.gmra.mxu0 %v1499
    %v1578 = vpop.f32.mrf.mxu0
    %v1579 = vadd.f32 0.0, %v1578
    %v1580 = vpop.f32.mrf.mxu0
    %1581 = vmatprep.mubr.f32.mxu0 0.0
    %1582 = vmatmul.mubr.f32.gmra.mxu0 %v1502
    %v1583 = vpop.f32.mrf.mxu0
    %v1584 = vadd.f32 0.0, %v1583
    %v1585 = vpop.f32.mrf.mxu0
    %1586 = vmatprep.mubr.f32.mxu0 0.0
    %1587 = vmatmul.mubr.f32.gmra.mxu0 %v1505
    %v1588 = vpop.f32.mrf.mxu0
    %v1589 = vadd.f32 0.0, %v1588
    %v1590 = vpop.f32.mrf.mxu0
    %1591 = vdwg.mxu0
    %v1593 = vsel %vm1480, %v1574, 0
    %v1596 = vsel %vm1480, %v1579, 0
    %v1599 = vsel %vm1480, %v1584, 0
    %v1602 = vsel %vm1480, %v1589, 0
    %1604 = vmatprep.subr.mxu0 0.0
    %1605 = vmatpush1.msra.mxu0 0.0
    %1606 = vmatprep.subr.mxu0 0.0
    %1607 = vmatpush1.msra.mxu0 0.0
    %1608 = vmatprep.subr.mxu0 0.0
    %1609 = vmatpush1.msra.mxu0 0.0
    %1610 = vmatprep.subr.mxu0 0.0
    %1611 = vmatpush1.msra.mxu0 0.0
    %1612 = vmatprep.subr.mxu0 0.0
    %1613 = vmatpush1.msra.mxu0 0.0
    %1614 = vmatprep.subr.mxu0 0.0
    %1615 = vmatpush1.msra.mxu0 0.0
    %1616 = vmatprep.subr.mxu0 0.0
    %1617 = vmatpush1.msra.mxu0 0.0
    %1618 = vmatprep.subr.mxu0 0.0
    %1619 = vmatpush1.msra.mxu0 0.0
    %1620 = vmatprep.subr.mxu0 0.0
    %1621 = vmatpush1.msra.mxu0 0.0
    %1622 = vmatprep.subr.mxu0 0.0
    %1623 = vmatpush1.msra.mxu0 0.0
    %1624 = vmatprep.subr.mxu0 0.0
    %1625 = vmatpush1.msra.mxu0 0.0
    %1626 = vmatprep.subr.mxu0 0.0
    %1627 = vmatpush1.msra.mxu0 0.0
    %1628 = vmatprep.subr.mxu0 0.0
    %1629 = vmatpush1.msra.mxu0 0.0
    %1630 = vmatprep.subr.mxu0 0.0
    %1631 = vmatpush1.msra.mxu0 0.0
    %1632 = vmatprep.subr.mxu0 0.0
    %1633 = vmatpush1.msra.mxu0 0.0
    %1634 = vmatprep.subr.mxu0 0.0
    %1635 = vmatpush1.msra.mxu0 %v1493
    %1636 = vmatprep.subr.mxu0 0.0
    %1637 = vmatpush2.msra.mxu0 0.0
    %1638 = vmatprep.subr.mxu0 0.0
    %1639 = vmatpush2.msra.mxu0 0.0
    %1640 = vmatprep.subr.mxu0 0.0
    %1641 = vmatpush2.msra.mxu0 0.0
    %1642 = vmatprep.subr.mxu0 0.0
    %1643 = vmatpush2.msra.mxu0 0.0
    %1644 = vmatprep.subr.mxu0 0.0
    %1645 = vmatpush2.msra.mxu0 0.0
    %1646 = vmatprep.subr.mxu0 0.0
    %1647 = vmatpush2.msra.mxu0 0.0
    %1648 = vmatprep.subr.mxu0 0.0
    %1649 = vmatpush2.msra.mxu0 0.0
    %1650 = vmatprep.subr.mxu0 0.0
    %1651 = vmatpush2.msra.mxu0 0.0
    %1652 = vmatprep.subr.mxu0 0.0
    %1653 = vmatpush2.msra.mxu0 0.0
    %1654 = vmatprep.subr.mxu0 0.0
    %1655 = vmatpush2.msra.mxu0 0.0
    %1656 = vmatprep.subr.mxu0 0.0
    %1657 = vmatpush2.msra.mxu0 0.0
    %1658 = vmatprep.subr.mxu0 0.0
    %1659 = vmatpush2.msra.mxu0 0.0
    %1660 = vmatprep.subr.mxu0 0.0
    %1661 = vmatpush2.msra.mxu0 0.0
    %1662 = vmatprep.subr.mxu0 0.0
    %1663 = vmatpush2.msra.mxu0 0.0
    %1664 = vmatprep.subr.mxu0 0.0
    %1665 = vmatpush2.msra.mxu0 0.0
    %1666 = vmatprep.subr.mxu0 0.0
    %1667 = vmatpush2.msra.mxu0 0.0
    %1668 = vmatprep.mubr.f32.mxu0 0.0
    %1669 = vmatmul.mubr.f32.gmra.mxu0 %v1593
    %v1670 = vpop.f32.mrf.mxu0
    %v1671 = vadd.f32 0.0, %v1670
    %v1672 = vpop.f32.mrf.mxu0
    %1673 = vmatprep.mubr.f32.mxu0 0.0
    %1674 = vmatmul.mubr.f32.gmra.mxu0 %v1596
    %v1675 = vpop.f32.mrf.mxu0
    %v1676 = vadd.f32 0.0, %v1675
    %v1677 = vpop.f32.mrf.mxu0
    %1678 = vmatprep.mubr.f32.mxu0 0.0
    %1679 = vmatmul.mubr.f32.gmra.mxu0 %v1599
    %v1680 = vpop.f32.mrf.mxu0
    %v1681 = vadd.f32 0.0, %v1680
    %v1682 = vpop.f32.mrf.mxu0
    %1683 = vmatprep.mubr.f32.mxu0 0.0
    %1684 = vmatmul.mubr.f32.gmra.mxu0 %v1602
    %v1685 = vpop.f32.mrf.mxu0
    %v1686 = vadd.f32 0.0, %v1685
    %v1687 = vpop.f32.mrf.mxu0
    %1688 = vdwg.mxu0
    %vm1689 = vcmask 31744
    %1690 = vst.msk [vmem:[#allocation21] sm:$0xff] %vm1689, %v1671
    %1691 = vst.msk [vmem:[#allocation21 + $0x8] sm:$0xff] %vm1689, %v1676
    %1692 = vst.msk [vmem:[#allocation21 + $0x10] sm:$0xff] %vm1689, %v1681
    %1693 = vst.msk [vmem:[#allocation21 + $0x18] sm:$0xff] %vm1689, %v1686
    %v1694 = vld [vmem:[%s9] sm:$0xff]
    %v1695 = vld [vmem:[%s9 + $0x8] sm:$0xff]
    %v1696 = vld [vmem:[%s10] sm:$0xf]
    %v1698 = vsel %vm491, %v1694, 0
    %v1701 = vsel %vm491, %v1695, 0
    %1703 = vmatprep.subr.mxu0 0.0
    %1704 = vmatpush1.msra.mxu0 0.0
    %1705 = vmatprep.subr.mxu0 0.0
    %1706 = vmatpush1.msra.mxu0 0.0
    %1707 = vmatprep.subr.mxu0 0.0
    %1708 = vmatpush1.msra.mxu0 0.0
    %1709 = vmatprep.subr.mxu0 0.0
    %1710 = vmatpush1.msra.mxu0 0.0
    %1711 = vmatprep.subr.mxu0 0.0
    %1712 = vmatpush1.msra.mxu0 0.0
    %1713 = vmatprep.subr.mxu0 0.0
    %1714 = vmatpush1.msra.mxu0 0.0
    %1715 = vmatprep.subr.mxu0 0.0
    %1716 = vmatpush1.msra.mxu0 0.0
    %1717 = vmatprep.subr.mxu0 0.0
    %1718 = vmatpush1.msra.mxu0 0.0
    %1719 = vmatprep.subr.mxu0 0.0
    %1720 = vmatpush1.msra.mxu0 0.0
    %1721 = vmatprep.subr.mxu0 0.0
    %1722 = vmatpush1.msra.mxu0 0.0
    %1723 = vmatprep.subr.mxu0 0.0
    %1724 = vmatpush1.msra.mxu0 0.0
    %1725 = vmatprep.subr.mxu0 0.0
    %1726 = vmatpush1.msra.mxu0 0.0
    %1727 = vmatprep.subr.mxu0 0.0
    %1728 = vmatpush1.msra.mxu0 %v1686
    %1729 = vmatprep.subr.mxu0 0.0
    %1730 = vmatpush1.msra.mxu0 %v1681
    %1731 = vmatprep.subr.mxu0 0.0
    %1732 = vmatpush1.msra.mxu0 %v1676
    %1733 = vmatprep.subr.mxu0 0.0
    %1734 = vmatpush1.msra.mxu0 %v1671
    %1735 = vmatprep.subr.mxu0 0.0
    %1736 = vmatpush2.msra.mxu0 0.0
    %1737 = vmatprep.subr.mxu0 0.0
    %1738 = vmatpush2.msra.mxu0 0.0
    %1739 = vmatprep.subr.mxu0 0.0
    %1740 = vmatpush2.msra.mxu0 0.0
    %1741 = vmatprep.subr.mxu0 0.0
    %1742 = vmatpush2.msra.mxu0 0.0
    %1743 = vmatprep.subr.mxu0 0.0
    %1744 = vmatpush2.msra.mxu0 0.0
    %1745 = vmatprep.subr.mxu0 0.0
    %1746 = vmatpush2.msra.mxu0 0.0
    %1747 = vmatprep.subr.mxu0 0.0
    %1748 = vmatpush2.msra.mxu0 0.0
    %1749 = vmatprep.subr.mxu0 0.0
    %1750 = vmatpush2.msra.mxu0 0.0
    %1751 = vmatprep.subr.mxu0 0.0
    %1752 = vmatpush2.msra.mxu0 0.0
    %1753 = vmatprep.subr.mxu0 0.0
    %1754 = vmatpush2.msra.mxu0 0.0
    %1755 = vmatprep.subr.mxu0 0.0
    %1756 = vmatpush2.msra.mxu0 0.0
    %1757 = vmatprep.subr.mxu0 0.0
    %1758 = vmatpush2.msra.mxu0 0.0
    %1759 = vmatprep.subr.mxu0 0.0
    %1760 = vmatpush2.msra.mxu0 0.0
    %1761 = vmatprep.subr.mxu0 0.0
    %1762 = vmatpush2.msra.mxu0 0.0
    %1763 = vmatprep.subr.mxu0 0.0
    %1764 = vmatpush2.msra.mxu0 0.0
    %1765 = vmatprep.subr.mxu0 0.0
    %1766 = vmatpush2.msra.mxu0 0.0
    %1767 = vmatprep.mubr.f32.mxu0 0.0
    %1768 = vmatmul.mubr.f32.gmra.mxu0 %v1698
    %v1769 = vpop.f32.mrf.mxu0
    %v1770 = vadd.f32 0.0, %v1769
    %v1771 = vpop.f32.mrf.mxu0
    %1772 = vmatprep.mubr.f32.mxu0 0.0
    %1773 = vmatmul.mubr.f32.gmra.mxu0 %v1701
    %v1774 = vpop.f32.mrf.mxu0
    %v1775 = vadd.f32 0.0, %v1774
    %v1776 = vpop.f32.mrf.mxu0
    %1777 = vdwg.mxu0
    %v1779 = vsel %vm1689, %v1770, 0
    %v1782 = vsel %vm1689, %v1775, 0
    %vm1784 = vcmask 1043456
    %v1786 = vsel %vm1784, %v1696, 0
    %1788 = vmatprep.subr.mxu0 0.0
    %1789 = vmatpush1.msra.mxu0 0.0
    %1790 = vmatprep.subr.mxu0 0.0
    %1791 = vmatpush1.msra.mxu0 0.0
    %1792 = vmatprep.subr.mxu0 0.0
    %1793 = vmatpush1.msra.mxu0 0.0
    %1794 = vmatprep.subr.mxu0 0.0
    %1795 = vmatpush1.msra.mxu0 0.0
    %1796 = vmatprep.subr.mxu0 0.0
    %1797 = vmatpush1.msra.mxu0 0.0
    %1798 = vmatprep.subr.mxu0 0.0
    %1799 = vmatpush1.msra.mxu0 0.0
    %1800 = vmatprep.subr.mxu0 0.0
    %1801 = vmatpush1.msra.mxu0 0.0
    %1802 = vmatprep.subr.mxu0 0.0
    %1803 = vmatpush1.msra.mxu0 0.0
    %1804 = vmatprep.subr.mxu0 0.0
    %1805 = vmatpush1.msra.mxu0 0.0
    %1806 = vmatprep.subr.mxu0 0.0
    %1807 = vmatpush1.msra.mxu0 0.0
    %1808 = vmatprep.subr.mxu0 0.0
    %1809 = vmatpush1.msra.mxu0 0.0
    %1810 = vmatprep.subr.mxu0 0.0
    %1811 = vmatpush1.msra.mxu0 0.0
    %1812 = vmatprep.subr.mxu0 0.0
    %1813 = vmatpush1.msra.mxu0 0.0
    %1814 = vmatprep.subr.mxu0 0.0
    %1815 = vmatpush1.msra.mxu0 0.0
    %1816 = vmatprep.subr.mxu0 0.0
    %1817 = vmatpush1.msra.mxu0 0.0
    %1818 = vmatprep.subr.mxu0 0.0
    %1819 = vmatpush1.msra.mxu0 %v1786
    %1820 = vmatprep.subr.mxu0 0.0
    %1821 = vmatpush2.msra.mxu0 0.0
    %1822 = vmatprep.subr.mxu0 0.0
    %1823 = vmatpush2.msra.mxu0 0.0
    %1824 = vmatprep.subr.mxu0 0.0
    %1825 = vmatpush2.msra.mxu0 0.0
    %1826 = vmatprep.subr.mxu0 0.0
    %1827 = vmatpush2.msra.mxu0 0.0
    %1828 = vmatprep.subr.mxu0 0.0
    %1829 = vmatpush2.msra.mxu0 0.0
    %1830 = vmatprep.subr.mxu0 0.0
    %1831 = vmatpush2.msra.mxu0 0.0
    %1832 = vmatprep.subr.mxu0 0.0
    %1833 = vmatpush2.msra.mxu0 0.0
    %1834 = vmatprep.subr.mxu0 0.0
    %1835 = vmatpush2.msra.mxu0 0.0
    %1836 = vmatprep.subr.mxu0 0.0
    %1837 = vmatpush2.msra.mxu0 0.0
    %1838 = vmatprep.subr.mxu0 0.0
    %1839 = vmatpush2.msra.mxu0 0.0
    %1840 = vmatprep.subr.mxu0 0.0
    %1841 = vmatpush2.msra.mxu0 0.0
    %1842 = vmatprep.subr.mxu0 0.0
    %1843 = vmatpush2.msra.mxu0 0.0
    %1844 = vmatprep.subr.mxu0 0.0
    %1845 = vmatpush2.msra.mxu0 0.0
    %1846 = vmatprep.subr.mxu0 0.0
    %1847 = vmatpush2.msra.mxu0 0.0
    %1848 = vmatprep.subr.mxu0 0.0
    %1849 = vmatpush2.msra.mxu0 0.0
    %1850 = vmatprep.subr.mxu0 0.0
    %1851 = vmatpush2.msra.mxu0 0.0
    %1852 = vmatprep.mubr.f32.mxu0 0.0
    %1853 = vmatmul.mubr.f32.gmra.mxu0 %v1779
    %v1854 = vpop.f32.mrf.mxu0
    %v1855 = vadd.f32 0.0, %v1854
    %v1856 = vpop.f32.mrf.mxu0
    %1857 = vmatprep.mubr.f32.mxu0 0.0
    %1858 = vmatmul.mubr.f32.gmra.mxu0 %v1782
    %v1859 = vpop.f32.mrf.mxu0
    %v1860 = vadd.f32 0.0, %v1859
    %v1861 = vpop.f32.mrf.mxu0
    %1862 = vdwg.mxu0
    %vm1863 = vcmask 15360
    %1864 = vst.msk [vmem:[%s15] sm:$0xff] %vm1863, %v1855
    %1865 = vst.msk [vmem:[%s15 + $0x8] sm:$0xff] %vm1863, %v1860
    // Predicated region
    $region82: #{vgg19_mask_forward.1} parent=1 // pred_check
      _
    $region83: #{vgg19_mask_forward.1} parent=1 // pred_check_branch
      %1867 = sbr.rel (0) target = $region85
    $region84: #{vgg19_mask_forward.1} parent=1 // pred_region
      %s1869 = ssub.s32 4096, 4096
      %1870 = vsyncadd [#allocation4], %s1869
      %s1871 = sshll.u32 [#allocation17], 4
      %s1872 = int_to_ptr.vmem [resolvable:$true] %s1871
      %1877 = dma.vmem_to_hbm [thread:$0]  %s1872, 4096, %s11, [#allocation4], 128, 128, 8
    $region85: #{vgg19_mask_forward.1} parent=1 // pred_fallthru
      _
    // Predicated region
    $region86: #{vgg19_mask_forward.1} parent=1 // pred_check
      _
    $region87: #{vgg19_mask_forward.1} parent=1 // pred_check_branch
      %1879 = sbr.rel (0) target = $region89
    $region88: #{vgg19_mask_forward.1} parent=1 // pred_region
      %s1881 = ssub.s32 2048, 2048
      %1882 = vsyncadd [#allocation19], %s1881
      %s1883 = sshll.u32 [#allocation18], 4
      %s1884 = int_to_ptr.vmem [resolvable:$true] %s1883
      %1889 = dma.vmem_to_hbm [thread:$0]  %s1884, 2048, %s12, [#allocation19], 128, 128, 8
    $region89: #{vgg19_mask_forward.1} parent=1 // pred_fallthru
      _
    // Predicated region
    $region90: #{vgg19_mask_forward.1} parent=1 // pred_check
      _
    $region91: #{vgg19_mask_forward.1} parent=1 // pred_check_branch
      %1891 = sbr.rel (0) target = $region93
    $region92: #{vgg19_mask_forward.1} parent=1 // pred_region
      %s1893 = ssub.s32 1024, 1024
      %1894 = vsyncadd [#allocation19], %s1893
      %s1895 = sshll.u32 [#allocation20], 4
      %s1896 = int_to_ptr.vmem [resolvable:$true] %s1895
      %1901 = dma.vmem_to_hbm [thread:$0]  %s1896, 1024, %s13, [#allocation19], 128, 128, 8
    $region93: #{vgg19_mask_forward.1} parent=1 // pred_fallthru
      _
    // Predicated region
    $region94: #{vgg19_mask_forward.1} parent=1 // pred_check
      _
    $region95: #{vgg19_mask_forward.1} parent=1 // pred_check_branch
      %1903 = sbr.rel (0) target = $region97
    $region96: #{vgg19_mask_forward.1} parent=1 // pred_region
      %s1905 = ssub.s32 512, 512
      %1906 = vsyncadd [#allocation22], %s1905
      %s1907 = sshll.u32 [#allocation21], 4
      %s1908 = int_to_ptr.vmem [resolvable:$true] %s1907
      %1913 = dma.vmem_to_hbm [thread:$0]  %s1908, 512, %s14, [#allocation22], 128, 128, 8
    $region97: #{vgg19_mask_forward.1} parent=1 // pred_fallthru
      _
    // Predicated region
    $region98: #{vgg19_mask_forward.1} parent=1 // pred_check
      _
    $region99: #{vgg19_mask_forward.1} parent=1 // pred_check_branch
      %1915 = sbr.rel (0) target = $region101
    $region100: #{vgg19_mask_forward.1} parent=1 // pred_region
      _
    $region101: #{vgg19_mask_forward.1} parent=1 // pred_fallthru
      _
    // Predicated region
    $region102: #{vgg19_mask_forward.1} parent=1 // pred_check
      _
    $region103: #{vgg19_mask_forward.1} parent=1 // pred_check_branch
      %1917 = sbr.rel (0) target = $region105
    $region104: #{vgg19_mask_forward.1} parent=1 // pred_region
      %1918 = dma.done [#allocation4], 4096
    $region105: #{vgg19_mask_forward.1} parent=1 // pred_fallthru
      _
    // Predicated region
    $region106: #{vgg19_mask_forward.1} parent=1 // pred_check
      _
    $region107: #{vgg19_mask_forward.1} parent=1 // pred_check_branch
      %1920 = sbr.rel (0) target = $region109
    $region108: #{vgg19_mask_forward.1} parent=1 // pred_region
      %1921 = dma.done [#allocation19], 2048
    $region109: #{vgg19_mask_forward.1} parent=1 // pred_fallthru
      _
    // Predicated region
    $region110: #{vgg19_mask_forward.1} parent=1 // pred_check
      _
    $region111: #{vgg19_mask_forward.1} parent=1 // pred_check_branch
      %1923 = sbr.rel (0) target = $region113
    $region112: #{vgg19_mask_forward.1} parent=1 // pred_region
      %1924 = dma.done [#allocation19], 1024
    $region113: #{vgg19_mask_forward.1} parent=1 // pred_fallthru
      _
    // Predicated region
    $region114: #{vgg19_mask_forward.1} parent=1 // pred_check
      _
    $region115: #{vgg19_mask_forward.1} parent=1 // pred_check_branch
      %1926 = sbr.rel (0) target = $region117
    $region116: #{vgg19_mask_forward.1} parent=1 // pred_region
      %1927 = dma.done [#allocation22], 512
    $region117: #{vgg19_mask_forward.1} parent=1 // pred_fallthru
      _
    // Predicated region
    $region118: #{vgg19_mask_forward.1} parent=1 // pred_check
      _
    $region119: #{vgg19_mask_forward.1} parent=1 // pred_check_branch
      %1929 = sbr.rel (0) target = $region121
    $region120: #{vgg19_mask_forward.1} parent=1 // pred_region
      _
    $region121: #{vgg19_mask_forward.1} parent=1 // pred_fallthru
      _
    %1930 = vsyncpa [#allocation3], 1
    %1931 = vsyncpa [#allocation6], 1
    %1932 = vsyncpa [#allocation9], 1
    %1933 = vsyncpa [#allocation12], 1
    %1934 = vsyncpa [#allocation15], 1
    %1935 = vsyncpa [#allocation4], 1
    %1936 = vsyncpa [#allocation19], 1
    %1937 = vsyncpa [#allocation22], 1

</llo_original>
